<compile_context>
chip_gen: v7x
topology: tpu7x:2x2x1
jax: 0.10.0
libtpu: 0.0.40
codegen_flags: <defaults>
</compile_context>

<pallas_src>
import functools

import jax
import jax.numpy as jnp
from jax.experimental import pallas as pl
from jax.experimental.pallas import tpu as pltpu


# ----------------------------- tiling helper --------------------------------

def _pick_tile(dim, pref, align):
    """Largest tile <= pref that divides dim and is a multiple of `align`;
    falls back to the full dim (always legal for a BlockSpec)."""
    t = min(pref, dim)
    t -= t % align
    while t >= align:
        if dim % t == 0:
            return t
        t -= align
    return dim


# ----------------------------- Pallas kernels -------------------------------

def fused_linear_kernel(*refs, has_bias, has_ln, act, has_res):
    """[optional LN] -> x @ w (+ bias) (+ QuickGELU) (+ residual)."""
    it = iter(refs)
    x_ref = next(it)
    w_ref = next(it)
    b_ref = next(it) if has_bias else None
    if has_ln:
        g_ref = next(it)
        be_ref = next(it)
    r_ref = next(it) if has_res else None
    o_ref = next(it)

    if has_ln:                                           # f32 LN statistics
        x = x_ref[...].astype(jnp.float32)
        mu = jnp.mean(x, axis=-1, keepdims=True)
        var = jnp.mean(jnp.square(x - mu), axis=-1, keepdims=True)
        x = (x - mu) * jax.lax.rsqrt(var + 1e-5)
        x = x * g_ref[...] + be_ref[...]
        xm = x.astype(jnp.bfloat16)
    else:                                                # straight to MXU dtype
        xm = x_ref[...].astype(jnp.bfloat16)
    # bf16 MXU inputs, f32 accumulation.
    y = jnp.dot(xm, w_ref[...], preferred_element_type=jnp.float32)
    if has_bias:
        y = y + b_ref[...]
    if act == "quick_gelu":                              # f32 VPU/EUP math
        y = y * jax.nn.sigmoid(1.702 * y)
    if has_res:
        y = y + r_ref[...].astype(jnp.float32)
    o_ref[...] = y.astype(o_ref.dtype)


def add_pos_layernorm_kernel(x_ref, pos_ref, g_ref, b_ref, o_ref):
    """(x + positional_embedding) -> LayerNorm.  One batch row per grid step."""
    x = x_ref[0].astype(jnp.float32) + pos_ref[...].astype(jnp.float32)
    mu = jnp.mean(x, axis=-1, keepdims=True)
    var = jnp.mean(jnp.square(x - mu), axis=-1, keepdims=True)
    y = (x - mu) * jax.lax.rsqrt(var + 1e-5)
    o_ref[0] = (y * g_ref[...] + b_ref[...]).astype(o_ref.dtype)


def attention_kernel(q_ref, k_ref, v_ref, o_ref, *, scale):
    # blocks: [1, S, head_dim] sliced per (batch, head) via the index_maps.
    q = q_ref[0].astype(jnp.bfloat16)
    k = k_ref[0].astype(jnp.bfloat16)
    v = v_ref[0].astype(jnp.bfloat16)
    s = jax.lax.dot_general(q, k, (((1,), (1,)), ((), ())),
                            preferred_element_type=jnp.float32) * scale
    m = jnp.max(s, axis=-1, keepdims=True)               # f32 softmax
    p = jnp.exp(s - m)
    l = jnp.sum(p, axis=-1, keepdims=True)
    o = jnp.dot(p.astype(jnp.bfloat16), v, preferred_element_type=jnp.float32)
    o = o * pl.reciprocal(l, approx=True)                # EUP slot
    o_ref[0] = o.astype(o_ref.dtype)


# ----------------------------- Pallas wrappers -------------------------------

def fused_linear(x, w, b=None, *, gamma=None, beta=None, residual=None,
                 act=None, out_dtype=jnp.float32, tm_pref=256, tn_pref=256):
    """x:[M,K], w:[K,N] bf16, b/gamma/beta:[1,*] f32, residual:[M,N] f32."""
    M, K = x.shape
    Kw, N = w.shape
    assert K == Kw
    tm = _pick_tile(M, tm_pref, 8)
    tn = _pick_tile(N, tn_pref, 128)
    grid = (M // tm, N // tn)

    in_specs = [
        pl.BlockSpec((tm, K), lambda i, j: (i, 0)),
        pl.BlockSpec((K, tn), lambda i, j: (0, j)),
    ]
    args = [x, w]
    if b is not None:
        in_specs.append(pl.BlockSpec((1, tn), lambda i, j: (0, j)))
        args.append(b)
    if gamma is not None:
        in_specs.append(pl.BlockSpec((1, K), lambda i, j: (0, 0)))
        in_specs.append(pl.BlockSpec((1, K), lambda i, j: (0, 0)))
        args.extend([gamma, beta])
    if residual is not None:
        in_specs.append(pl.BlockSpec((tm, tn), lambda i, j: (i, j)))
        args.append(residual)

    kern = functools.partial(
        fused_linear_kernel,
        has_bias=b is not None, has_ln=gamma is not None,
        act=act, has_res=residual is not None)

    return pl.pallas_call(
        kern,
        out_shape=jax.ShapeDtypeStruct((M, N), out_dtype),
        grid=grid,
        in_specs=in_specs,
        out_specs=pl.BlockSpec((tm, tn), lambda i, j: (i, j)),
        compiler_params=pltpu.CompilerParams(
            dimension_semantics=("parallel", "parallel")),
    )(*args)


def pallas_add_pos_layernorm(x, pos, g, b):
    """x:[B,S,W] f32, pos:[S,W] f32 -> LN(x + pos) f32."""
    B, S, W = x.shape
    return pl.pallas_call(
        add_pos_layernorm_kernel,
        out_shape=jax.ShapeDtypeStruct((B, S, W), jnp.float32),
        grid=(B,),
        in_specs=[pl.BlockSpec((1, S, W), lambda i: (i, 0, 0)),
                  pl.BlockSpec((S, W), lambda i: (0, 0)),
                  pl.BlockSpec((1, W), lambda i: (0, 0)),
                  pl.BlockSpec((1, W), lambda i: (0, 0))],
        out_specs=pl.BlockSpec((1, S, W), lambda i: (i, 0, 0)),
        compiler_params=pltpu.CompilerParams(
            dimension_semantics=("parallel",)),
    )(x, pos, g, b)


def pallas_attention(qkv, *, B, S, width, heads, head_dim, out_dtype=jnp.bfloat16):
    """qkv: [B, S, 3*width] (q | k | v concatenated, each split into heads)."""
    # TODO(synk): head_dim < 128 would need padding or packing 2 heads per
    # block to keep the last block dim 128-aligned; demo uses head_dim=128.
    assert head_dim % 128 == 0, "attention index_map slicing needs head_dim % 128 == 0"
    scale = 1.0 / (head_dim ** 0.5)
    blk = (1, S, head_dim)
    q_spec = pl.BlockSpec(blk, lambda b, h: (b, 0, h))
    k_spec = pl.BlockSpec(blk, lambda b, h: (b, 0, heads + h))
    v_spec = pl.BlockSpec(blk, lambda b, h: (b, 0, 2 * heads + h))
    return pl.pallas_call(
        functools.partial(attention_kernel, scale=scale),
        out_shape=jax.ShapeDtypeStruct((B, S, width), out_dtype),
        grid=(B, heads),
        in_specs=[q_spec, k_spec, v_spec],
        out_specs=pl.BlockSpec(blk, lambda b, h: (b, 0, h)),
        compiler_params=pltpu.CompilerParams(
            dimension_semantics=("parallel", "parallel")),
    )(qkv, qkv, qkv)


# ----------------------------- Parameters ------------------------------------

def init_params(key, *, in_ch, patch, image, width, layers, out_dim):
    grid = image // patch
    keys = jax.random.split(key, 8 + layers)

    def nrm(k, shape, s=0.02):
        return (s * jax.random.normal(k, shape, jnp.float32)).astype(jnp.float32)

    params = {
        "conv1_w": nrm(keys[0], (in_ch * patch * patch, width)),   # conv as matmul, no bias
        "class_embedding": nrm(keys[1], (width,)),
        "positional_embedding": nrm(keys[2], (grid * grid + 1, width)),
        "ln_pre_g": jnp.ones((width,), jnp.float32),
        "ln_pre_b": jnp.zeros((width,), jnp.float32),
        "ln_post_g": jnp.ones((width,), jnp.float32),
        "ln_post_b": jnp.zeros((width,), jnp.float32),
        "proj": nrm(keys[3], (width, out_dim)),
        "blocks": [],
    }
    for l in range(layers):
        bk = jax.random.split(keys[8 + l], 4)
        params["blocks"].append({
            "ln1_g": jnp.ones((width,), jnp.float32),
            "ln1_b": jnp.zeros((width,), jnp.float32),
            "ln2_g": jnp.ones((width,), jnp.float32),
            "ln2_b": jnp.zeros((width,), jnp.float32),
            "in_proj_w": nrm(bk[0], (width, 3 * width)),
            "in_proj_b": jnp.zeros((3 * width,), jnp.float32),
            "out_proj_w": nrm(bk[1], (width, width)),
            "out_proj_b": jnp.zeros((width,), jnp.float32),
            "fc_w": nrm(bk[2], (width, 4 * width)),
            "fc_b": jnp.zeros((4 * width,), jnp.float32),
            "proj_w": nrm(bk[3], (4 * width, width)),
            "proj_b": jnp.zeros((width,), jnp.float32),
        })
    return params


def prepare_params(params):
    """One-time conversion: weights -> bf16, conv K padded to 128-multiple,
    biases/LN params reshaped to [1, *] rows (done once, not per pallas_call)."""
    def w(a):
        return a.astype(jnp.bfloat16)

    def row(a):
        return a.reshape(1, -1).astype(jnp.float32)

    k_raw = params["conv1_w"].shape[0]
    k_pad = ((k_raw + 127) // 128) * 128
    conv_w = params["conv1_w"]
    if k_pad != k_raw:
        conv_w = jnp.pad(conv_w, ((0, k_pad - k_raw), (0, 0)))

    out = {
        "conv1_w": w(conv_w),
        "class_embedding": params["class_embedding"].astype(jnp.float32),
        "positional_embedding": params["positional_embedding"].astype(jnp.float32),
        "ln_pre_g": row(params["ln_pre_g"]), "ln_pre_b": row(params["ln_pre_b"]),
        "ln_post_g": row(params["ln_post_g"]), "ln_post_b": row(params["ln_post_b"]),
        "proj": w(params["proj"]),
        "blocks": [],
    }
    for blk in params["blocks"]:
        out["blocks"].append({
            "ln1_g": row(blk["ln1_g"]), "ln1_b": row(blk["ln1_b"]),
            "ln2_g": row(blk["ln2_g"]), "ln2_b": row(blk["ln2_b"]),
            "in_proj_w": w(blk["in_proj_w"]), "in_proj_b": row(blk["in_proj_b"]),
            "out_proj_w": w(blk["out_proj_w"]), "out_proj_b": row(blk["out_proj_b"]),
            "fc_w": w(blk["fc_w"]), "fc_b": row(blk["fc_b"]),
            "proj_w": w(blk["proj_w"]), "proj_b": row(blk["proj_b"]),
        })
    return out


# ----------------------------- Forward pass -----------------------------------

def clip_visual_forward(params, x_nchw, *, patch, heads):
    B, C, H, W = x_nchw.shape
    p = patch
    gh, gw = H // p, W // p
    k_pad, width = params["conv1_w"].shape
    k_raw = C * p * p

    # Patchify (conv with kernel=stride=patch, no bias): glue reshapes in JAX,
    # the contraction runs in the tiled Pallas matmul; K zero-padded to 128x.
    # TODO(synk): the patch extraction transpose itself stays XLA-side plumbing.
    xp = (x_nchw.reshape(B, C, gh, p, gw, p)
          .transpose(0, 2, 4, 1, 3, 5)
          .reshape(B * gh * gw, k_raw))
    if k_pad != k_raw:
        xp = jnp.pad(xp, ((0, 0), (0, k_pad - k_raw)))
    xpe = fused_linear(xp, params["conv1_w"]).reshape(B, gh * gw, width)

    cls = jnp.broadcast_to(params["class_embedding"].reshape(1, 1, width),
                           (B, 1, width))
    x = jnp.concatenate([cls, xpe], axis=1)                          # [B, S, width]
    S = x.shape[1]
    M = B * S
    head_dim = width // heads

    # +positional embedding and ln_pre fused into one pass.
    x2 = pallas_add_pos_layernorm(x, params["positional_embedding"],
                                  params["ln_pre_g"], params["ln_pre_b"])
    x2 = x2.reshape(M, width)                                        # f32 residual stream

    for blk in params["blocks"]:
        # ---- MHA: LN1 + QKV projection fused (bf16 QKV out); heads sliced
        #      straight out of the packed buffer via index_maps ----
        qkv = fused_linear(x2, blk["in_proj_w"], blk["in_proj_b"],
                           gamma=blk["ln1_g"], beta=blk["ln1_b"],
                           out_dtype=jnp.bfloat16)                   # [M, 3*width]
        attn = pallas_attention(qkv.reshape(B, S, 3 * width), B=B, S=S,
                                width=width, heads=heads, head_dim=head_dim,
                                out_dtype=jnp.bfloat16)
        x2 = fused_linear(attn.reshape(M, width),
                          blk["out_proj_w"], blk["out_proj_b"],
                          residual=x2)                               # +residual fused, f32
        # ---- MLP: LN2 + fc + QuickGELU fused (bf16 hidden); proj + residual fused ----
        h = fused_linear(x2, blk["fc_w"], blk["fc_b"],
                         gamma=blk["ln2_g"], beta=blk["ln2_b"], act="quick_gelu",
                         out_dtype=jnp.bfloat16)
        x2 = fused_linear(h, blk["proj_w"], blk["proj_b"], residual=x2)

    cls_tok = x2.reshape(B, S, width)[:, 0, :]                       # [B, width]
    # ln_post + output projection (no bias) fused into one kernel.
    features = fused_linear(cls_tok, params["proj"],
                            gamma=params["ln_post_g"], beta=params["ln_post_b"])
    return features


# ----------------------------- Main --------------------------------------------

if __name__ == "__main__":
    # Small but lane-dense demo shapes (width=256, head_dim=128, out_dim=128).
    B, C, IMG = 2, 3, 32
    PATCH, WIDTH, LAYERS, HEADS, OUT_DIM = 8, 256, 2, 2, 128

    key = jax.random.PRNGKey(0)
    k_params, k_x = jax.random.split(key)
    # TODO(synk): pretrained CLIP / timm checkpoint weights are not loadable
    # here; the backbone uses deterministic synthetic weights of the same
    # structure (prepare_params mirrors the one-time checkpoint conversion).
    params = prepare_params(init_params(k_params, in_ch=C, patch=PATCH, image=IMG,
                                        width=WIDTH, layers=LAYERS, out_dim=OUT_DIM))
    x = jax.random.normal(k_x, (B, C, IMG, IMG), jnp.float32)   # NCHW, like PyTorch

    fwd = jax.jit(functools.partial(clip_visual_forward, patch=PATCH, heads=HEADS))
    feats = jax.block_until_ready(fwd(params, x))
    assert feats.shape == (B, OUT_DIM) and feats.dtype == jnp.float32
    print("KERNEL_OK")
</pallas_src>

<mosaic_0001>
module attributes {stable_mosaic.version = 11 : i64} {
  func.func @add_pos_layernorm_kernel(%arg0: i32, %arg1: memref<1x17x256xf32, #tpu.memory_space<vmem>>, %arg2: memref<17x256xf32, #tpu.memory_space<vmem>>, %arg3: memref<1x256xf32, #tpu.memory_space<vmem>>, %arg4: memref<1x256xf32, #tpu.memory_space<vmem>>, %arg5: memref<1x17x256xf32, #tpu.memory_space<vmem>>) attributes {dimension_semantics = [#tpu.dimension_semantics<parallel>], iteration_bounds = array<i64: 2>, scalar_prefetch = 0 : i64, scratch_operands = 0 : i64, tpu.core_type = #tpu.core_type<tc>, window_params = [{transform_indices = @transform_0, window_bounds = array<i64: 1, 17, 256>}, {pipeline_mode = #tpu.pipeline_mode<synchronous>, transform_indices = @transform_1, window_bounds = array<i64: 17, 256>}, {pipeline_mode = #tpu.pipeline_mode<synchronous>, transform_indices = @transform_2, window_bounds = array<i64: 1, 256>}, {pipeline_mode = #tpu.pipeline_mode<synchronous>, transform_indices = @transform_3, window_bounds = array<i64: 1, 256>}, {transform_indices = @transform_4, window_bounds = array<i64: 1, 17, 256>}]} {
    %c0 = arith.constant 0 : index
    %c0_0 = arith.constant 0 : index
    %c0_1 = arith.constant 0 : index
    %0 = vector.load %arg1[%c0, %c0_0, %c0_1] : memref<1x17x256xf32, #tpu.memory_space<vmem>>, vector<1x17x256xf32>
    %1 = vector.shape_cast %0 : vector<1x17x256xf32> to vector<17x256xf32>
    %c0_2 = arith.constant 0 : index
    %c0_3 = arith.constant 0 : index
    %2 = vector.load %arg2[%c0_2, %c0_3] : memref<17x256xf32, #tpu.memory_space<vmem>>, vector<17x256xf32>
    %3 = arith.addf %1, %2 : vector<17x256xf32>
    %cst = arith.constant dense<0.000000e+00> : vector<17xf32>
    %4 = vector.multi_reduction <add>, %3, %cst [1] : vector<17x256xf32> to vector<17xf32>
    %5 = vector.shape_cast %4 : vector<17xf32> to vector<17x1xf32>
    %cst_4 = arith.constant 2.560000e+02 : f32
    %6 = vector.broadcast %cst_4 : f32 to vector<17x1xf32>
    %7 = arith.divf %5, %6 : vector<17x1xf32>
    %8 = vector.broadcast %7 : vector<17x1xf32> to vector<17x256xf32>
    %9 = arith.subf %3, %8 : vector<17x256xf32>
    %10 = arith.mulf %9, %9 : vector<17x256xf32>
    %cst_5 = arith.constant dense<0.000000e+00> : vector<17xf32>
    %11 = vector.multi_reduction <add>, %10, %cst_5 [1] : vector<17x256xf32> to vector<17xf32>
    %12 = vector.shape_cast %11 : vector<17xf32> to vector<17x1xf32>
    %cst_6 = arith.constant 2.560000e+02 : f32
    %13 = vector.broadcast %cst_6 : f32 to vector<17x1xf32>
    %14 = arith.divf %12, %13 : vector<17x1xf32>
    %15 = vector.broadcast %7 : vector<17x1xf32> to vector<17x256xf32>
    %16 = arith.subf %3, %15 : vector<17x256xf32>
    %cst_7 = arith.constant 9.99999974E-6 : f32
    %17 = vector.broadcast %cst_7 : f32 to vector<17x1xf32>
    %18 = arith.addf %14, %17 : vector<17x1xf32>
    %19 = math.rsqrt %18 : vector<17x1xf32>
    %20 = vector.broadcast %19 : vector<17x1xf32> to vector<17x256xf32>
    %21 = arith.mulf %16, %20 : vector<17x256xf32>
    %c0_8 = arith.constant 0 : index
    %c0_9 = arith.constant 0 : index
    %22 = vector.load %arg3[%c0_8, %c0_9] : memref<1x256xf32, #tpu.memory_space<vmem>>, vector<1x256xf32>
    %23 = vector.broadcast %22 : vector<1x256xf32> to vector<17x256xf32>
    %24 = arith.mulf %21, %23 : vector<17x256xf32>
    %c0_10 = arith.constant 0 : index
    %c0_11 = arith.constant 0 : index
    %25 = vector.load %arg4[%c0_10, %c0_11] : memref<1x256xf32, #tpu.memory_space<vmem>>, vector<1x256xf32>
    %26 = vector.broadcast %25 : vector<1x256xf32> to vector<17x256xf32>
    %27 = arith.addf %24, %26 : vector<17x256xf32>
    %c0_12 = arith.constant 0 : index
    %c0_13 = arith.constant 0 : index
    %c0_14 = arith.constant 0 : index
    %28 = vector.load %arg5[%c0_12, %c0_13, %c0_14] : memref<1x17x256xf32, #tpu.memory_space<vmem>>, vector<1x17x256xf32>
    %29 = vector.shape_cast %28 : vector<1x17x256xf32> to vector<17x256xf32>
    %30 = vector.shape_cast %27 : vector<17x256xf32> to vector<1x17x256xf32>
    tpu.vector_store %arg5[%c0_12, %c0_13, %c0_14], %30 {strides = array<i32>} : memref<1x17x256xf32, #tpu.memory_space<vmem>>, vector<1x17x256xf32>,
    return
  }
  func.func @transform_0(%arg0: i32) -> (i32, i32, i32) {
    %c0_i32 = arith.constant 0 : i32
    %c0_i32_0 = arith.constant 0 : i32
    %c0_i32_1 = arith.constant 0 : i32
    return %arg0, %c0_i32, %c0_i32_0 : i32, i32, i32
  }
  func.func @transform_1(%arg0: i32) -> (i32, i32) {
    %c0_i32 = arith.constant 0 : i32
    %c0_i32_0 = arith.constant 0 : i32
    %c0_i32_1 = arith.constant 0 : i32
    return %c0_i32, %c0_i32_0 : i32, i32
  }
  func.func @transform_2(%arg0: i32) -> (i32, i32) {
    %c0_i32 = arith.constant 0 : i32
    %c0_i32_0 = arith.constant 0 : i32
    %c0_i32_1 = arith.constant 0 : i32
    return %c0_i32, %c0_i32_0 : i32, i32
  }
  func.func @transform_3(%arg0: i32) -> (i32, i32) {
    %c0_i32 = arith.constant 0 : i32
    %c0_i32_0 = arith.constant 0 : i32
    %c0_i32_1 = arith.constant 0 : i32
    return %c0_i32, %c0_i32_0 : i32, i32
  }
  func.func @transform_4(%arg0: i32) -> (i32, i32, i32) {
    %c0_i32 = arith.constant 0 : i32
    %c0_i32_0 = arith.constant 0 : i32
    %c0_i32_1 = arith.constant 0 : i32
    return %arg0, %c0_i32, %c0_i32_0 : i32, i32, i32
  }
}

module attributes {stable_mosaic.version = 11 : i64} {
  func.func @fused_linear_kernel(%arg0: i32, %arg1: i32, %arg2: memref<32x256xf32, #tpu.memory_space<vmem>>, %arg3: memref<256x256xbf16, #tpu.memory_space<vmem>>, %arg4: memref<32x256xf32, #tpu.memory_space<vmem>>) attributes {dimension_semantics = [#tpu.dimension_semantics<parallel>, #tpu.dimension_semantics<parallel>], iteration_bounds = array<i64: 1, 1>, scalar_prefetch = 0 : i64, scratch_operands = 0 : i64, tpu.core_type = #tpu.core_type<tc>, window_params = [{transform_indices = @transform_0, window_bounds = array<i64: 32, 256>}, {transform_indices = @transform_1, window_bounds = array<i64: 256, 256>}, {transform_indices = @transform_2, window_bounds = array<i64: 32, 256>}]} {
    %c0 = arith.constant 0 : index
    %c0_0 = arith.constant 0 : index
    %0 = vector.load %arg2[%c0, %c0_0] : memref<32x256xf32, #tpu.memory_space<vmem>>, vector<32x256xf32>
    %1 = arith.truncf %0 : vector<32x256xf32> to vector<32x256xbf16>
    %c0_1 = arith.constant 0 : index
    %c0_2 = arith.constant 0 : index
    %2 = vector.load %arg3[%c0_1, %c0_2] : memref<256x256xbf16, #tpu.memory_space<vmem>>, vector<256x256xbf16>
    %cst = arith.constant dense<0.000000e+00> : vector<32x256xf32>
    %3 = tpu.matmul %1, %2, %cst {dimension_numbers = #tpu.dot_dimension_numbers<[1], [0], [0], [1], [0, 0, 1, 1], [], []>} : vector<32x256xbf16>, vector<256x256xbf16>, vector<32x256xf32> -> vector<32x256xf32>
    %c0_3 = arith.constant 0 : index
    %c0_4 = arith.constant 0 : index
    %4 = vector.load %arg4[%c0_3, %c0_4] : memref<32x256xf32, #tpu.memory_space<vmem>>, vector<32x256xf32>
    tpu.vector_store %arg4[%c0_3, %c0_4], %3 {strides = array<i32>} : memref<32x256xf32, #tpu.memory_space<vmem>>, vector<32x256xf32>,
    return
  }
  func.func @transform_0(%arg0: i32, %arg1: i32) -> (i32, i32) {
    %c0_i32 = arith.constant 0 : i32
    %c0_i32_0 = arith.constant 0 : i32
    return %arg0, %c0_i32 : i32, i32
  }
  func.func @transform_1(%arg0: i32, %arg1: i32) -> (i32, i32) {
    %c0_i32 = arith.constant 0 : i32
    %c0_i32_0 = arith.constant 0 : i32
    return %c0_i32, %arg1 : i32, i32
  }
  func.func @transform_2(%arg0: i32, %arg1: i32) -> (i32, i32) {
    %c0_i32 = arith.constant 0 : i32
    return %arg0, %arg1 : i32, i32
  }
}

module attributes {stable_mosaic.version = 11 : i64} {
  func.func @fused_linear_kernel(%arg0: i32, %arg1: i32, %arg2: memref<34x256xf32, #tpu.memory_space<vmem>>, %arg3: memref<256x256xbf16, #tpu.memory_space<vmem>>, %arg4: memref<1x256xf32, #tpu.memory_space<vmem>>, %arg5: memref<1x256xf32, #tpu.memory_space<vmem>>, %arg6: memref<1x256xf32, #tpu.memory_space<vmem>>, %arg7: memref<34x256xbf16, #tpu.memory_space<vmem>>) attributes {dimension_semantics = [#tpu.dimension_semantics<parallel>, #tpu.dimension_semantics<parallel>], iteration_bounds = array<i64: 1, 3>, scalar_prefetch = 0 : i64, scratch_operands = 0 : i64, tpu.core_type = #tpu.core_type<tc>, window_params = [{transform_indices = @transform_0, window_bounds = array<i64: 34, 256>}, {transform_indices = @transform_1, window_bounds = array<i64: 256, 256>}, {transform_indices = @transform_2, window_bounds = array<i64: 1, 256>}, {pipeline_mode = #tpu.pipeline_mode<synchronous>, transform_indices = @transform_3, window_bounds = array<i64: 1, 256>}, {pipeline_mode = #tpu.pipeline_mode<synchronous>, transform_indices = @transform_4, window_bounds = array<i64: 1, 256>}, {transform_indices = @transform_5, window_bounds = array<i64: 34, 256>}]} {
    %c0 = arith.constant 0 : index
    %c0_0 = arith.constant 0 : index
    %0 = vector.load %arg2[%c0, %c0_0] : memref<34x256xf32, #tpu.memory_space<vmem>>, vector<34x256xf32>
    %cst = arith.constant dense<0.000000e+00> : vector<34xf32>
    %1 = vector.multi_reduction <add>, %0, %cst [1] : vector<34x256xf32> to vector<34xf32>
    %2 = vector.shape_cast %1 : vector<34xf32> to vector<34x1xf32>
    %cst_1 = arith.constant 2.560000e+02 : f32
    %3 = vector.broadcast %cst_1 : f32 to vector<34x1xf32>
    %4 = arith.divf %2, %3 : vector<34x1xf32>
    %5 = vector.broadcast %4 : vector<34x1xf32> to vector<34x256xf32>
    %6 = arith.subf %0, %5 : vector<34x256xf32>
    %7 = arith.mulf %6, %6 : vector<34x256xf32>
    %cst_2 = arith.constant dense<0.000000e+00> : vector<34xf32>
    %8 = vector.multi_reduction <add>, %7, %cst_2 [1] : vector<34x256xf32> to vector<34xf32>
    %9 = vector.shape_cast %8 : vector<34xf32> to vector<34x1xf32>
    %cst_3 = arith.constant 2.560000e+02 : f32
    %10 = vector.broadcast %cst_3 : f32 to vector<34x1xf32>
    %11 = arith.divf %9, %10 : vector<34x1xf32>
    %12 = vector.broadcast %4 : vector<34x1xf32> to vector<34x256xf32>
    %13 = arith.subf %0, %12 : vector<34x256xf32>
    %cst_4 = arith.constant 9.99999974E-6 : f32
    %14 = vector.broadcast %cst_4 : f32 to vector<34x1xf32>
    %15 = arith.addf %11, %14 : vector<34x1xf32>
    %16 = math.rsqrt %15 : vector<34x1xf32>
    %17 = vector.broadcast %16 : vector<34x1xf32> to vector<34x256xf32>
    %18 = arith.mulf %13, %17 : vector<34x256xf32>
    %c0_5 = arith.constant 0 : index
    %c0_6 = arith.constant 0 : index
    %19 = vector.load %arg5[%c0_5, %c0_6] : memref<1x256xf32, #tpu.memory_space<vmem>>, vector<1x256xf32>
    %20 = vector.broadcast %19 : vector<1x256xf32> to vector<34x256xf32>
    %21 = arith.mulf %18, %20 : vector<34x256xf32>
    %c0_7 = arith.constant 0 : index
    %c0_8 = arith.constant 0 : index
    %22 = vector.load %arg6[%c0_7, %c0_8] : memref<1x256xf32, #tpu.memory_space<vmem>>, vector<1x256xf32>
    %23 = vector.broadcast %22 : vector<1x256xf32> to vector<34x256xf32>
    %24 = arith.addf %21, %23 : vector<34x256xf32>
    %25 = arith.truncf %24 : vector<34x256xf32> to vector<34x256xbf16>
    %c0_9 = arith.constant 0 : index
    %c0_10 = arith.constant 0 : index
    %26 = vector.load %arg3[%c0_9, %c0_10] : memref<256x256xbf16, #tpu.memory_space<vmem>>, vector<256x256xbf16>
    %cst_11 = arith.constant dense<0.000000e+00> : vector<34x256xf32>
    %27 = tpu.matmul %25, %26, %cst_11 {dimension_numbers = #tpu.dot_dimension_numbers<[1], [0], [0], [1], [0, 0, 1, 1], [], []>} : vector<34x256xbf16>, vector<256x256xbf16>, vector<34x256xf32> -> vector<34x256xf32>
    %c0_12 = arith.constant 0 : index
    %c0_13 = arith.constant 0 : index
    %28 = vector.load %arg4[%c0_12, %c0_13] : memref<1x256xf32, #tpu.memory_space<vmem>>, vector<1x256xf32>
    %29 = vector.broadcast %28 : vector<1x256xf32> to vector<34x256xf32>
    %30 = arith.addf %27, %29 : vector<34x256xf32>
    %31 = arith.truncf %30 : vector<34x256xf32> to vector<34x256xbf16>
    %c0_14 = arith.constant 0 : index
    %c0_15 = arith.constant 0 : index
    %32 = vector.load %arg7[%c0_14, %c0_15] : memref<34x256xbf16, #tpu.memory_space<vmem>>, vector<34x256xbf16>
    tpu.vector_store %arg7[%c0_14, %c0_15], %31 {strides = array<i32>} : memref<34x256xbf16, #tpu.memory_space<vmem>>, vector<34x256xbf16>,
    return
  }
  func.func @transform_0(%arg0: i32, %arg1: i32) -> (i32, i32) {
    %c0_i32 = arith.constant 0 : i32
    %c0_i32_0 = arith.constant 0 : i32
    return %arg0, %c0_i32 : i32, i32
  }
  func.func @transform_1(%arg0: i32, %arg1: i32) -> (i32, i32) {
    %c0_i32 = arith.constant 0 : i32
    %c0_i32_0 = arith.constant 0 : i32
    return %c0_i32, %arg1 : i32, i32
  }
  func.func @transform_2(%arg0: i32, %arg1: i32) -> (i32, i32) {
    %c0_i32 = arith.constant 0 : i32
    %c0_i32_0 = arith.constant 0 : i32
    return %c0_i32, %arg1 : i32, i32
  }
  func.func @transform_3(%arg0: i32, %arg1: i32) -> (i32, i32) {
    %c0_i32 = arith.constant 0 : i32
    %c0_i32_0 = arith.constant 0 : i32
    %c0_i32_1 = arith.constant 0 : i32
    return %c0_i32, %c0_i32_0 : i32, i32
  }
  func.func @transform_4(%arg0: i32, %arg1: i32) -> (i32, i32) {
    %c0_i32 = arith.constant 0 : i32
    %c0_i32_0 = arith.constant 0 : i32
    %c0_i32_1 = arith.constant 0 : i32
    return %c0_i32, %c0_i32_0 : i32, i32
  }
  func.func @transform_5(%arg0: i32, %arg1: i32) -> (i32, i32) {
    %c0_i32 = arith.constant 0 : i32
    return %arg0, %arg1 : i32, i32
  }
}

module attributes {stable_mosaic.version = 11 : i64} {
  func.func @attention_kernel(%arg0: i32, %arg1: i32, %arg2: memref<1x17x128xbf16, #tpu.memory_space<vmem>>, %arg3: memref<1x17x128xbf16, #tpu.memory_space<vmem>>, %arg4: memref<1x17x128xbf16, #tpu.memory_space<vmem>>, %arg5: memref<1x17x128xbf16, #tpu.memory_space<vmem>>) attributes {dimension_semantics = [#tpu.dimension_semantics<parallel>, #tpu.dimension_semantics<parallel>], iteration_bounds = array<i64: 2, 2>, scalar_prefetch = 0 : i64, scratch_operands = 0 : i64, tpu.core_type = #tpu.core_type<tc>, window_params = [{transform_indices = @transform_0, window_bounds = array<i64: 1, 17, 128>}, {transform_indices = @transform_1, window_bounds = array<i64: 1, 17, 128>}, {transform_indices = @transform_2, window_bounds = array<i64: 1, 17, 128>}, {transform_indices = @transform_3, window_bounds = array<i64: 1, 17, 128>}]} {
    %c0 = arith.constant 0 : index
    %c0_0 = arith.constant 0 : index
    %c0_1 = arith.constant 0 : index
    %0 = vector.load %arg2[%c0, %c0_0, %c0_1] : memref<1x17x128xbf16, #tpu.memory_space<vmem>>, vector<1x17x128xbf16>
    %1 = vector.shape_cast %0 : vector<1x17x128xbf16> to vector<17x128xbf16>
    %c0_2 = arith.constant 0 : index
    %c0_3 = arith.constant 0 : index
    %c0_4 = arith.constant 0 : index
    %2 = vector.load %arg3[%c0_2, %c0_3, %c0_4] : memref<1x17x128xbf16, #tpu.memory_space<vmem>>, vector<1x17x128xbf16>
    %3 = vector.shape_cast %2 : vector<1x17x128xbf16> to vector<17x128xbf16>
    %c0_5 = arith.constant 0 : index
    %c0_6 = arith.constant 0 : index
    %c0_7 = arith.constant 0 : index
    %4 = vector.load %arg4[%c0_5, %c0_6, %c0_7] : memref<1x17x128xbf16, #tpu.memory_space<vmem>>, vector<1x17x128xbf16>
    %5 = vector.shape_cast %4 : vector<1x17x128xbf16> to vector<17x128xbf16>
    %cst = arith.constant dense<0.000000e+00> : vector<17x17xf32>
    %6 = tpu.matmul %1, %3, %cst {dimension_numbers = #tpu.dot_dimension_numbers<[1], [1], [0], [0], [0, 0, 1, 0], [], []>} : vector<17x128xbf16>, vector<17x128xbf16>, vector<17x17xf32> -> vector<17x17xf32>
    %cst_8 = arith.constant 0.0883883461 : f32
    %7 = vector.broadcast %cst_8 : f32 to vector<17x17xf32>
    %8 = arith.mulf %6, %7 : vector<17x17xf32>
    %cst_9 = arith.constant dense<0xFF800000> : vector<17xf32>
    %9 = vector.multi_reduction <maximumf>, %8, %cst_9 [1] : vector<17x17xf32> to vector<17xf32>
    %10 = vector.shape_cast %9 : vector<17xf32> to vector<17x1xf32>
    %11 = vector.broadcast %10 : vector<17x1xf32> to vector<17x17xf32>
    %12 = arith.subf %8, %11 : vector<17x17xf32>
    %13 = math.exp %12 : vector<17x17xf32>
    %cst_10 = arith.constant dense<0.000000e+00> : vector<17xf32>
    %14 = vector.multi_reduction <add>, %13, %cst_10 [1] : vector<17x17xf32> to vector<17xf32>
    %15 = vector.shape_cast %14 : vector<17xf32> to vector<17x1xf32>
    %16 = arith.truncf %13 : vector<17x17xf32> to vector<17x17xbf16>
    %cst_11 = arith.constant dense<0.000000e+00> : vector<17x128xf32>
    %17 = tpu.matmul %16, %5, %cst_11 {dimension_numbers = #tpu.dot_dimension_numbers<[1], [0], [0], [1], [0, 0, 1, 1], [], []>} : vector<17x17xbf16>, vector<17x128xbf16>, vector<17x128xf32> -> vector<17x128xf32>
    %18 = tpu.reciprocal %15 {approx = true} : vector<17x1xf32> -> vector<17x1xf32>
    %19 = vector.broadcast %18 : vector<17x1xf32> to vector<17x128xf32>
    %20 = arith.mulf %17, %19 : vector<17x128xf32>
    %21 = arith.truncf %20 : vector<17x128xf32> to vector<17x128xbf16>
    %c0_12 = arith.constant 0 : index
    %c0_13 = arith.constant 0 : index
    %c0_14 = arith.constant 0 : index
    %22 = vector.load %arg5[%c0_12, %c0_13, %c0_14] : memref<1x17x128xbf16, #tpu.memory_space<vmem>>, vector<1x17x128xbf16>
    %23 = vector.shape_cast %22 : vector<1x17x128xbf16> to vector<17x128xbf16>
    %24 = vector.shape_cast %21 : vector<17x128xbf16> to vector<1x17x128xbf16>
    tpu.vector_store %arg5[%c0_12, %c0_13, %c0_14], %24 {strides = array<i32>} : memref<1x17x128xbf16, #tpu.memory_space<vmem>>, vector<1x17x128xbf16>,
    return
  }
  func.func @transform_0(%arg0: i32, %arg1: i32) -> (i32, i32, i32) {
    %c0_i32 = arith.constant 0 : i32
    %c0_i32_0 = arith.constant 0 : i32
    return %arg0, %c0_i32, %arg1 : i32, i32, i32
  }
  func.func @transform_1(%arg0: i32, %arg1: i32) -> (i32, i32, i32) {
    %c2_i32 = arith.constant 2 : i32
    %0 = arith.addi %c2_i32, %arg1 : i32
    %c0_i32 = arith.constant 0 : i32
    %c0_i32_0 = arith.constant 0 : i32
    return %arg0, %c0_i32, %0 : i32, i32, i32
  }
  func.func @transform_2(%arg0: i32, %arg1: i32) -> (i32, i32, i32) {
    %c4_i32 = arith.constant 4 : i32
    %0 = arith.addi %c4_i32, %arg1 : i32
    %c0_i32 = arith.constant 0 : i32
    %c0_i32_0 = arith.constant 0 : i32
    return %arg0, %c0_i32, %0 : i32, i32, i32
  }
  func.func @transform_3(%arg0: i32, %arg1: i32) -> (i32, i32, i32) {
    %c0_i32 = arith.constant 0 : i32
    %c0_i32_0 = arith.constant 0 : i32
    return %arg0, %c0_i32, %arg1 : i32, i32, i32
  }
}

module attributes {stable_mosaic.version = 11 : i64} {
  func.func @fused_linear_kernel(%arg0: i32, %arg1: i32, %arg2: memref<34x256xbf16, #tpu.memory_space<vmem>>, %arg3: memref<256x256xbf16, #tpu.memory_space<vmem>>, %arg4: memref<1x256xf32, #tpu.memory_space<vmem>>, %arg5: memref<34x256xf32, #tpu.memory_space<vmem>>, %arg6: memref<34x256xf32, #tpu.memory_space<vmem>>) attributes {dimension_semantics = [#tpu.dimension_semantics<parallel>, #tpu.dimension_semantics<parallel>], iteration_bounds = array<i64: 1, 1>, scalar_prefetch = 0 : i64, scratch_operands = 0 : i64, tpu.core_type = #tpu.core_type<tc>, window_params = [{transform_indices = @transform_0, window_bounds = array<i64: 34, 256>}, {transform_indices = @transform_1, window_bounds = array<i64: 256, 256>}, {transform_indices = @transform_2, window_bounds = array<i64: 1, 256>}, {transform_indices = @transform_3, window_bounds = array<i64: 34, 256>}, {transform_indices = @transform_4, window_bounds = array<i64: 34, 256>}]} {
    %c0 = arith.constant 0 : index
    %c0_0 = arith.constant 0 : index
    %0 = vector.load %arg2[%c0, %c0_0] : memref<34x256xbf16, #tpu.memory_space<vmem>>, vector<34x256xbf16>
    %c0_1 = arith.constant 0 : index
    %c0_2 = arith.constant 0 : index
    %1 = vector.load %arg3[%c0_1, %c0_2] : memref<256x256xbf16, #tpu.memory_space<vmem>>, vector<256x256xbf16>
    %cst = arith.constant dense<0.000000e+00> : vector<34x256xf32>
    %2 = tpu.matmul %0, %1, %cst {dimension_numbers = #tpu.dot_dimension_numbers<[1], [0], [0], [1], [0, 0, 1, 1], [], []>} : vector<34x256xbf16>, vector<256x256xbf16>, vector<34x256xf32> -> vector<34x256xf32>
    %c0_3 = arith.constant 0 : index
    %c0_4 = arith.constant 0 : index
    %3 = vector.load %arg4[%c0_3, %c0_4] : memref<1x256xf32, #tpu.memory_space<vmem>>, vector<1x256xf32>
    %4 = vector.broadcast %3 : vector<1x256xf32> to vector<34x256xf32>
    %5 = arith.addf %2, %4 : vector<34x256xf32>
    %c0_5 = arith.constant 0 : index
    %c0_6 = arith.constant 0 : index
    %6 = vector.load %arg5[%c0_5, %c0_6] : memref<34x256xf32, #tpu.memory_space<vmem>>, vector<34x256xf32>
    %7 = arith.addf %5, %6 : vector<34x256xf32>
    %c0_7 = arith.constant 0 : index
    %c0_8 = arith.constant 0 : index
    %8 = vector.load %arg6[%c0_7, %c0_8] : memref<34x256xf32, #tpu.memory_space<vmem>>, vector<34x256xf32>
    tpu.vector_store %arg6[%c0_7, %c0_8], %7 {strides = array<i32>} : memref<34x256xf32, #tpu.memory_space<vmem>>, vector<34x256xf32>,
    return
  }
  func.func @transform_0(%arg0: i32, %arg1: i32) -> (i32, i32) {
    %c0_i32 = arith.constant 0 : i32
    %c0_i32_0 = arith.constant 0 : i32
    return %arg0, %c0_i32 : i32, i32
  }
  func.func @transform_1(%arg0: i32, %arg1: i32) -> (i32, i32) {
    %c0_i32 = arith.constant 0 : i32
    %c0_i32_0 = arith.constant 0 : i32
    return %c0_i32, %arg1 : i32, i32
  }
  func.func @transform_2(%arg0: i32, %arg1: i32) -> (i32, i32) {
    %c0_i32 = arith.constant 0 : i32
    %c0_i32_0 = arith.constant 0 : i32
    return %c0_i32, %arg1 : i32, i32
  }
  func.func @transform_3(%arg0: i32, %arg1: i32) -> (i32, i32) {
    %c0_i32 = arith.constant 0 : i32
    return %arg0, %arg1 : i32, i32
  }
  func.func @transform_4(%arg0: i32, %arg1: i32) -> (i32, i32) {
    %c0_i32 = arith.constant 0 : i32
    return %arg0, %arg1 : i32, i32
  }
}

module attributes {stable_mosaic.version = 11 : i64} {
  func.func @fused_linear_kernel(%arg0: i32, %arg1: i32, %arg2: memref<34x256xf32, #tpu.memory_space<vmem>>, %arg3: memref<256x256xbf16, #tpu.memory_space<vmem>>, %arg4: memref<1x256xf32, #tpu.memory_space<vmem>>, %arg5: memref<1x256xf32, #tpu.memory_space<vmem>>, %arg6: memref<1x256xf32, #tpu.memory_space<vmem>>, %arg7: memref<34x256xbf16, #tpu.memory_space<vmem>>) attributes {dimension_semantics = [#tpu.dimension_semantics<parallel>, #tpu.dimension_semantics<parallel>], iteration_bounds = array<i64: 1, 4>, scalar_prefetch = 0 : i64, scratch_operands = 0 : i64, tpu.core_type = #tpu.core_type<tc>, window_params = [{transform_indices = @transform_0, window_bounds = array<i64: 34, 256>}, {transform_indices = @transform_1, window_bounds = array<i64: 256, 256>}, {transform_indices = @transform_2, window_bounds = array<i64: 1, 256>}, {pipeline_mode = #tpu.pipeline_mode<synchronous>, transform_indices = @transform_3, window_bounds = array<i64: 1, 256>}, {pipeline_mode = #tpu.pipeline_mode<synchronous>, transform_indices = @transform_4, window_bounds = array<i64: 1, 256>}, {transform_indices = @transform_5, window_bounds = array<i64: 34, 256>}]} {
    %c0 = arith.constant 0 : index
    %c0_0 = arith.constant 0 : index
    %0 = vector.load %arg2[%c0, %c0_0] : memref<34x256xf32, #tpu.memory_space<vmem>>, vector<34x256xf32>
    %cst = arith.constant dense<0.000000e+00> : vector<34xf32>
    %1 = vector.multi_reduction <add>, %0, %cst [1] : vector<34x256xf32> to vector<34xf32>
    %2 = vector.shape_cast %1 : vector<34xf32> to vector<34x1xf32>
    %cst_1 = arith.constant 2.560000e+02 : f32
    %3 = vector.broadcast %cst_1 : f32 to vector<34x1xf32>
    %4 = arith.divf %2, %3 : vector<34x1xf32>
    %5 = vector.broadcast %4 : vector<34x1xf32> to vector<34x256xf32>
    %6 = arith.subf %0, %5 : vector<34x256xf32>
    %7 = arith.mulf %6, %6 : vector<34x256xf32>
    %cst_2 = arith.constant dense<0.000000e+00> : vector<34xf32>
    %8 = vector.multi_reduction <add>, %7, %cst_2 [1] : vector<34x256xf32> to vector<34xf32>
    %9 = vector.shape_cast %8 : vector<34xf32> to vector<34x1xf32>
    %cst_3 = arith.constant 2.560000e+02 : f32
    %10 = vector.broadcast %cst_3 : f32 to vector<34x1xf32>
    %11 = arith.divf %9, %10 : vector<34x1xf32>
    %12 = vector.broadcast %4 : vector<34x1xf32> to vector<34x256xf32>
    %13 = arith.subf %0, %12 : vector<34x256xf32>
    %cst_4 = arith.constant 9.99999974E-6 : f32
    %14 = vector.broadcast %cst_4 : f32 to vector<34x1xf32>
    %15 = arith.addf %11, %14 : vector<34x1xf32>
    %16 = math.rsqrt %15 : vector<34x1xf32>
    %17 = vector.broadcast %16 : vector<34x1xf32> to vector<34x256xf32>
    %18 = arith.mulf %13, %17 : vector<34x256xf32>
    %c0_5 = arith.constant 0 : index
    %c0_6 = arith.constant 0 : index
    %19 = vector.load %arg5[%c0_5, %c0_6] : memref<1x256xf32, #tpu.memory_space<vmem>>, vector<1x256xf32>
    %20 = vector.broadcast %19 : vector<1x256xf32> to vector<34x256xf32>
    %21 = arith.mulf %18, %20 : vector<34x256xf32>
    %c0_7 = arith.constant 0 : index
    %c0_8 = arith.constant 0 : index
    %22 = vector.load %arg6[%c0_7, %c0_8] : memref<1x256xf32, #tpu.memory_space<vmem>>, vector<1x256xf32>
    %23 = vector.broadcast %22 : vector<1x256xf32> to vector<34x256xf32>
    %24 = arith.addf %21, %23 : vector<34x256xf32>
    %25 = arith.truncf %24 : vector<34x256xf32> to vector<34x256xbf16>
    %c0_9 = arith.constant 0 : index
    %c0_10 = arith.constant 0 : index
    %26 = vector.load %arg3[%c0_9, %c0_10] : memref<256x256xbf16, #tpu.memory_space<vmem>>, vector<256x256xbf16>
    %cst_11 = arith.constant dense<0.000000e+00> : vector<34x256xf32>
    %27 = tpu.matmul %25, %26, %cst_11 {dimension_numbers = #tpu.dot_dimension_numbers<[1], [0], [0], [1], [0, 0, 1, 1], [], []>} : vector<34x256xbf16>, vector<256x256xbf16>, vector<34x256xf32> -> vector<34x256xf32>
    %c0_12 = arith.constant 0 : index
    %c0_13 = arith.constant 0 : index
    %28 = vector.load %arg4[%c0_12, %c0_13] : memref<1x256xf32, #tpu.memory_space<vmem>>, vector<1x256xf32>
    %29 = vector.broadcast %28 : vector<1x256xf32> to vector<34x256xf32>
    %30 = arith.addf %27, %29 : vector<34x256xf32>
    %cst_14 = arith.constant 1.702000e+00 : f32
    %31 = vector.broadcast %cst_14 : f32 to vector<34x256xf32>
    %32 = arith.mulf %31, %30 : vector<34x256xf32>
    %33 = arith.negf %32 : vector<34x256xf32>
    %34 = math.exp %33 : vector<34x256xf32>
    %cst_15 = arith.constant 1.000000e+00 : f32
    %35 = vector.broadcast %cst_15 : f32 to vector<34x256xf32>
    %36 = arith.addf %35, %34 : vector<34x256xf32>
    %37 = arith.divf %35, %36 : vector<34x256xf32>
    %38 = arith.mulf %30, %37 : vector<34x256xf32>
    %39 = arith.truncf %38 : vector<34x256xf32> to vector<34x256xbf16>
    %c0_16 = arith.constant 0 : index
    %c0_17 = arith.constant 0 : index
    %40 = vector.load %arg7[%c0_16, %c0_17] : memref<34x256xbf16, #tpu.memory_space<vmem>>, vector<34x256xbf16>
    tpu.vector_store %arg7[%c0_16, %c0_17], %39 {strides = array<i32>} : memref<34x256xbf16, #tpu.memory_space<vmem>>, vector<34x256xbf16>,
    return
  }
  func.func @transform_0(%arg0: i32, %arg1: i32) -> (i32, i32) {
    %c0_i32 = arith.constant 0 : i32
    %c0_i32_0 = arith.constant 0 : i32
    return %arg0, %c0_i32 : i32, i32
  }
  func.func @transform_1(%arg0: i32, %arg1: i32) -> (i32, i32) {
    %c0_i32 = arith.constant 0 : i32
    %c0_i32_0 = arith.constant 0 : i32
    return %c0_i32, %arg1 : i32, i32
  }
  func.func @transform_2(%arg0: i32, %arg1: i32) -> (i32, i32) {
    %c0_i32 = arith.constant 0 : i32
    %c0_i32_0 = arith.constant 0 : i32
    return %c0_i32, %arg1 : i32, i32
  }
  func.func @transform_3(%arg0: i32, %arg1: i32) -> (i32, i32) {
    %c0_i32 = arith.constant 0 : i32
    %c0_i32_0 = arith.constant 0 : i32
    %c0_i32_1 = arith.constant 0 : i32
    return %c0_i32, %c0_i32_0 : i32, i32
  }
  func.func @transform_4(%arg0: i32, %arg1: i32) -> (i32, i32) {
    %c0_i32 = arith.constant 0 : i32
    %c0_i32_0 = arith.constant 0 : i32
    %c0_i32_1 = arith.constant 0 : i32
    return %c0_i32, %c0_i32_0 : i32, i32
  }
  func.func @transform_5(%arg0: i32, %arg1: i32) -> (i32, i32) {
    %c0_i32 = arith.constant 0 : i32
    return %arg0, %arg1 : i32, i32
  }
}

module attributes {stable_mosaic.version = 11 : i64} {
  func.func @fused_linear_kernel(%arg0: i32, %arg1: i32, %arg2: memref<34x1024xbf16, #tpu.memory_space<vmem>>, %arg3: memref<1024x256xbf16, #tpu.memory_space<vmem>>, %arg4: memref<1x256xf32, #tpu.memory_space<vmem>>, %arg5: memref<34x256xf32, #tpu.memory_space<vmem>>, %arg6: memref<34x256xf32, #tpu.memory_space<vmem>>) attributes {dimension_semantics = [#tpu.dimension_semantics<parallel>, #tpu.dimension_semantics<parallel>], iteration_bounds = array<i64: 1, 1>, scalar_prefetch = 0 : i64, scratch_operands = 0 : i64, tpu.core_type = #tpu.core_type<tc>, window_params = [{transform_indices = @transform_0, window_bounds = array<i64: 34, 1024>}, {transform_indices = @transform_1, window_bounds = array<i64: 1024, 256>}, {transform_indices = @transform_2, window_bounds = array<i64: 1, 256>}, {transform_indices = @transform_3, window_bounds = array<i64: 34, 256>}, {transform_indices = @transform_4, window_bounds = array<i64: 34, 256>}]} {
    %c0 = arith.constant 0 : index
    %c0_0 = arith.constant 0 : index
    %0 = vector.load %arg2[%c0, %c0_0] : memref<34x1024xbf16, #tpu.memory_space<vmem>>, vector<34x1024xbf16>
    %c0_1 = arith.constant 0 : index
    %c0_2 = arith.constant 0 : index
    %1 = vector.load %arg3[%c0_1, %c0_2] : memref<1024x256xbf16, #tpu.memory_space<vmem>>, vector<1024x256xbf16>
    %cst = arith.constant dense<0.000000e+00> : vector<34x256xf32>
    %2 = tpu.matmul %0, %1, %cst {dimension_numbers = #tpu.dot_dimension_numbers<[1], [0], [0], [1], [0, 0, 1, 1], [], []>} : vector<34x1024xbf16>, vector<1024x256xbf16>, vector<34x256xf32> -> vector<34x256xf32>
    %c0_3 = arith.constant 0 : index
    %c0_4 = arith.constant 0 : index
    %3 = vector.load %arg4[%c0_3, %c0_4] : memref<1x256xf32, #tpu.memory_space<vmem>>, vector<1x256xf32>
    %4 = vector.broadcast %3 : vector<1x256xf32> to vector<34x256xf32>
    %5 = arith.addf %2, %4 : vector<34x256xf32>
    %c0_5 = arith.constant 0 : index
    %c0_6 = arith.constant 0 : index
    %6 = vector.load %arg5[%c0_5, %c0_6] : memref<34x256xf32, #tpu.memory_space<vmem>>, vector<34x256xf32>
    %7 = arith.addf %5, %6 : vector<34x256xf32>
    %c0_7 = arith.constant 0 : index
    %c0_8 = arith.constant 0 : index
    %8 = vector.load %arg6[%c0_7, %c0_8] : memref<34x256xf32, #tpu.memory_space<vmem>>, vector<34x256xf32>
    tpu.vector_store %arg6[%c0_7, %c0_8], %7 {strides = array<i32>} : memref<34x256xf32, #tpu.memory_space<vmem>>, vector<34x256xf32>,
    return
  }
  func.func @transform_0(%arg0: i32, %arg1: i32) -> (i32, i32) {
    %c0_i32 = arith.constant 0 : i32
    %c0_i32_0 = arith.constant 0 : i32
    return %arg0, %c0_i32 : i32, i32
  }
  func.func @transform_1(%arg0: i32, %arg1: i32) -> (i32, i32) {
    %c0_i32 = arith.constant 0 : i32
    %c0_i32_0 = arith.constant 0 : i32
    return %c0_i32, %arg1 : i32, i32
  }
  func.func @transform_2(%arg0: i32, %arg1: i32) -> (i32, i32) {
    %c0_i32 = arith.constant 0 : i32
    %c0_i32_0 = arith.constant 0 : i32
    return %c0_i32, %arg1 : i32, i32
  }
  func.func @transform_3(%arg0: i32, %arg1: i32) -> (i32, i32) {
    %c0_i32 = arith.constant 0 : i32
    return %arg0, %arg1 : i32, i32
  }
  func.func @transform_4(%arg0: i32, %arg1: i32) -> (i32, i32) {
    %c0_i32 = arith.constant 0 : i32
    return %arg0, %arg1 : i32, i32
  }
}

module attributes {stable_mosaic.version = 11 : i64} {
  func.func @fused_linear_kernel(%arg0: i32, %arg1: i32, %arg2: memref<2x256xf32, #tpu.memory_space<vmem>>, %arg3: memref<256x128xbf16, #tpu.memory_space<vmem>>, %arg4: memref<1x256xf32, #tpu.memory_space<vmem>>, %arg5: memref<1x256xf32, #tpu.memory_space<vmem>>, %arg6: memref<2x128xf32, #tpu.memory_space<vmem>>) attributes {dimension_semantics = [#tpu.dimension_semantics<parallel>, #tpu.dimension_semantics<parallel>], iteration_bounds = array<i64: 1, 1>, scalar_prefetch = 0 : i64, scratch_operands = 0 : i64, tpu.core_type = #tpu.core_type<tc>, window_params = [{transform_indices = @transform_0, window_bounds = array<i64: 2, 256>}, {transform_indices = @transform_1, window_bounds = array<i64: 256, 128>}, {pipeline_mode = #tpu.pipeline_mode<synchronous>, transform_indices = @transform_2, window_bounds = array<i64: 1, 256>}, {pipeline_mode = #tpu.pipeline_mode<synchronous>, transform_indices = @transform_3, window_bounds = array<i64: 1, 256>}, {transform_indices = @transform_4, window_bounds = array<i64: 2, 128>}]} {
    %c0 = arith.constant 0 : index
    %c0_0 = arith.constant 0 : index
    %0 = vector.load %arg2[%c0, %c0_0] : memref<2x256xf32, #tpu.memory_space<vmem>>, vector<2x256xf32>
    %cst = arith.constant dense<0.000000e+00> : vector<2xf32>
    %1 = vector.multi_reduction <add>, %0, %cst [1] : vector<2x256xf32> to vector<2xf32>
    %2 = vector.shape_cast %1 : vector<2xf32> to vector<2x1xf32>
    %cst_1 = arith.constant 2.560000e+02 : f32
    %3 = vector.broadcast %cst_1 : f32 to vector<2x1xf32>
    %4 = arith.divf %2, %3 : vector<2x1xf32>
    %5 = vector.broadcast %4 : vector<2x1xf32> to vector<2x256xf32>
    %6 = arith.subf %0, %5 : vector<2x256xf32>
    %7 = arith.mulf %6, %6 : vector<2x256xf32>
    %cst_2 = arith.constant dense<0.000000e+00> : vector<2xf32>
    %8 = vector.multi_reduction <add>, %7, %cst_2 [1] : vector<2x256xf32> to vector<2xf32>
    %9 = vector.shape_cast %8 : vector<2xf32> to vector<2x1xf32>
    %cst_3 = arith.constant 2.560000e+02 : f32
    %10 = vector.broadcast %cst_3 : f32 to vector<2x1xf32>
    %11 = arith.divf %9, %10 : vector<2x1xf32>
    %12 = vector.broadcast %4 : vector<2x1xf32> to vector<2x256xf32>
    %13 = arith.subf %0, %12 : vector<2x256xf32>
    %cst_4 = arith.constant 9.99999974E-6 : f32
    %14 = vector.broadcast %cst_4 : f32 to vector<2x1xf32>
    %15 = arith.addf %11, %14 : vector<2x1xf32>
    %16 = math.rsqrt %15 : vector<2x1xf32>
    %17 = vector.broadcast %16 : vector<2x1xf32> to vector<2x256xf32>
    %18 = arith.mulf %13, %17 : vector<2x256xf32>
    %c0_5 = arith.constant 0 : index
    %c0_6 = arith.constant 0 : index
    %19 = vector.load %arg4[%c0_5, %c0_6] : memref<1x256xf32, #tpu.memory_space<vmem>>, vector<1x256xf32>
    %20 = vector.broadcast %19 : vector<1x256xf32> to vector<2x256xf32>
    %21 = arith.mulf %18, %20 : vector<2x256xf32>
    %c0_7 = arith.constant 0 : index
    %c0_8 = arith.constant 0 : index
    %22 = vector.load %arg5[%c0_7, %c0_8] : memref<1x256xf32, #tpu.memory_space<vmem>>, vector<1x256xf32>
    %23 = vector.broadcast %22 : vector<1x256xf32> to vector<2x256xf32>
    %24 = arith.addf %21, %23 : vector<2x256xf32>
    %25 = arith.truncf %24 : vector<2x256xf32> to vector<2x256xbf16>
    %c0_9 = arith.constant 0 : index
    %c0_10 = arith.constant 0 : index
    %26 = vector.load %arg3[%c0_9, %c0_10] : memref<256x128xbf16, #tpu.memory_space<vmem>>, vector<256x128xbf16>
    %cst_11 = arith.constant dense<0.000000e+00> : vector<2x128xf32>
    %27 = tpu.matmul %25, %26, %cst_11 {dimension_numbers = #tpu.dot_dimension_numbers<[1], [0], [0], [1], [0, 0, 1, 1], [], []>} : vector<2x256xbf16>, vector<256x128xbf16>, vector<2x128xf32> -> vector<2x128xf32>
    %c0_12 = arith.constant 0 : index
    %c0_13 = arith.constant 0 : index
    %28 = vector.load %arg6[%c0_12, %c0_13] : memref<2x128xf32, #tpu.memory_space<vmem>>, vector<2x128xf32>
    tpu.vector_store %arg6[%c0_12, %c0_13], %27 {strides = array<i32>} : memref<2x128xf32, #tpu.memory_space<vmem>>, vector<2x128xf32>,
    return
  }
  func.func @transform_0(%arg0: i32, %arg1: i32) -> (i32, i32) {
    %c0_i32 = arith.constant 0 : i32
    %c0_i32_0 = arith.constant 0 : i32
    return %arg0, %c0_i32 : i32, i32
  }
  func.func @transform_1(%arg0: i32, %arg1: i32) -> (i32, i32) {
    %c0_i32 = arith.constant 0 : i32
    %c0_i32_0 = arith.constant 0 : i32
    return %c0_i32, %arg1 : i32, i32
  }
  func.func @transform_2(%arg0: i32, %arg1: i32) -> (i32, i32) {
    %c0_i32 = arith.constant 0 : i32
    %c0_i32_0 = arith.constant 0 : i32
    %c0_i32_1 = arith.constant 0 : i32
    return %c0_i32, %c0_i32_0 : i32, i32
  }
  func.func @transform_3(%arg0: i32, %arg1: i32) -> (i32, i32) {
    %c0_i32 = arith.constant 0 : i32
    %c0_i32_0 = arith.constant 0 : i32
    %c0_i32_1 = arith.constant 0 : i32
    return %c0_i32, %c0_i32_0 : i32, i32
  }
  func.func @transform_4(%arg0: i32, %arg1: i32) -> (i32, i32) {
    %c0_i32 = arith.constant 0 : i32
    return %arg0, %arg1 : i32, i32
  }
}

</mosaic_0001>

<llo_original>
// kernel: clip_visual_forward.14
$region0: #{clip_visual_forward.14}
  #allocation0 [shape = 'u32[]', space=smem, size = 0x4, offset = 0x4, fixed_abs, tag = 'smem constant byte address 0x4 - core index']
  #allocation1 [shape = 'u32[144,128]{1,0:T(1,128)}', space=vmem, size = 0x12000, scoped, tag = 'internal scratch']
  %s0 = inlined_call_operand.vmem [shape: f32[2,17,256], index: 0, kind: input, shape index: {}]
  %s1 = inlined_call_operand.vmem [shape: f32[17,256], index: 1, kind: input, shape index: {}]
  %s2 = inlined_call_operand.vmem [shape: f32[1,256], index: 2, kind: input, shape index: {}]
  %s3 = inlined_call_operand.vmem [shape: f32[1,256], index: 3, kind: input, shape index: {}]
  %s4 = inlined_call_operand.vmem [shape: f32[2,17,256], index: 4, kind: output, shape index: {}]
  %s5 = sld [smem:[#allocation0]]
  $region49: #{clip_visual_forward.14} parent=0
    _
  %s7 = ssub.s32 1, %s5
  %s8 = scalar_select 0, %s7, %s5
  loop: start=0, step=1, limit=4
  $region2: #{clip_visual_forward.14} parent=0 // loop_pre_header
    _
  $region3: #{clip_visual_forward.14} parent=0 // loop_header
    %s10 = sphi 0, %s14
    %p11 = scmp.ge.s32.totalorder %s10, 4
    %s20 = sphi 0, %s22
    %s23 = sphi 0, %s20
    %s24 = sphi 0, %s23
    %s40 = sphi 0, %s24
    %s44 = sphi 0, %s44
    %s46 = sphi 0, %s44
    %s47 = sphi 0, %s46
    %s61 = sphi 0, %s47
    %s65 = sphi 0, %s65
    %s67 = sphi 0, %s65
    %s68 = sphi 0, %s67
    %s82 = sphi 0, %s68
    %s86 = sphi 0, %s86
    %s88 = sphi 0, %s86
    %s89 = sphi 0, %s88
    %s103 = sphi 0, %s89
    %s109 = sphi 0, %s111
    %s112 = sphi 0, %s109
    %s113 = sphi 0, %s112
    %s129 = sphi 0, %s113
  $region4: #{clip_visual_forward.14} parent=0 // loop_header_branch
    %13 = sbr.rel (%p11) target = $region8
  $region5: #{clip_visual_forward.14} parent=0 // loop_body
    %s15 = ssub.s32 %s10, 1
    %s16 = ssub.s32 %s10, 2
    %s17 = sadd.s32 %s10, 1
    %s18 = ssub.s32 %s10, %s17
    %p19 = scmp.eq.s32.totalorder %s18, 0
    %s21 = sadd.s32 %s20, 1
    %s22 = scalar_select %p19, %s20, %s21
    %p25 = pneg %p19
    %p26 = scmp.eq.s32.totalorder %s10, 1
    %p27 = por %p25, %p26
    %p28 = scmp.ne.s32.totalorder %s20, %s23
    %p29 = scmp.eq.s32.totalorder %s10, 0
    %p30 = por %p28, %p29
    %p31 = scmp.ne.s32.totalorder %s20, %s23
    %p32 = scmp.eq.s32.totalorder %s15, 1
    %p33 = por %p31, %p32
    %p34 = scmp.ne.s32.totalorder %s23, %s24
    %p35 = scmp.eq.s32.totalorder %s15, 0
    %p36 = por %p34, %p35
    %p37 = scmp.ne.s32.totalorder %s23, %s24
    %p38 = scmp.eq.s32.totalorder %s16, 1
    %p39 = por %p37, %p38
    %p41 = scmp.ne.s32.totalorder %s24, %s40
    %p42 = scmp.eq.s32.totalorder %s16, 0
    %p43 = por %p41, %p42
    %s45 = sadd.s32 %s44, 1
    %p48 = scmp.eq.s32.totalorder %s10, 1
    %p49 = scmp.ne.s32.totalorder %s44, %s46
    %p50 = scmp.eq.s32.totalorder %s10, 0
    %p51 = por %p49, %p50
    %p52 = scmp.ne.s32.totalorder %s44, %s46
    %p53 = scmp.eq.s32.totalorder %s15, 1
    %p54 = por %p52, %p53
    %p55 = scmp.ne.s32.totalorder %s46, %s47
    %p56 = scmp.eq.s32.totalorder %s15, 0
    %p57 = por %p55, %p56
    %p58 = scmp.ne.s32.totalorder %s46, %s47
    %p59 = scmp.eq.s32.totalorder %s16, 1
    %p60 = por %p58, %p59
    %p62 = scmp.ne.s32.totalorder %s47, %s61
    %p63 = scmp.eq.s32.totalorder %s16, 0
    %p64 = por %p62, %p63
    %s66 = sadd.s32 %s65, 1
    %p69 = scmp.eq.s32.totalorder %s10, 1
    %p70 = scmp.ne.s32.totalorder %s65, %s67
    %p71 = scmp.eq.s32.totalorder %s10, 0
    %p72 = por %p70, %p71
    %p73 = scmp.ne.s32.totalorder %s65, %s67
    %p74 = scmp.eq.s32.totalorder %s15, 1
    %p75 = por %p73, %p74
    %p76 = scmp.ne.s32.totalorder %s67, %s68
    %p77 = scmp.eq.s32.totalorder %s15, 0
    %p78 = por %p76, %p77
    %p79 = scmp.ne.s32.totalorder %s67, %s68
    %p80 = scmp.eq.s32.totalorder %s16, 1
    %p81 = por %p79, %p80
    %p83 = scmp.ne.s32.totalorder %s68, %s82
    %p84 = scmp.eq.s32.totalorder %s16, 0
    %p85 = por %p83, %p84
    %s87 = sadd.s32 %s86, 1
    %p90 = scmp.eq.s32.totalorder %s10, 1
    %p91 = scmp.ne.s32.totalorder %s86, %s88
    %p92 = scmp.eq.s32.totalorder %s10, 0
    %p93 = por %p91, %p92
    %p94 = scmp.ne.s32.totalorder %s86, %s88
    %p95 = scmp.eq.s32.totalorder %s15, 1
    %p96 = por %p94, %p95
    %p97 = scmp.ne.s32.totalorder %s88, %s89
    %p98 = scmp.eq.s32.totalorder %s15, 0
    %p99 = por %p97, %p98
    %p100 = scmp.ne.s32.totalorder %s88, %s89
    %p101 = scmp.eq.s32.totalorder %s16, 1
    %p102 = por %p100, %p101
    %p104 = scmp.ne.s32.totalorder %s89, %s103
    %p105 = scmp.eq.s32.totalorder %s16, 0
    %p106 = por %p104, %p105
    %s107 = ssub.s32 %s10, %s17
    %p108 = scmp.eq.s32.totalorder %s107, 0
    %s110 = sadd.s32 %s109, 1
    %s111 = scalar_select %p108, %s109, %s110
    %p114 = pneg %p108
    %p115 = scmp.eq.s32.totalorder %s10, 1
    %p116 = por %p114, %p115
    %p117 = scmp.ne.s32.totalorder %s109, %s112
    %p118 = scmp.eq.s32.totalorder %s10, 0
    %p119 = por %p117, %p118
    %p120 = scmp.ne.s32.totalorder %s109, %s112
    %p121 = scmp.eq.s32.totalorder %s15, 1
    %p122 = por %p120, %p121
    %p123 = scmp.ne.s32.totalorder %s112, %s113
    %p124 = scmp.eq.s32.totalorder %s15, 0
    %p125 = por %p123, %p124
    %p126 = scmp.ne.s32.totalorder %s112, %s113
    %p127 = scmp.eq.s32.totalorder %s16, 1
    %p128 = por %p126, %p127
    %p130 = scmp.ne.s32.totalorder %s113, %s129
    %p131 = scmp.eq.s32.totalorder %s16, 0
    %p132 = por %p130, %p131
    %p133 = scmp.le.s32.totalorder 1, %s10
    %p134 = scmp.lt.s32.totalorder %s10, 3
    %p135 = pnand %p133, %p134
    %p136 = pneg %p135
    // Predicated region
    $region9: #{clip_visual_forward.14} parent=5 // pred_check
      _
    $region10: #{clip_visual_forward.14} parent=5 // pred_check_branch
      %138 = sbr.rel (%p135) target = $region12
    $region11: #{clip_visual_forward.14} parent=5 // pred_region
      %s139 = ssub.s32 %s10, 1
      // Predicated region
      $region13: #{clip_visual_forward.14} parent=11 // pred_check
        %p140 = pneg %p57
      $region14: #{clip_visual_forward.14} parent=11 // pred_check_branch
        %142 = sbr.rel (%p140) target = $region16
      $region15: #{clip_visual_forward.14} parent=11 // pred_region
        _
      $region16: #{clip_visual_forward.14} parent=11 // pred_fallthru
        _
      // Predicated region
      $region17: #{clip_visual_forward.14} parent=11 // pred_check
        %p143 = pneg %p78
      $region18: #{clip_visual_forward.14} parent=11 // pred_check_branch
        %145 = sbr.rel (%p143) target = $region20
      $region19: #{clip_visual_forward.14} parent=11 // pred_region
        _
      $region20: #{clip_visual_forward.14} parent=11 // pred_fallthru
        _
      // Predicated region
      $region21: #{clip_visual_forward.14} parent=11 // pred_check
        %p146 = pneg %p99
      $region22: #{clip_visual_forward.14} parent=11 // pred_check_branch
        %148 = sbr.rel (%p146) target = $region24
      $region23: #{clip_visual_forward.14} parent=11 // pred_region
        _
      $region24: #{clip_visual_forward.14} parent=11 // pred_fallthru
        _
    $region12: #{clip_visual_forward.14} parent=5 // pred_fallthru
      _
    %p149 = scmp.lt.s32.totalorder %s10, 2
    // Predicated region
    $region25: #{clip_visual_forward.14} parent=5 // pred_check
      %p150 = pneg %p149
    $region26: #{clip_visual_forward.14} parent=5 // pred_check_branch
      %152 = sbr.rel (%p150) target = $region28
    $region27: #{clip_visual_forward.14} parent=5 // pred_region
      // Predicated region
      $region29: #{clip_visual_forward.14} parent=27 // pred_check
        %p153 = pneg %p30
      $region30: #{clip_visual_forward.14} parent=27 // pred_check_branch
        %155 = sbr.rel (%p153) target = $region32
      $region31: #{clip_visual_forward.14} parent=27 // pred_region
        %p156 = scmp.lt.s32.totalorder %s10, 1
        %s157 = scalar_select %p156, %s10, 1
        %s158 = smul.addr %s157, 6
        %s159 = smul.addr %s158, 8
        %s160 = scalar_lea.vmem %s0, %s159
      $region32: #{clip_visual_forward.14} parent=27 // pred_fallthru
        _
    $region28: #{clip_visual_forward.14} parent=5 // pred_fallthru
      _
    %p161 = scmp.le.s32.totalorder 1, %s10
    %p162 = scmp.lt.s32.totalorder %s10, 3
    %p163 = pnand %p161, %p162
    %p164 = pneg %p163
    // Predicated region
    $region33: #{clip_visual_forward.14} parent=5 // pred_check
      _
    $region34: #{clip_visual_forward.14} parent=5 // pred_check_branch
      %166 = sbr.rel (%p163) target = $region36
    $region35: #{clip_visual_forward.14} parent=5 // pred_region
      %s167 = ssub.s32 %s10, 1
      %p168 = scmp.lt.s32.totalorder %s15, 1
      %s169 = scalar_select %p168, %s15, 1
      %s170 = smul.addr %s169, 6
      %s171 = smul.addr %s170, 8
      %s172 = scalar_lea.vmem %s0, %s171
      %p173 = pneg %p36
      %p174 = pneg %p33
      %p175 = pneg %p57
      %p176 = pneg %p54
      %p177 = pneg %p78
      %p178 = pneg %p75
      %p179 = pneg %p99
      %p180 = pneg %p96
      %p181 = pneg %p125
      %p182 = pneg %p122
      %p183 = scmp.lt.s32.totalorder %s15, 1
      %s184 = scalar_select %p183, %s15, 1
      %s185 = smul.addr %s184, 6
      %s186 = smul.addr %s185, 8
      %s187 = scalar_lea.vmem %s4, %s186
      %p188 = scmp.lt.s32.totalorder %s15, 1
      %s189 = scalar_select %p188, %s15, 1
      %s190 = smul.addr %s189, 6
      %s191 = smul.addr %s190, 8
      %s192 = scalar_lea.vmem %s0, %s191
      %p193 = scmp.lt.s32.totalorder %s15, 1
      %s194 = scalar_select %p193, %s15, 1
      %s195 = smul.addr %s194, 6
      %s196 = smul.addr %s195, 8
      %s197 = scalar_lea.vmem %s4, %s196
      %v198 = vld [vmem:[%s192] sm:$0xff]
      %v199 = vld [vmem:[%s192 + $0x8] sm:$0xff]
      %v200 = vld [vmem:[%s192 + $0x10] sm:$0xff]
      %v201 = vld [vmem:[%s192 + $0x18] sm:$0xff]
      %v202 = vld [vmem:[%s192 + $0x20] sm:$0x1]
      %v203 = vld [vmem:[%s192 + $0x28] sm:$0x1]
      %v204 = vld [vmem:[%s1] sm:$0xff]
      %v205 = vld [vmem:[%s1 + $0x8] sm:$0xff]
      %v206 = vld [vmem:[%s1 + $0x10] sm:$0xff]
      %v207 = vld [vmem:[%s1 + $0x18] sm:$0xff]
      %v208 = vld [vmem:[%s1 + $0x20] sm:$0x1]
      %v209 = vld [vmem:[%s1 + $0x28] sm:$0x1]
      %v210 = vadd.f32 %v198, %v204
      %v211 = vadd.f32 %v199, %v205
      %v212 = vadd.f32 %v200, %v206
      %v213 = vadd.f32 %v201, %v207
      %v214 = vadd.f32 %v202, %v208
      %v215 = vadd.f32 %v203, %v209
      %v216 = vadd.f32 %v210, %v211
      %217 = vadd.xlane.f32.xlu0 %v216
      %v218 = vpop.xlane.xlu0 %217
      %v219 = vadd.f32 %v212, %v213
      %220 = vadd.xlane.f32.xlu0 %v219
      %v221 = vpop.xlane.xlu0 %220
      %vm222 = vcmask 1040384
      %v223 = vsel %vm222, %v214, 0.0
      %v224 = vsel %vm222, %v215, 0.0
      %v225 = vadd.f32 %v223, %v224
      %226 = vadd.xlane.f32.xlu0 %v225
      %v227 = vpop.xlane.xlu0 %226
      %v228 = vrcp.pop 256.0
      %v229 = vmul.f32 %v218, %v228
      %v230 = vmul.f32 %v221, %v228
      %v231 = vmul.f32 %v227, %v228
      %v232 = vsub.f32 %v210, %v229
      %v233 = vsub.f32 %v211, %v229
      %v234 = vsub.f32 %v212, %v230
      %v235 = vsub.f32 %v213, %v230
      %v236 = vsub.f32 %v214, %v231
      %v237 = vsub.f32 %v215, %v231
      %v238 = vmul.f32 %v232, %v232
      %v239 = vmul.f32 %v233, %v233
      %v240 = vmul.f32 %v234, %v234
      %v241 = vmul.f32 %v235, %v235
      %v242 = vmul.f32 %v236, %v236
      %v243 = vmul.f32 %v237, %v237
      %v244 = vadd.f32 %v238, %v239
      %245 = vadd.xlane.f32.xlu0 %v244
      %v246 = vpop.xlane.xlu0 %245
      %v247 = vadd.f32 %v240, %v241
      %248 = vadd.xlane.f32.xlu0 %v247
      %v249 = vpop.xlane.xlu0 %248
      %v250 = vsel %vm222, %v242, 0.0
      %v251 = vsel %vm222, %v243, 0.0
      %v252 = vadd.f32 %v250, %v251
      %253 = vadd.xlane.f32.xlu0 %v252
      %v254 = vpop.xlane.xlu0 %253
      %v255 = vmul.f32 %v246, %v228
      %v256 = vmul.f32 %v249, %v228
      %v257 = vmul.f32 %v254, %v228
      %v258 = vadd.f32 %v255, 1e-05
      %v259 = vadd.f32 %v256, 1e-05
      %v260 = vadd.f32 %v257, 1e-05
      %v261 = vrsqrt.pop %v258
      %v262 = vrsqrt.pop %v259
      %v263 = vrsqrt.pop %v260
      %v264 = vmul.f32 %v232, %v261
      %v265 = vmul.f32 %v233, %v261
      %v266 = vmul.f32 %v234, %v262
      %v267 = vmul.f32 %v235, %v262
      %v268 = vmul.f32 %v236, %v263
      %v269 = vmul.f32 %v237, %v263
      %v270 = vld [vmem:[%s2] sm:$0x3]
      %v272 = vlaneseq
      %v273 = vshrl.u32 %v272, 7
      %v274 = vsub.s32 0, %v273
      %v275 = vrot.slane %v270, %v274
      %v276 = vlaneseq
      %v277 = vshrl.u32 %v276, 7
      %v278 = vsub.s32 1, %v277
      %v279 = vrot.slane %v270, %v278
      %v282 = vmul.f32 %v264, %v275
      %v283 = vmul.f32 %v265, %v279
      %v284 = vmul.f32 %v266, %v275
      %v285 = vmul.f32 %v267, %v279
      %v286 = vmul.f32 %v268, %v275
      %v287 = vmul.f32 %v269, %v279
      %v288 = vld [vmem:[%s3] sm:$0x3]
      %v290 = vlaneseq
      %v291 = vshrl.u32 %v290, 7
      %v292 = vsub.s32 0, %v291
      %v293 = vrot.slane %v288, %v292
      %v294 = vlaneseq
      %v295 = vshrl.u32 %v294, 7
      %v296 = vsub.s32 1, %v295
      %v297 = vrot.slane %v288, %v296
      %v300 = vadd.f32 %v282, %v293
      %v301 = vadd.f32 %v283, %v297
      %v302 = vadd.f32 %v284, %v293
      %v303 = vadd.f32 %v285, %v297
      %v304 = vadd.f32 %v286, %v293
      %v305 = vadd.f32 %v287, %v297
      %306 = vst [vmem:[%s197] sm:$0xff] %v300
      %307 = vst [vmem:[%s197 + $0x8] sm:$0xff] %v301
      %308 = vst [vmem:[%s197 + $0x10] sm:$0xff] %v302
      %309 = vst [vmem:[%s197 + $0x18] sm:$0xff] %v303
      %310 = vst [vmem:[%s197 + $0x20] sm:$0x1] %v304
      %311 = vst [vmem:[%s197 + $0x28] sm:$0x1] %v305
      %p312 = scmp.lt.s32.totalorder %s15, 1
      %s313 = scalar_select %p312, %s15, 1
      %s314 = smul.addr %s313, 6
      %s315 = smul.addr %s314, 8
      %s316 = scalar_lea.vmem %s4, %s315
      // Predicated region
      $region37: #{clip_visual_forward.14} parent=35 // pred_check
        %p317 = pneg %p122
      $region38: #{clip_visual_forward.14} parent=35 // pred_check_branch
        %319 = sbr.rel (%p317) target = $region40
      $region39: #{clip_visual_forward.14} parent=35 // pred_region
        _
      $region40: #{clip_visual_forward.14} parent=35 // pred_fallthru
        _
    $region36: #{clip_visual_forward.14} parent=5 // pred_fallthru
      _
    %p320 = scmp.le.s32.totalorder 2, %s10
    // Predicated region
    $region41: #{clip_visual_forward.14} parent=5 // pred_check
      %p321 = pneg %p320
    $region42: #{clip_visual_forward.14} parent=5 // pred_check_branch
      %323 = sbr.rel (%p321) target = $region44
    $region43: #{clip_visual_forward.14} parent=5 // pred_region
      %s324 = ssub.s32 %s10, 2
      // Predicated region
      $region45: #{clip_visual_forward.14} parent=43 // pred_check
        %p325 = pneg %p128
      $region46: #{clip_visual_forward.14} parent=43 // pred_check_branch
        %327 = sbr.rel (%p325) target = $region48
      $region47: #{clip_visual_forward.14} parent=43 // pred_region
        %p328 = scmp.lt.s32.totalorder %s16, 1
        %s329 = scalar_select %p328, %s16, 1
        %s330 = smul.addr %s329, 6
        %s331 = smul.addr %s330, 8
        %s332 = scalar_lea.vmem %s4, %s331
      $region48: #{clip_visual_forward.14} parent=43 // pred_fallthru
        _
    $region44: #{clip_visual_forward.14} parent=5 // pred_fallthru
      _
  $region6: #{clip_visual_forward.14} parent=0 // loop_footer
    %s14 = sadd.s32 1, %s10
  $region7: #{clip_visual_forward.14} parent=0 // loop_footer_branch
    %9 = sbr.rel target = $region3
  $region8: #{clip_visual_forward.14} parent=0 // loop_exit
    _

// kernel: clip_visual_forward.13
$region0: #{clip_visual_forward.13}
  #allocation0 [shape = 'u32[]', space=smem, size = 0x4, offset = 0x4, fixed_abs, tag = 'smem constant byte address 0x4 - core index']
  #allocation1 [shape = 'u32[144,128]{1,0:T(1,128)}', space=vmem, size = 0x12000, scoped, tag = 'internal scratch']
  %s0 = inlined_call_operand.vmem [shape: f32[32,256], index: 0, kind: input, shape index: {}]
  %s1 = inlined_call_operand.vmem [shape: bf16[256,256], index: 1, kind: input, shape index: {}]
  %s2 = inlined_call_operand.vmem [shape: f32[32,256], index: 2, kind: output, shape index: {}]
  %s3 = sld [smem:[#allocation0]]
  $region18: #{clip_visual_forward.13} parent=0
    _
  %s5 = ssub.s32 1, %s3
  %s6 = scalar_select 0, %s5, %s3
  // Predicated region
  $region2: #{clip_visual_forward.13} parent=0 // pred_check
    _
  $region3: #{clip_visual_forward.13} parent=0 // pred_check_branch
    %8 = sbr.rel (0) target = $region5
  $region4: #{clip_visual_forward.13} parent=0 // pred_region
    _
  $region5: #{clip_visual_forward.13} parent=0 // pred_fallthru
    _
  // Predicated region
  $region6: #{clip_visual_forward.13} parent=0 // pred_check
    _
  $region7: #{clip_visual_forward.13} parent=0 // pred_check_branch
    %10 = sbr.rel (0) target = $region9
  $region8: #{clip_visual_forward.13} parent=0 // pred_region
    _
  $region9: #{clip_visual_forward.13} parent=0 // pred_fallthru
    _
  %v11 = vld [vmem:[%s0] sm:$0xff]
  %v12 = vld [vmem:[%s0 + $0x8] sm:$0xff]
  %v13 = vld [vmem:[%s0 + $0x10] sm:$0xff]
  %v14 = vld [vmem:[%s0 + $0x18] sm:$0xff]
  %v15 = vld [vmem:[%s0 + $0x20] sm:$0xff]
  %v16 = vld [vmem:[%s0 + $0x28] sm:$0xff]
  %v17 = vld [vmem:[%s0 + $0x30] sm:$0xff]
  %v18 = vld [vmem:[%s0 + $0x38] sm:$0xff]
  %v19 = vpack.c.bf16 %v13, %v11
  %v20 = vpack.c.bf16 %v14, %v12
  %v21 = vpack.c.bf16 %v17, %v15
  %v22 = vpack.c.bf16 %v18, %v16
  %v23 = vld [vmem:[%s1] sm:$0xff]
  %v24 = vld [vmem:[%s1 + $0x8] sm:$0xff]
  %v25 = vld [vmem:[%s1 + $0x10] sm:$0xff]
  %v26 = vld [vmem:[%s1 + $0x18] sm:$0xff]
  %v27 = vld [vmem:[%s1 + $0x20] sm:$0xff]
  %v28 = vld [vmem:[%s1 + $0x28] sm:$0xff]
  %v29 = vld [vmem:[%s1 + $0x30] sm:$0xff]
  %v30 = vld [vmem:[%s1 + $0x38] sm:$0xff]
  %v31 = vld [vmem:[%s1 + $0x40] sm:$0xff]
  %v32 = vld [vmem:[%s1 + $0x48] sm:$0xff]
  %v33 = vld [vmem:[%s1 + $0x50] sm:$0xff]
  %v34 = vld [vmem:[%s1 + $0x58] sm:$0xff]
  %v35 = vld [vmem:[%s1 + $0x60] sm:$0xff]
  %v36 = vld [vmem:[%s1 + $0x68] sm:$0xff]
  %v37 = vld [vmem:[%s1 + $0x70] sm:$0xff]
  %v38 = vld [vmem:[%s1 + $0x78] sm:$0xff]
  %v39 = vld [vmem:[%s1 + $0x80] sm:$0xff]
  %v40 = vld [vmem:[%s1 + $0x88] sm:$0xff]
  %v41 = vld [vmem:[%s1 + $0x90] sm:$0xff]
  %v42 = vld [vmem:[%s1 + $0x98] sm:$0xff]
  %v43 = vld [vmem:[%s1 + $0xa0] sm:$0xff]
  %v44 = vld [vmem:[%s1 + $0xa8] sm:$0xff]
  %v45 = vld [vmem:[%s1 + $0xb0] sm:$0xff]
  %v46 = vld [vmem:[%s1 + $0xb8] sm:$0xff]
  %v47 = vld [vmem:[%s1 + $0xc0] sm:$0xff]
  %v48 = vld [vmem:[%s1 + $0xc8] sm:$0xff]
  %v49 = vld [vmem:[%s1 + $0xd0] sm:$0xff]
  %v50 = vld [vmem:[%s1 + $0xd8] sm:$0xff]
  %v51 = vld [vmem:[%s1 + $0xe0] sm:$0xff]
  %v52 = vld [vmem:[%s1 + $0xe8] sm:$0xff]
  %v53 = vld [vmem:[%s1 + $0xf0] sm:$0xff]
  %v54 = vld [vmem:[%s1 + $0xf8] sm:$0xff]
  %v87 = vunpack.c.l.b16 %v23
  %v88 = vunpack.c.h.b16 %v23
  %v89 = vunpack.c.l.b16 %v24
  %v90 = vunpack.c.h.b16 %v24
  %v91 = vunpack.c.l.b16 %v25
  %v92 = vunpack.c.h.b16 %v25
  %v93 = vunpack.c.l.b16 %v26
  %v94 = vunpack.c.h.b16 %v26
  %v95 = vunpack.c.l.b16 %v27
  %v96 = vunpack.c.h.b16 %v27
  %v97 = vunpack.c.l.b16 %v28
  %v98 = vunpack.c.h.b16 %v28
  %v99 = vunpack.c.l.b16 %v29
  %v100 = vunpack.c.h.b16 %v29
  %v101 = vunpack.c.l.b16 %v30
  %v102 = vunpack.c.h.b16 %v30
  %v103 = vunpack.c.l.b16 %v31
  %v104 = vunpack.c.h.b16 %v31
  %v105 = vunpack.c.l.b16 %v32
  %v106 = vunpack.c.h.b16 %v32
  %v107 = vunpack.c.l.b16 %v33
  %v108 = vunpack.c.h.b16 %v33
  %v109 = vunpack.c.l.b16 %v34
  %v110 = vunpack.c.h.b16 %v34
  %v111 = vunpack.c.l.b16 %v35
  %v112 = vunpack.c.h.b16 %v35
  %v113 = vunpack.c.l.b16 %v36
  %v114 = vunpack.c.h.b16 %v36
  %v115 = vunpack.c.l.b16 %v37
  %v116 = vunpack.c.h.b16 %v37
  %v117 = vunpack.c.l.b16 %v38
  %v118 = vunpack.c.h.b16 %v38
  %v119 = vunpack.c.l.b16 %v39
  %v120 = vunpack.c.h.b16 %v39
  %v121 = vunpack.c.l.b16 %v40
  %v122 = vunpack.c.h.b16 %v40
  %v123 = vunpack.c.l.b16 %v41
  %v124 = vunpack.c.h.b16 %v41
  %v125 = vunpack.c.l.b16 %v42
  %v126 = vunpack.c.h.b16 %v42
  %v127 = vunpack.c.l.b16 %v43
  %v128 = vunpack.c.h.b16 %v43
  %v129 = vunpack.c.l.b16 %v44
  %v130 = vunpack.c.h.b16 %v44
  %v131 = vunpack.c.l.b16 %v45
  %v132 = vunpack.c.h.b16 %v45
  %v133 = vunpack.c.l.b16 %v46
  %v134 = vunpack.c.h.b16 %v46
  %v135 = vunpack.c.l.b16 %v47
  %v136 = vunpack.c.h.b16 %v47
  %v137 = vunpack.c.l.b16 %v48
  %v138 = vunpack.c.h.b16 %v48
  %v139 = vunpack.c.l.b16 %v49
  %v140 = vunpack.c.h.b16 %v49
  %v141 = vunpack.c.l.b16 %v50
  %v142 = vunpack.c.h.b16 %v50
  %v143 = vunpack.c.l.b16 %v51
  %v144 = vunpack.c.h.b16 %v51
  %v145 = vunpack.c.l.b16 %v52
  %v146 = vunpack.c.h.b16 %v52
  %v147 = vunpack.c.l.b16 %v53
  %v148 = vunpack.c.h.b16 %v53
  %v149 = vunpack.c.l.b16 %v54
  %v150 = vunpack.c.h.b16 %v54
  %v151 = vpack.c.b16 %v89, %v87
  %v152 = vpack.c.b16 %v90, %v88
  %v153 = vpack.c.b16 %v93, %v91
  %v154 = vpack.c.b16 %v94, %v92
  %v155 = vpack.c.b16 %v97, %v95
  %v156 = vpack.c.b16 %v98, %v96
  %v157 = vpack.c.b16 %v101, %v99
  %v158 = vpack.c.b16 %v102, %v100
  %v159 = vpack.c.b16 %v105, %v103
  %v160 = vpack.c.b16 %v106, %v104
  %v161 = vpack.c.b16 %v109, %v107
  %v162 = vpack.c.b16 %v110, %v108
  %v163 = vpack.c.b16 %v113, %v111
  %v164 = vpack.c.b16 %v114, %v112
  %v165 = vpack.c.b16 %v117, %v115
  %v166 = vpack.c.b16 %v118, %v116
  %v167 = vpack.c.b16 %v121, %v119
  %v168 = vpack.c.b16 %v122, %v120
  %v169 = vpack.c.b16 %v125, %v123
  %v170 = vpack.c.b16 %v126, %v124
  %v171 = vpack.c.b16 %v129, %v127
  %v172 = vpack.c.b16 %v130, %v128
  %v173 = vpack.c.b16 %v133, %v131
  %v174 = vpack.c.b16 %v134, %v132
  %v175 = vpack.c.b16 %v137, %v135
  %v176 = vpack.c.b16 %v138, %v136
  %v177 = vpack.c.b16 %v141, %v139
  %v178 = vpack.c.b16 %v142, %v140
  %v179 = vpack.c.b16 %v145, %v143
  %v180 = vpack.c.b16 %v146, %v144
  %v181 = vpack.c.b16 %v149, %v147
  %v182 = vpack.c.b16 %v150, %v148
  %215 = vmatprep.subr.bf16.mxu0 %v152
  %216 = vmatpush1.bf16.msra.mxu0 %v151
  %217 = vmatprep.subr.bf16.mxu0 %v154
  %218 = vmatpush1.bf16.msra.mxu0 %v153
  %219 = vmatprep.subr.bf16.mxu0 %v156
  %220 = vmatpush1.bf16.msra.mxu0 %v155
  %221 = vmatprep.subr.bf16.mxu0 %v158
  %222 = vmatpush1.bf16.msra.mxu0 %v157
  %223 = vmatprep.subr.bf16.mxu0 %v160
  %224 = vmatpush1.bf16.msra.mxu0 %v159
  %225 = vmatprep.subr.bf16.mxu0 %v162
  %226 = vmatpush1.bf16.msra.mxu0 %v161
  %227 = vmatprep.subr.bf16.mxu0 %v164
  %228 = vmatpush1.bf16.msra.mxu0 %v163
  %229 = vmatprep.subr.bf16.mxu0 %v166
  %230 = vmatpush1.bf16.msra.mxu0 %v165
  %231 = vmatprep.subr.bf16.mxu0 %v168
  %232 = vmatpush1.bf16.msra.mxu0 %v167
  %233 = vmatprep.subr.bf16.mxu0 %v170
  %234 = vmatpush1.bf16.msra.mxu0 %v169
  %235 = vmatprep.subr.bf16.mxu0 %v172
  %236 = vmatpush1.bf16.msra.mxu0 %v171
  %237 = vmatprep.subr.bf16.mxu0 %v174
  %238 = vmatpush1.bf16.msra.mxu0 %v173
  %239 = vmatprep.subr.bf16.mxu0 %v176
  %240 = vmatpush1.bf16.msra.mxu0 %v175
  %241 = vmatprep.subr.bf16.mxu0 %v178
  %242 = vmatpush1.bf16.msra.mxu0 %v177
  %243 = vmatprep.subr.bf16.mxu0 %v180
  %244 = vmatpush1.bf16.msra.mxu0 %v179
  %245 = vmatprep.subr.bf16.mxu0 %v182
  %246 = vmatpush1.bf16.msra.mxu0 %v181
  %247 = vmatprep.mubr.bf16.mxu0 %v20
  %248 = vmatmul.mubr.bf16.gmra.mrb[0].mxu0 %v19
  %v249 = vpop.f32.mrb[0].mxu0
  %v250 = vadd.f32 0.0, %v249
  %v251 = vpop.f32.mrb[0].mxu0
  %v252 = vadd.f32 0.0, %v251
  %v253 = vpop.f32.mrb[0].mxu0
  %v254 = vadd.f32 0.0, %v253
  %v255 = vpop.f32.mrb[0].mxu0
  %v256 = vadd.f32 0.0, %v255
  %257 = vmatprep.mubr.bf16.mxu0 %v22
  %258 = vmatmul.mubr.bf16.gmra.mrb[0].mxu0 %v21
  %v259 = vpop.f32.mrb[0].mxu0
  %v260 = vadd.f32 0.0, %v259
  %v261 = vpop.f32.mrb[0].mxu0
  %v262 = vadd.f32 0.0, %v261
  %v263 = vpop.f32.mrb[0].mxu0
  %v264 = vadd.f32 0.0, %v263
  %v265 = vpop.f32.mrb[0].mxu0
  %v266 = vadd.f32 0.0, %v265
  %267 = vdwg.mxu0
  %268 = vst [vmem:[%s2] sm:$0xff] %v250
  %269 = vst [vmem:[%s2 + $0x8] sm:$0xff] %v252
  %270 = vst [vmem:[%s2 + $0x10] sm:$0xff] %v254
  %271 = vst [vmem:[%s2 + $0x18] sm:$0xff] %v256
  %272 = vst [vmem:[%s2 + $0x20] sm:$0xff] %v260
  %273 = vst [vmem:[%s2 + $0x28] sm:$0xff] %v262
  %274 = vst [vmem:[%s2 + $0x30] sm:$0xff] %v264
  %275 = vst [vmem:[%s2 + $0x38] sm:$0xff] %v266
  // Predicated region
  $region10: #{clip_visual_forward.13} parent=0 // pred_check
    _
  $region11: #{clip_visual_forward.13} parent=0 // pred_check_branch
    %277 = sbr.rel (0) target = $region13
  $region12: #{clip_visual_forward.13} parent=0 // pred_region
    _
  $region13: #{clip_visual_forward.13} parent=0 // pred_fallthru
    _
  // Predicated region
  $region14: #{clip_visual_forward.13} parent=0 // pred_check
    _
  $region15: #{clip_visual_forward.13} parent=0 // pred_check_branch
    %279 = sbr.rel (0) target = $region17
  $region16: #{clip_visual_forward.13} parent=0 // pred_region
    _
  $region17: #{clip_visual_forward.13} parent=0 // pred_fallthru
    _

// kernel: clip_visual_forward.15
$region0: #{clip_visual_forward.15}
  #allocation0 [shape = 'u32[]', space=smem, size = 0x4, offset = 0x4, fixed_abs, tag = 'smem constant byte address 0x4 - core index']
  #allocation1 [shape = 'u32[144,128]{1,0:T(1,128)}', space=vmem, size = 0x12000, scoped, tag = 'internal scratch']
  %s0 = inlined_call_operand.vmem [shape: f32[34,256], index: 0, kind: input, shape index: {}]
  %s1 = inlined_call_operand.vmem [shape: bf16[256,768], index: 1, kind: input, shape index: {}]
  %s2 = inlined_call_operand.vmem [shape: f32[1,768], index: 2, kind: input, shape index: {}]
  %s3 = inlined_call_operand.vmem [shape: f32[1,256], index: 3, kind: input, shape index: {}]
  %s4 = inlined_call_operand.vmem [shape: f32[1,256], index: 4, kind: input, shape index: {}]
  %s5 = inlined_call_operand.vmem [shape: bf16[34,768], index: 5, kind: output, shape index: {}]
  %s6 = sld [smem:[#allocation0]]
  $region125: #{clip_visual_forward.15} parent=0
    _
  %s8 = ssub.s32 1, %s6
  %s9 = scalar_select 0, %s8, %s6
  $region1: #{clip_visual_forward.15} parent=0
    #allocation2 [shape = 'u8[262144]{0}', space=vmem, size = 0x40000, scoped, tag = 'input window, operand 1']
    #allocation3 [shape = 'u8[40960]{0}', space=vmem, size = 0xa000, scoped, tag = 'output window, operand 0']
    loop: start=0, step=1, limit=5
    $region2: #{clip_visual_forward.15} parent=1 // loop_pre_header
      _
    $region3: #{clip_visual_forward.15} parent=1 // loop_header
      %s11 = sphi 0, %s15
      %p12 = scmp.ge.s32.totalorder %s11, 5
      %s18 = sphi 0, %s30
      %s19 = sphi 0, %s26
      %s20 = sphi 0, %s18
      %s21 = sphi 0, %s19
      %s22 = sphi 0, %s20
      %s23 = sphi 0, %s21
      %s33 = sphi 0, %s35
      %s36 = sphi 0, %s33
      %s37 = sphi 0, %s36
      %s53 = sphi 0, %s37
      %s59 = sphi 0, %s61
      %s62 = sphi 0, %s59
      %s63 = sphi 0, %s62
      %s79 = sphi 0, %s63
      %s85 = sphi 0, %s87
      %s88 = sphi 0, %s85
      %s89 = sphi 0, %s88
      %s105 = sphi 0, %s89
      %s109 = sphi 0, %s109
      %s111 = sphi 0, %s109
      %s112 = sphi 0, %s111
      %s126 = sphi 0, %s112
      %s130 = sphi 0, %s130
      %s132 = sphi 0, %s130
      %s133 = sphi 0, %s132
      %s147 = sphi 0, %s133
      %s155 = sphi 0, %s157
      %s158 = sphi 0, %s155
      %s159 = sphi 0, %s158
      %s175 = sphi 0, %s159
    $region4: #{clip_visual_forward.15} parent=1 // loop_header_branch
      %14 = sbr.rel (%p12) target = $region8
    $region5: #{clip_visual_forward.15} parent=1 // loop_body
      %s16 = ssub.s32 %s11, 1
      %s17 = ssub.s32 %s11, 2
      %s24 = sadd.s32 1, %s19
      %p25 = scmp.ge.s32.totalorder %s24, 3
      %s26 = scalar_select %p25, 0, %s24
      %s27 = sadd.s32 1, %s18
      %s28 = scalar_select %p25, %s27, %s18
      %p29 = scmp.ge.s32.totalorder %s28, 1
      %s30 = scalar_select %p29, 0, %s28
      %s31 = ssub.s32 %s18, %s30
      %p32 = scmp.eq.s32.totalorder %s31, 0
      %s34 = sadd.s32 %s33, 1
      %s35 = scalar_select %p32, %s33, %s34
      %p38 = pneg %p32
      %p39 = scmp.eq.s32.totalorder %s11, 2
      %p40 = por %p38, %p39
      %p41 = scmp.ne.s32.totalorder %s33, %s36
      %p42 = scmp.eq.s32.totalorder %s11, 0
      %p43 = por %p41, %p42
      %p44 = scmp.ne.s32.totalorder %s33, %s36
      %p45 = scmp.eq.s32.totalorder %s16, 2
      %p46 = por %p44, %p45
      %p47 = scmp.ne.s32.totalorder %s36, %s37
      %p48 = scmp.eq.s32.totalorder %s16, 0
      %p49 = por %p47, %p48
      %p50 = scmp.ne.s32.totalorder %s36, %s37
      %p51 = scmp.eq.s32.totalorder %s17, 2
      %p52 = por %p50, %p51
      %p54 = scmp.ne.s32.totalorder %s37, %s53
      %p55 = scmp.eq.s32.totalorder %s17, 0
      %p56 = por %p54, %p55
      %s57 = ssub.s32 %s19, %s26
      %p58 = scmp.eq.s32.totalorder %s57, 0
      %s60 = sadd.s32 %s59, 1
      %s61 = scalar_select %p58, %s59, %s60
      %p64 = pneg %p58
      %p65 = scmp.eq.s32.totalorder %s11, 2
      %p66 = por %p64, %p65
      %p67 = scmp.ne.s32.totalorder %s59, %s62
      %p68 = scmp.eq.s32.totalorder %s11, 0
      %p69 = por %p67, %p68
      %p70 = scmp.ne.s32.totalorder %s59, %s62
      %p71 = scmp.eq.s32.totalorder %s16, 2
      %p72 = por %p70, %p71
      %p73 = scmp.ne.s32.totalorder %s62, %s63
      %p74 = scmp.eq.s32.totalorder %s16, 0
      %p75 = por %p73, %p74
      %p76 = scmp.ne.s32.totalorder %s62, %s63
      %p77 = scmp.eq.s32.totalorder %s17, 2
      %p78 = por %p76, %p77
      %p80 = scmp.ne.s32.totalorder %s63, %s79
      %p81 = scmp.eq.s32.totalorder %s17, 0
      %p82 = por %p80, %p81
      %s83 = ssub.s32 %s19, %s26
      %p84 = scmp.eq.s32.totalorder %s83, 0
      %s86 = sadd.s32 %s85, 1
      %s87 = scalar_select %p84, %s85, %s86
      %p90 = pneg %p84
      %p91 = scmp.eq.s32.totalorder %s11, 2
      %p92 = por %p90, %p91
      %p93 = scmp.ne.s32.totalorder %s85, %s88
      %p94 = scmp.eq.s32.totalorder %s11, 0
      %p95 = por %p93, %p94
      %p96 = scmp.ne.s32.totalorder %s85, %s88
      %p97 = scmp.eq.s32.totalorder %s16, 2
      %p98 = por %p96, %p97
      %p99 = scmp.ne.s32.totalorder %s88, %s89
      %p100 = scmp.eq.s32.totalorder %s16, 0
      %p101 = por %p99, %p100
      %p102 = scmp.ne.s32.totalorder %s88, %s89
      %p103 = scmp.eq.s32.totalorder %s17, 2
      %p104 = por %p102, %p103
      %p106 = scmp.ne.s32.totalorder %s89, %s105
      %p107 = scmp.eq.s32.totalorder %s17, 0
      %p108 = por %p106, %p107
      %s110 = sadd.s32 %s109, 1
      %p113 = scmp.eq.s32.totalorder %s11, 2
      %p114 = scmp.ne.s32.totalorder %s109, %s111
      %p115 = scmp.eq.s32.totalorder %s11, 0
      %p116 = por %p114, %p115
      %p117 = scmp.ne.s32.totalorder %s109, %s111
      %p118 = scmp.eq.s32.totalorder %s16, 2
      %p119 = por %p117, %p118
      %p120 = scmp.ne.s32.totalorder %s111, %s112
      %p121 = scmp.eq.s32.totalorder %s16, 0
      %p122 = por %p120, %p121
      %p123 = scmp.ne.s32.totalorder %s111, %s112
      %p124 = scmp.eq.s32.totalorder %s17, 2
      %p125 = por %p123, %p124
      %p127 = scmp.ne.s32.totalorder %s112, %s126
      %p128 = scmp.eq.s32.totalorder %s17, 0
      %p129 = por %p127, %p128
      %s131 = sadd.s32 %s130, 1
      %p134 = scmp.eq.s32.totalorder %s11, 2
      %p135 = scmp.ne.s32.totalorder %s130, %s132
      %p136 = scmp.eq.s32.totalorder %s11, 0
      %p137 = por %p135, %p136
      %p138 = scmp.ne.s32.totalorder %s130, %s132
      %p139 = scmp.eq.s32.totalorder %s16, 2
      %p140 = por %p138, %p139
      %p141 = scmp.ne.s32.totalorder %s132, %s133
      %p142 = scmp.eq.s32.totalorder %s16, 0
      %p143 = por %p141, %p142
      %p144 = scmp.ne.s32.totalorder %s132, %s133
      %p145 = scmp.eq.s32.totalorder %s17, 2
      %p146 = por %p144, %p145
      %p148 = scmp.ne.s32.totalorder %s133, %s147
      %p149 = scmp.eq.s32.totalorder %s17, 0
      %p150 = por %p148, %p149
      %s151 = ssub.s32 %s18, %s30
      %s152 = ssub.s32 %s19, %s26
      %s153 = sor.u32 %s151, %s152
      %p154 = scmp.eq.s32.totalorder %s153, 0
      %s156 = sadd.s32 %s155, 1
      %s157 = scalar_select %p154, %s155, %s156
      %p160 = pneg %p154
      %p161 = scmp.eq.s32.totalorder %s11, 2
      %p162 = por %p160, %p161
      %p163 = scmp.ne.s32.totalorder %s155, %s158
      %p164 = scmp.eq.s32.totalorder %s11, 0
      %p165 = por %p163, %p164
      %p166 = scmp.ne.s32.totalorder %s155, %s158
      %p167 = scmp.eq.s32.totalorder %s16, 2
      %p168 = por %p166, %p167
      %p169 = scmp.ne.s32.totalorder %s158, %s159
      %p170 = scmp.eq.s32.totalorder %s16, 0
      %p171 = por %p169, %p170
      %p172 = scmp.ne.s32.totalorder %s158, %s159
      %p173 = scmp.eq.s32.totalorder %s17, 2
      %p174 = por %p172, %p173
      %p176 = scmp.ne.s32.totalorder %s159, %s175
      %p177 = scmp.eq.s32.totalorder %s17, 0
      %p178 = por %p176, %p177
      %p179 = scmp.le.s32.totalorder 1, %s11
      %p180 = scmp.lt.s32.totalorder %s11, 4
      %p181 = pnand %p179, %p180
      %p182 = pneg %p181
      // Predicated region
      $region9: #{clip_visual_forward.15} parent=5 // pred_check
        _
      $region10: #{clip_visual_forward.15} parent=5 // pred_check_branch
        %184 = sbr.rel (%p181) target = $region12
      $region11: #{clip_visual_forward.15} parent=5 // pred_region
        %s185 = ssub.s32 %s11, 1
        // Predicated region
        $region13: #{clip_visual_forward.15} parent=11 // pred_check
          %p186 = pneg %p49
        $region14: #{clip_visual_forward.15} parent=11 // pred_check_branch
          %188 = sbr.rel (%p186) target = $region16
        $region15: #{clip_visual_forward.15} parent=11 // pred_region
          %s189 = smul.u32 5, %s20
          %p190 = scmp.lt.s32.totalorder %s189, 4
          %s191 = scalar_select %p190, %s189, 4
          %s192 = smul.addr %s191, 2
          %s193 = smul.addr %s192, 8
          %s194 = scalar_lea.vmem %s0, %s193
          %s195 = smul.u32 5, %s20
        $region16: #{clip_visual_forward.15} parent=11 // pred_fallthru
          _
        // Predicated region
        $region17: #{clip_visual_forward.15} parent=11 // pred_check
          %p196 = pneg %p122
        $region18: #{clip_visual_forward.15} parent=11 // pred_check_branch
          %198 = sbr.rel (%p196) target = $region20
        $region19: #{clip_visual_forward.15} parent=11 // pred_region
          _
        $region20: #{clip_visual_forward.15} parent=11 // pred_fallthru
          _
        // Predicated region
        $region21: #{clip_visual_forward.15} parent=11 // pred_check
          %p199 = pneg %p143
        $region22: #{clip_visual_forward.15} parent=11 // pred_check_branch
          %201 = sbr.rel (%p199) target = $region24
        $region23: #{clip_visual_forward.15} parent=11 // pred_region
          _
        $region24: #{clip_visual_forward.15} parent=11 // pred_fallthru
          _
      $region12: #{clip_visual_forward.15} parent=5 // pred_fallthru
        _
      %p202 = scmp.lt.s32.totalorder %s11, 3
      // Predicated region
      $region25: #{clip_visual_forward.15} parent=5 // pred_check
        %p203 = pneg %p202
      $region26: #{clip_visual_forward.15} parent=5 // pred_check_branch
        %205 = sbr.rel (%p203) target = $region28
      $region27: #{clip_visual_forward.15} parent=5 // pred_region
        // Predicated region
        $region29: #{clip_visual_forward.15} parent=27 // pred_check
          %p206 = pneg %p69
        $region30: #{clip_visual_forward.15} parent=27 // pred_check_branch
          %208 = sbr.rel (%p206) target = $region32
        $region31: #{clip_visual_forward.15} parent=27 // pred_region
          %s209 = sand.u32 %s59, 1
          %s210 = sand.u32 %s59, 1
          %s211 = smul.addr %s210, 256
          %s212 = scalar_lea.vmem [#allocation2], %s211
          %s213 = smul.u32 2, %s19
          %s214 = smul.addr %s213, 4
          %s215 = scalar_lea.vmem %s1, %s214
          // Predicated region
          $region33: #{clip_visual_forward.15} parent=31 // pred_check
            _
          $region34: #{clip_visual_forward.15} parent=31 // pred_check_branch
            %217 = sbr.rel (0) target = $region36
          $region35: #{clip_visual_forward.15} parent=31 // pred_region
            // Predicated region
            $region37: #{clip_visual_forward.15} parent=35 // pred_check
              _
            $region38: #{clip_visual_forward.15} parent=35 // pred_check_branch
              %219 = sbr.rel (0) target = $region40
            $region39: #{clip_visual_forward.15} parent=35 // pred_region
              // Predicated region
              $region52: #{clip_visual_forward.15} parent=39 // pred_check
                _
              $region53: #{clip_visual_forward.15} parent=39 // pred_check_branch
                %296 = sbr.rel (0) target = $region55
              $region54: #{clip_visual_forward.15} parent=39 // pred_region
                loop: start=0, step=1, limit=1
                $region56: #{clip_visual_forward.15} parent=54 // loop_pre_header
                  _
                $region57: #{clip_visual_forward.15} parent=54 // loop_header
                  %s298 = sphi 0, %s302
                  %p299 = scmp.ge.s32.totalorder %s298, 1
                  %s303 = sphi %s215, %s215
                  %s304 = sphi %s212, %s212
                $region58: #{clip_visual_forward.15} parent=54 // loop_header_branch
                  %301 = sbr.rel (%p299) target = $region62
                $region59: #{clip_visual_forward.15} parent=54 // loop_body
                  %v305 = vld [vmem:[%s303] sm:$0xff]
                  %306 = vst [vmem:[%s304] sm:$0xff] %v305
                  %v307 = vld [vmem:[%s303 + $0x18] sm:$0xff]
                  %308 = vst [vmem:[%s304 + $0x8] sm:$0xff] %v307
                  %v309 = vld [vmem:[%s303 + $0x30] sm:$0xff]
                  %310 = vst [vmem:[%s304 + $0x10] sm:$0xff] %v309
                  %v311 = vld [vmem:[%s303 + $0x48] sm:$0xff]
                  %312 = vst [vmem:[%s304 + $0x18] sm:$0xff] %v311
                  %v313 = vld [vmem:[%s303 + $0x60] sm:$0xff]
                  %314 = vst [vmem:[%s304 + $0x20] sm:$0xff] %v313
                  %v315 = vld [vmem:[%s303 + $0x78] sm:$0xff]
                  %316 = vst [vmem:[%s304 + $0x28] sm:$0xff] %v315
                  %v317 = vld [vmem:[%s303 + $0x90] sm:$0xff]
                  %318 = vst [vmem:[%s304 + $0x30] sm:$0xff] %v317
                  %v319 = vld [vmem:[%s303 + $0xa8] sm:$0xff]
                  %320 = vst [vmem:[%s304 + $0x38] sm:$0xff] %v319
                  %v321 = vld [vmem:[%s303 + $0xc0] sm:$0xff]
                  %322 = vst [vmem:[%s304 + $0x40] sm:$0xff] %v321
                  %v323 = vld [vmem:[%s303 + $0xd8] sm:$0xff]
                  %324 = vst [vmem:[%s304 + $0x48] sm:$0xff] %v323
                  %v325 = vld [vmem:[%s303 + $0xf0] sm:$0xff]
                  %326 = vst [vmem:[%s304 + $0x50] sm:$0xff] %v325
                  %v327 = vld [vmem:[%s303 + $0x108] sm:$0xff]
                  %328 = vst [vmem:[%s304 + $0x58] sm:$0xff] %v327
                  %v329 = vld [vmem:[%s303 + $0x120] sm:$0xff]
                  %330 = vst [vmem:[%s304 + $0x60] sm:$0xff] %v329
                  %v331 = vld [vmem:[%s303 + $0x138] sm:$0xff]
                  %332 = vst [vmem:[%s304 + $0x68] sm:$0xff] %v331
                  %v333 = vld [vmem:[%s303 + $0x150] sm:$0xff]
                  %334 = vst [vmem:[%s304 + $0x70] sm:$0xff] %v333
                  %v335 = vld [vmem:[%s303 + $0x168] sm:$0xff]
                  %336 = vst [vmem:[%s304 + $0x78] sm:$0xff] %v335
                  %v337 = vld [vmem:[%s303 + $0x180] sm:$0xff]
                  %338 = vst [vmem:[%s304 + $0x80] sm:$0xff] %v337
                  %v339 = vld [vmem:[%s303 + $0x198] sm:$0xff]
                  %340 = vst [vmem:[%s304 + $0x88] sm:$0xff] %v339
                  %v341 = vld [vmem:[%s303 + $0x1b0] sm:$0xff]
                  %342 = vst [vmem:[%s304 + $0x90] sm:$0xff] %v341
                  %v343 = vld [vmem:[%s303 + $0x1c8] sm:$0xff]
                  %344 = vst [vmem:[%s304 + $0x98] sm:$0xff] %v343
                  %v345 = vld [vmem:[%s303 + $0x1e0] sm:$0xff]
                  %346 = vst [vmem:[%s304 + $0xa0] sm:$0xff] %v345
                  %v347 = vld [vmem:[%s303 + $0x1f8] sm:$0xff]
                  %348 = vst [vmem:[%s304 + $0xa8] sm:$0xff] %v347
                  %v349 = vld [vmem:[%s303 + $0x210] sm:$0xff]
                  %350 = vst [vmem:[%s304 + $0xb0] sm:$0xff] %v349
                  %v351 = vld [vmem:[%s303 + $0x228] sm:$0xff]
                  %352 = vst [vmem:[%s304 + $0xb8] sm:$0xff] %v351
                  %v353 = vld [vmem:[%s303 + $0x240] sm:$0xff]
                  %354 = vst [vmem:[%s304 + $0xc0] sm:$0xff] %v353
                  %v355 = vld [vmem:[%s303 + $0x258] sm:$0xff]
                  %356 = vst [vmem:[%s304 + $0xc8] sm:$0xff] %v355
                  %v357 = vld [vmem:[%s303 + $0x270] sm:$0xff]
                  %358 = vst [vmem:[%s304 + $0xd0] sm:$0xff] %v357
                  %v359 = vld [vmem:[%s303 + $0x288] sm:$0xff]
                  %360 = vst [vmem:[%s304 + $0xd8] sm:$0xff] %v359
                  %v361 = vld [vmem:[%s303 + $0x2a0] sm:$0xff]
                  %362 = vst [vmem:[%s304 + $0xe0] sm:$0xff] %v361
                  %v363 = vld [vmem:[%s303 + $0x2b8] sm:$0xff]
                  %364 = vst [vmem:[%s304 + $0xe8] sm:$0xff] %v363
                  %v365 = vld [vmem:[%s303 + $0x2d0] sm:$0xff]
                  %366 = vst [vmem:[%s304 + $0xf0] sm:$0xff] %v365
                  %v367 = vld [vmem:[%s303 + $0x2e8] sm:$0xff]
                  %368 = vst [vmem:[%s304 + $0xf8] sm:$0xff] %v367
                $region60: #{clip_visual_forward.15} parent=54 // loop_footer
                  %s302 = sadd.s32 1, %s298
                $region61: #{clip_visual_forward.15} parent=54 // loop_footer_branch
                  %297 = sbr.rel target = $region57
                $region62: #{clip_visual_forward.15} parent=54 // loop_exit
                  _
              $region55: #{clip_visual_forward.15} parent=39 // pred_fallthru
                _
              // Predicated region
              $region63: #{clip_visual_forward.15} parent=39 // pred_check
                _
              $region64: #{clip_visual_forward.15} parent=39 // pred_check_branch
                %370 = sbr.rel target = $region66
              $region65: #{clip_visual_forward.15} parent=39 // pred_region
                _
              $region66: #{clip_visual_forward.15} parent=39 // pred_fallthru
                _
            $region40: #{clip_visual_forward.15} parent=35 // pred_fallthru
              _
            // Predicated region
            $region41: #{clip_visual_forward.15} parent=35 // pred_check
              _
            $region42: #{clip_visual_forward.15} parent=35 // pred_check_branch
              %221 = sbr.rel target = $region44
            $region43: #{clip_visual_forward.15} parent=35 // pred_region
              loop: start=0, step=1, limit=1
              $region45: #{clip_visual_forward.15} parent=43 // loop_pre_header
                _
              $region46: #{clip_visual_forward.15} parent=43 // loop_header
                %s224 = sphi 0, %s228
                %p225 = scmp.ge.s32.totalorder %s224, 1
                %s229 = sphi %s215, %s215
                %s230 = sphi %s212, %s212
              $region47: #{clip_visual_forward.15} parent=43 // loop_header_branch
                %227 = sbr.rel (%p225) target = $region51
              $region48: #{clip_visual_forward.15} parent=43 // loop_body
                %v231 = vld [vmem:[%s229] sm:$0xff]
                %232 = vst [vmem:[%s230] sm:$0xff] %v231
                %v233 = vld [vmem:[%s229 + $0x18] sm:$0xff]
                %234 = vst [vmem:[%s230 + $0x8] sm:$0xff] %v233
                %v235 = vld [vmem:[%s229 + $0x30] sm:$0xff]
                %236 = vst [vmem:[%s230 + $0x10] sm:$0xff] %v235
                %v237 = vld [vmem:[%s229 + $0x48] sm:$0xff]
                %238 = vst [vmem:[%s230 + $0x18] sm:$0xff] %v237
                %v239 = vld [vmem:[%s229 + $0x60] sm:$0xff]
                %240 = vst [vmem:[%s230 + $0x20] sm:$0xff] %v239
                %v241 = vld [vmem:[%s229 + $0x78] sm:$0xff]
                %242 = vst [vmem:[%s230 + $0x28] sm:$0xff] %v241
                %v243 = vld [vmem:[%s229 + $0x90] sm:$0xff]
                %244 = vst [vmem:[%s230 + $0x30] sm:$0xff] %v243
                %v245 = vld [vmem:[%s229 + $0xa8] sm:$0xff]
                %246 = vst [vmem:[%s230 + $0x38] sm:$0xff] %v245
                %v247 = vld [vmem:[%s229 + $0xc0] sm:$0xff]
                %248 = vst [vmem:[%s230 + $0x40] sm:$0xff] %v247
                %v249 = vld [vmem:[%s229 + $0xd8] sm:$0xff]
                %250 = vst [vmem:[%s230 + $0x48] sm:$0xff] %v249
                %v251 = vld [vmem:[%s229 + $0xf0] sm:$0xff]
                %252 = vst [vmem:[%s230 + $0x50] sm:$0xff] %v251
                %v253 = vld [vmem:[%s229 + $0x108] sm:$0xff]
                %254 = vst [vmem:[%s230 + $0x58] sm:$0xff] %v253
                %v255 = vld [vmem:[%s229 + $0x120] sm:$0xff]
                %256 = vst [vmem:[%s230 + $0x60] sm:$0xff] %v255
                %v257 = vld [vmem:[%s229 + $0x138] sm:$0xff]
                %258 = vst [vmem:[%s230 + $0x68] sm:$0xff] %v257
                %v259 = vld [vmem:[%s229 + $0x150] sm:$0xff]
                %260 = vst [vmem:[%s230 + $0x70] sm:$0xff] %v259
                %v261 = vld [vmem:[%s229 + $0x168] sm:$0xff]
                %262 = vst [vmem:[%s230 + $0x78] sm:$0xff] %v261
                %v263 = vld [vmem:[%s229 + $0x180] sm:$0xff]
                %264 = vst [vmem:[%s230 + $0x80] sm:$0xff] %v263
                %v265 = vld [vmem:[%s229 + $0x198] sm:$0xff]
                %266 = vst [vmem:[%s230 + $0x88] sm:$0xff] %v265
                %v267 = vld [vmem:[%s229 + $0x1b0] sm:$0xff]
                %268 = vst [vmem:[%s230 + $0x90] sm:$0xff] %v267
                %v269 = vld [vmem:[%s229 + $0x1c8] sm:$0xff]
                %270 = vst [vmem:[%s230 + $0x98] sm:$0xff] %v269
                %v271 = vld [vmem:[%s229 + $0x1e0] sm:$0xff]
                %272 = vst [vmem:[%s230 + $0xa0] sm:$0xff] %v271
                %v273 = vld [vmem:[%s229 + $0x1f8] sm:$0xff]
                %274 = vst [vmem:[%s230 + $0xa8] sm:$0xff] %v273
                %v275 = vld [vmem:[%s229 + $0x210] sm:$0xff]
                %276 = vst [vmem:[%s230 + $0xb0] sm:$0xff] %v275
                %v277 = vld [vmem:[%s229 + $0x228] sm:$0xff]
                %278 = vst [vmem:[%s230 + $0xb8] sm:$0xff] %v277
                %v279 = vld [vmem:[%s229 + $0x240] sm:$0xff]
                %280 = vst [vmem:[%s230 + $0xc0] sm:$0xff] %v279
                %v281 = vld [vmem:[%s229 + $0x258] sm:$0xff]
                %282 = vst [vmem:[%s230 + $0xc8] sm:$0xff] %v281
                %v283 = vld [vmem:[%s229 + $0x270] sm:$0xff]
                %284 = vst [vmem:[%s230 + $0xd0] sm:$0xff] %v283
                %v285 = vld [vmem:[%s229 + $0x288] sm:$0xff]
                %286 = vst [vmem:[%s230 + $0xd8] sm:$0xff] %v285
                %v287 = vld [vmem:[%s229 + $0x2a0] sm:$0xff]
                %288 = vst [vmem:[%s230 + $0xe0] sm:$0xff] %v287
                %v289 = vld [vmem:[%s229 + $0x2b8] sm:$0xff]
                %290 = vst [vmem:[%s230 + $0xe8] sm:$0xff] %v289
                %v291 = vld [vmem:[%s229 + $0x2d0] sm:$0xff]
                %292 = vst [vmem:[%s230 + $0xf0] sm:$0xff] %v291
                %v293 = vld [vmem:[%s229 + $0x2e8] sm:$0xff]
                %294 = vst [vmem:[%s230 + $0xf8] sm:$0xff] %v293
              $region49: #{clip_visual_forward.15} parent=43 // loop_footer
                %s228 = sadd.s32 1, %s224
              $region50: #{clip_visual_forward.15} parent=43 // loop_footer_branch
                %223 = sbr.rel target = $region46
              $region51: #{clip_visual_forward.15} parent=43 // loop_exit
                _
            $region44: #{clip_visual_forward.15} parent=35 // pred_fallthru
              _
          $region36: #{clip_visual_forward.15} parent=31 // pred_fallthru
            _
          %371 = vnop
        $region32: #{clip_visual_forward.15} parent=27 // pred_fallthru
          _
        // Predicated region
        $region67: #{clip_visual_forward.15} parent=27 // pred_check
          %p372 = pneg %p95
        $region68: #{clip_visual_forward.15} parent=27 // pred_check_branch
          %374 = sbr.rel (%p372) target = $region70
        $region69: #{clip_visual_forward.15} parent=27 // pred_region
          %s375 = smul.u32 2, %s19
          %p376 = scmp.lt.s32.totalorder %s375, 5
          %s377 = scalar_select %p376, %s375, 5
          %s378 = scalar_lea.vmem %s2, %s377
          %s379 = smul.u32 2, %s19
        $region70: #{clip_visual_forward.15} parent=27 // pred_fallthru
          _
      $region28: #{clip_visual_forward.15} parent=5 // pred_fallthru
        _
      %p380 = scmp.le.s32.totalorder 1, %s11
      %p381 = scmp.lt.s32.totalorder %s11, 4
      %p382 = pnand %p380, %p381
      %p383 = pneg %p382
      // Predicated region
      $region71: #{clip_visual_forward.15} parent=5 // pred_check
        _
      $region72: #{clip_visual_forward.15} parent=5 // pred_check_branch
        %385 = sbr.rel (%p382) target = $region74
      $region73: #{clip_visual_forward.15} parent=5 // pred_region
        %s386 = ssub.s32 %s11, 1
        %s387 = sand.u32 %s62, 1
        %s388 = sand.u32 %s62, 1
        %s389 = smul.addr %s388, 256
        %s390 = scalar_lea.vmem [#allocation2], %s389
        // Predicated region
        $region75: #{clip_visual_forward.15} parent=73 // pred_check
          %p391 = pneg %p75
        $region76: #{clip_visual_forward.15} parent=73 // pred_check_branch
          %393 = sbr.rel (%p391) target = $region78
        $region77: #{clip_visual_forward.15} parent=73 // pred_region
          _
        $region78: #{clip_visual_forward.15} parent=73 // pred_fallthru
          _
        %s394 = smul.u32 5, %s20
        %p395 = scmp.lt.s32.totalorder %s394, 4
        %s396 = scalar_select %p395, %s394, 4
        %s397 = smul.addr %s396, 2
        %s398 = smul.addr %s397, 8
        %s399 = scalar_lea.vmem %s0, %s398
        %p400 = pneg %p49
        %p401 = pneg %p46
        %s402 = sand.u32 %s62, 1
        %s403 = sand.u32 %s62, 1
        %s404 = smul.addr %s403, 256
        %s405 = scalar_lea.vmem [#allocation2], %s404
        %p406 = pneg %p75
        %p407 = pneg %p72
        %s408 = smul.u32 2, %s21
        %p409 = scmp.lt.s32.totalorder %s408, 5
        %s410 = scalar_select %p409, %s408, 5
        %s411 = scalar_lea.vmem %s2, %s410
        %p412 = pneg %p101
        %p413 = pneg %p98
        %p414 = pneg %p122
        %p415 = pneg %p119
        %p416 = pneg %p143
        %p417 = pneg %p140
        %p418 = pneg %p171
        %p419 = pneg %p168
        %s420 = sand.u32 %s158, 1
        %s421 = sand.u32 %s158, 1
        %s422 = smul.addr %s421, 40
        %s423 = scalar_lea.vmem [#allocation3], %s422
        %s424 = smul.u32 5, %s20
        %p425 = scmp.lt.s32.totalorder %s424, 4
        %s426 = scalar_select %p425, %s424, 4
        %s427 = smul.addr %s426, 2
        %s428 = smul.addr %s427, 8
        %s429 = scalar_lea.vmem %s0, %s428
        %s430 = smul.u32 5, %s20
        %s431 = smul.u32 2, %s21
        %s432 = smul.u32 2, %s21
        %p433 = scmp.lt.s32.totalorder %s432, 5
        %s434 = scalar_select %p433, %s432, 5
        %s435 = scalar_lea.vmem %s2, %s434
        %s436 = smul.u32 2, %s21
        %s437 = smul.u32 5, %s20
        %s438 = smul.u32 2, %s21
        %v439 = vld [vmem:[%s429] sm:$0xff]
        %v440 = vld [vmem:[%s429 + $0x8] sm:$0xff]
        %v441 = vld [vmem:[%s429 + $0x10] sm:$0xff]
        %v442 = vld [vmem:[%s429 + $0x18] sm:$0xff]
        %v443 = vld [vmem:[%s429 + $0x20] sm:$0xff]
        %v444 = vld [vmem:[%s429 + $0x28] sm:$0xff]
        %v445 = vld [vmem:[%s429 + $0x30] sm:$0xff]
        %v446 = vld [vmem:[%s429 + $0x38] sm:$0xff]
        %v447 = vld [vmem:[%s429 + $0x40] sm:$0x3]
        %v448 = vld [vmem:[%s429 + $0x48] sm:$0x3]
        %v449 = vadd.f32 %v439, %v440
        %450 = vadd.xlane.f32.xlu0 %v449
        %v451 = vpop.xlane.xlu0 %450
        %v452 = vadd.f32 %v441, %v442
        %453 = vadd.xlane.f32.xlu0 %v452
        %v454 = vpop.xlane.xlu0 %453
        %v455 = vadd.f32 %v443, %v444
        %456 = vadd.xlane.f32.xlu0 %v455
        %v457 = vpop.xlane.xlu0 %456
        %v458 = vadd.f32 %v445, %v446
        %459 = vadd.xlane.f32.xlu0 %v458
        %v460 = vpop.xlane.xlu0 %459
        %vm461 = vcmask 1041408
        %v462 = vsel %vm461, %v447, 0.0
        %v463 = vsel %vm461, %v448, 0.0
        %v464 = vadd.f32 %v462, %v463
        %465 = vadd.xlane.f32.xlu0 %v464
        %v466 = vpop.xlane.xlu0 %465
        %v467 = vrcp.pop 256.0
        %v468 = vmul.f32 %v451, %v467
        %v469 = vmul.f32 %v454, %v467
        %v470 = vmul.f32 %v457, %v467
        %v471 = vmul.f32 %v460, %v467
        %v472 = vmul.f32 %v466, %v467
        %v473 = vsub.f32 %v439, %v468
        %v474 = vsub.f32 %v440, %v468
        %v475 = vsub.f32 %v441, %v469
        %v476 = vsub.f32 %v442, %v469
        %v477 = vsub.f32 %v443, %v470
        %v478 = vsub.f32 %v444, %v470
        %v479 = vsub.f32 %v445, %v471
        %v480 = vsub.f32 %v446, %v471
        %v481 = vsub.f32 %v447, %v472
        %v482 = vsub.f32 %v448, %v472
        %v483 = vmul.f32 %v473, %v473
        %v484 = vmul.f32 %v474, %v474
        %v485 = vmul.f32 %v475, %v475
        %v486 = vmul.f32 %v476, %v476
        %v487 = vmul.f32 %v477, %v477
        %v488 = vmul.f32 %v478, %v478
        %v489 = vmul.f32 %v479, %v479
        %v490 = vmul.f32 %v480, %v480
        %v491 = vmul.f32 %v481, %v481
        %v492 = vmul.f32 %v482, %v482
        %v493 = vadd.f32 %v483, %v484
        %494 = vadd.xlane.f32.xlu0 %v493
        %v495 = vpop.xlane.xlu0 %494
        %v496 = vadd.f32 %v485, %v486
        %497 = vadd.xlane.f32.xlu0 %v496
        %v498 = vpop.xlane.xlu0 %497
        %v499 = vadd.f32 %v487, %v488
        %500 = vadd.xlane.f32.xlu0 %v499
        %v501 = vpop.xlane.xlu0 %500
        %v502 = vadd.f32 %v489, %v490
        %503 = vadd.xlane.f32.xlu0 %v502
        %v504 = vpop.xlane.xlu0 %503
        %v505 = vsel %vm461, %v491, 0.0
        %v506 = vsel %vm461, %v492, 0.0
        %v507 = vadd.f32 %v505, %v506
        %508 = vadd.xlane.f32.xlu0 %v507
        %v509 = vpop.xlane.xlu0 %508
        %v510 = vmul.f32 %v495, %v467
        %v511 = vmul.f32 %v498, %v467
        %v512 = vmul.f32 %v501, %v467
        %v513 = vmul.f32 %v504, %v467
        %v514 = vmul.f32 %v509, %v467
        %v515 = vadd.f32 %v510, 1e-05
        %v516 = vadd.f32 %v511, 1e-05
        %v517 = vadd.f32 %v512, 1e-05
        %v518 = vadd.f32 %v513, 1e-05
        %v519 = vadd.f32 %v514, 1e-05
        %v520 = vrsqrt.pop %v515
        %v521 = vrsqrt.pop %v516
        %v522 = vrsqrt.pop %v517
        %v523 = vrsqrt.pop %v518
        %v524 = vrsqrt.pop %v519
        %v525 = vmul.f32 %v473, %v520
        %v526 = vmul.f32 %v474, %v520
        %v527 = vmul.f32 %v475, %v521
        %v528 = vmul.f32 %v476, %v521
        %v529 = vmul.f32 %v477, %v522
        %v530 = vmul.f32 %v478, %v522
        %v531 = vmul.f32 %v479, %v523
        %v532 = vmul.f32 %v480, %v523
        %v533 = vmul.f32 %v481, %v524
        %v534 = vmul.f32 %v482, %v524
        %v535 = vld [vmem:[%s3] sm:$0x3]
        %v537 = vlaneseq
        %v538 = vshrl.u32 %v537, 7
        %v539 = vsub.s32 0, %v538
        %v540 = vrot.slane %v535, %v539
        %v541 = vlaneseq
        %v542 = vshrl.u32 %v541, 7
        %v543 = vsub.s32 1, %v542
        %v544 = vrot.slane %v535, %v543
        %v547 = vmul.f32 %v525, %v540
        %v548 = vmul.f32 %v526, %v544
        %v549 = vmul.f32 %v527, %v540
        %v550 = vmul.f32 %v528, %v544
        %v551 = vmul.f32 %v529, %v540
        %v552 = vmul.f32 %v530, %v544
        %v553 = vmul.f32 %v531, %v540
        %v554 = vmul.f32 %v532, %v544
        %v555 = vmul.f32 %v533, %v540
        %v556 = vmul.f32 %v534, %v544
        %v557 = vld [vmem:[%s4] sm:$0x3]
        %v559 = vlaneseq
        %v560 = vshrl.u32 %v559, 7
        %v561 = vsub.s32 0, %v560
        %v562 = vrot.slane %v557, %v561
        %v563 = vlaneseq
        %v564 = vshrl.u32 %v563, 7
        %v565 = vsub.s32 1, %v564
        %v566 = vrot.slane %v557, %v565
        %v569 = vadd.f32 %v547, %v562
        %v570 = vadd.f32 %v548, %v566
        %v571 = vadd.f32 %v549, %v562
        %v572 = vadd.f32 %v550, %v566
        %v573 = vadd.f32 %v551, %v562
        %v574 = vadd.f32 %v552, %v566
        %v575 = vadd.f32 %v553, %v562
        %v576 = vadd.f32 %v554, %v566
        %v577 = vadd.f32 %v555, %v562
        %v578 = vadd.f32 %v556, %v566
        %v579 = vpack.c.bf16 %v571, %v569
        %v580 = vpack.c.bf16 %v572, %v570
        %v581 = vpack.c.bf16 %v575, %v573
        %v582 = vpack.c.bf16 %v576, %v574
        %v583 = vpack.c.bf16 %v577, %v577
        %v584 = vpack.c.bf16 %v578, %v578
        %v585 = vld [vmem:[%s390] sm:$0xff]
        %v586 = vld [vmem:[%s390 + $0x8] sm:$0xff]
        %v587 = vld [vmem:[%s390 + $0x10] sm:$0xff]
        %v588 = vld [vmem:[%s390 + $0x18] sm:$0xff]
        %v589 = vld [vmem:[%s390 + $0x20] sm:$0xff]
        %v590 = vld [vmem:[%s390 + $0x28] sm:$0xff]
        %v591 = vld [vmem:[%s390 + $0x30] sm:$0xff]
        %v592 = vld [vmem:[%s390 + $0x38] sm:$0xff]
        %v593 = vld [vmem:[%s390 + $0x40] sm:$0xff]
        %v594 = vld [vmem:[%s390 + $0x48] sm:$0xff]
        %v595 = vld [vmem:[%s390 + $0x50] sm:$0xff]
        %v596 = vld [vmem:[%s390 + $0x58] sm:$0xff]
        %v597 = vld [vmem:[%s390 + $0x60] sm:$0xff]
        %v598 = vld [vmem:[%s390 + $0x68] sm:$0xff]
        %v599 = vld [vmem:[%s390 + $0x70] sm:$0xff]
        %v600 = vld [vmem:[%s390 + $0x78] sm:$0xff]
        %v601 = vld [vmem:[%s390 + $0x80] sm:$0xff]
        %v602 = vld [vmem:[%s390 + $0x88] sm:$0xff]
        %v603 = vld [vmem:[%s390 + $0x90] sm:$0xff]
        %v604 = vld [vmem:[%s390 + $0x98] sm:$0xff]
        %v605 = vld [vmem:[%s390 + $0xa0] sm:$0xff]
        %v606 = vld [vmem:[%s390 + $0xa8] sm:$0xff]
        %v607 = vld [vmem:[%s390 + $0xb0] sm:$0xff]
        %v608 = vld [vmem:[%s390 + $0xb8] sm:$0xff]
        %v609 = vld [vmem:[%s390 + $0xc0] sm:$0xff]
        %v610 = vld [vmem:[%s390 + $0xc8] sm:$0xff]
        %v611 = vld [vmem:[%s390 + $0xd0] sm:$0xff]
        %v612 = vld [vmem:[%s390 + $0xd8] sm:$0xff]
        %v613 = vld [vmem:[%s390 + $0xe0] sm:$0xff]
        %v614 = vld [vmem:[%s390 + $0xe8] sm:$0xff]
        %v615 = vld [vmem:[%s390 + $0xf0] sm:$0xff]
        %v616 = vld [vmem:[%s390 + $0xf8] sm:$0xff]
        %v617 = vld [vmem:[%s435] sm:$0x3]
        %v619 = vlaneseq
        %v620 = vshrl.u32 %v619, 7
        %v621 = vsub.s32 0, %v620
        %v622 = vrot.slane %v617, %v621
        %v623 = vlaneseq
        %v624 = vshrl.u32 %v623, 7
        %v625 = vsub.s32 1, %v624
        %v626 = vrot.slane %v617, %v625
        %v661 = vunpack.c.l.b16 %v585
        %v662 = vunpack.c.h.b16 %v585
        %v663 = vunpack.c.l.b16 %v586
        %v664 = vunpack.c.h.b16 %v586
        %v665 = vunpack.c.l.b16 %v587
        %v666 = vunpack.c.h.b16 %v587
        %v667 = vunpack.c.l.b16 %v588
        %v668 = vunpack.c.h.b16 %v588
        %v669 = vunpack.c.l.b16 %v589
        %v670 = vunpack.c.h.b16 %v589
        %v671 = vunpack.c.l.b16 %v590
        %v672 = vunpack.c.h.b16 %v590
        %v673 = vunpack.c.l.b16 %v591
        %v674 = vunpack.c.h.b16 %v591
        %v675 = vunpack.c.l.b16 %v592
        %v676 = vunpack.c.h.b16 %v592
        %v677 = vunpack.c.l.b16 %v593
        %v678 = vunpack.c.h.b16 %v593
        %v679 = vunpack.c.l.b16 %v594
        %v680 = vunpack.c.h.b16 %v594
        %v681 = vunpack.c.l.b16 %v595
        %v682 = vunpack.c.h.b16 %v595
        %v683 = vunpack.c.l.b16 %v596
        %v684 = vunpack.c.h.b16 %v596
        %v685 = vunpack.c.l.b16 %v597
        %v686 = vunpack.c.h.b16 %v597
        %v687 = vunpack.c.l.b16 %v598
        %v688 = vunpack.c.h.b16 %v598
        %v689 = vunpack.c.l.b16 %v599
        %v690 = vunpack.c.h.b16 %v599
        %v691 = vunpack.c.l.b16 %v600
        %v692 = vunpack.c.h.b16 %v600
        %v693 = vunpack.c.l.b16 %v601
        %v694 = vunpack.c.h.b16 %v601
        %v695 = vunpack.c.l.b16 %v602
        %v696 = vunpack.c.h.b16 %v602
        %v697 = vunpack.c.l.b16 %v603
        %v698 = vunpack.c.h.b16 %v603
        %v699 = vunpack.c.l.b16 %v604
        %v700 = vunpack.c.h.b16 %v604
        %v701 = vunpack.c.l.b16 %v605
        %v702 = vunpack.c.h.b16 %v605
        %v703 = vunpack.c.l.b16 %v606
        %v704 = vunpack.c.h.b16 %v606
        %v705 = vunpack.c.l.b16 %v607
        %v706 = vunpack.c.h.b16 %v607
        %v707 = vunpack.c.l.b16 %v608
        %v708 = vunpack.c.h.b16 %v608
        %v709 = vunpack.c.l.b16 %v609
        %v710 = vunpack.c.h.b16 %v609
        %v711 = vunpack.c.l.b16 %v610
        %v712 = vunpack.c.h.b16 %v610
        %v713 = vunpack.c.l.b16 %v611
        %v714 = vunpack.c.h.b16 %v611
        %v715 = vunpack.c.l.b16 %v612
        %v716 = vunpack.c.h.b16 %v612
        %v717 = vunpack.c.l.b16 %v613
        %v718 = vunpack.c.h.b16 %v613
        %v719 = vunpack.c.l.b16 %v614
        %v720 = vunpack.c.h.b16 %v614
        %v721 = vunpack.c.l.b16 %v615
        %v722 = vunpack.c.h.b16 %v615
        %v723 = vunpack.c.l.b16 %v616
        %v724 = vunpack.c.h.b16 %v616
        %v725 = vpack.c.b16 %v663, %v661
        %v726 = vpack.c.b16 %v664, %v662
        %v727 = vpack.c.b16 %v667, %v665
        %v728 = vpack.c.b16 %v668, %v666
        %v729 = vpack.c.b16 %v671, %v669
        %v730 = vpack.c.b16 %v672, %v670
        %v731 = vpack.c.b16 %v675, %v673
        %v732 = vpack.c.b16 %v676, %v674
        %v733 = vpack.c.b16 %v679, %v677
        %v734 = vpack.c.b16 %v680, %v678
        %v735 = vpack.c.b16 %v683, %v681
        %v736 = vpack.c.b16 %v684, %v682
        %v737 = vpack.c.b16 %v687, %v685
        %v738 = vpack.c.b16 %v688, %v686
        %v739 = vpack.c.b16 %v691, %v689
        %v740 = vpack.c.b16 %v692, %v690
        %v741 = vpack.c.b16 %v695, %v693
        %v742 = vpack.c.b16 %v696, %v694
        %v743 = vpack.c.b16 %v699, %v697
        %v744 = vpack.c.b16 %v700, %v698
        %v745 = vpack.c.b16 %v703, %v701
        %v746 = vpack.c.b16 %v704, %v702
        %v747 = vpack.c.b16 %v707, %v705
        %v748 = vpack.c.b16 %v708, %v706
        %v749 = vpack.c.b16 %v711, %v709
        %v750 = vpack.c.b16 %v712, %v710
        %v751 = vpack.c.b16 %v715, %v713
        %v752 = vpack.c.b16 %v716, %v714
        %v753 = vpack.c.b16 %v719, %v717
        %v754 = vpack.c.b16 %v720, %v718
        %v755 = vpack.c.b16 %v723, %v721
        %v756 = vpack.c.b16 %v724, %v722
        %789 = vmatprep.subr.bf16.mxu0 %v726
        %790 = vmatpush1.bf16.msra.mxu0 %v725
        %791 = vmatprep.subr.bf16.mxu0 %v728
        %792 = vmatpush1.bf16.msra.mxu0 %v727
        %793 = vmatprep.subr.bf16.mxu0 %v730
        %794 = vmatpush1.bf16.msra.mxu0 %v729
        %795 = vmatprep.subr.bf16.mxu0 %v732
        %796 = vmatpush1.bf16.msra.mxu0 %v731
        %797 = vmatprep.subr.bf16.mxu0 %v734
        %798 = vmatpush1.bf16.msra.mxu0 %v733
        %799 = vmatprep.subr.bf16.mxu0 %v736
        %800 = vmatpush1.bf16.msra.mxu0 %v735
        %801 = vmatprep.subr.bf16.mxu0 %v738
        %802 = vmatpush1.bf16.msra.mxu0 %v737
        %803 = vmatprep.subr.bf16.mxu0 %v740
        %804 = vmatpush1.bf16.msra.mxu0 %v739
        %805 = vmatprep.subr.bf16.mxu0 %v742
        %806 = vmatpush1.bf16.msra.mxu0 %v741
        %807 = vmatprep.subr.bf16.mxu0 %v744
        %808 = vmatpush1.bf16.msra.mxu0 %v743
        %809 = vmatprep.subr.bf16.mxu0 %v746
        %810 = vmatpush1.bf16.msra.mxu0 %v745
        %811 = vmatprep.subr.bf16.mxu0 %v748
        %812 = vmatpush1.bf16.msra.mxu0 %v747
        %813 = vmatprep.subr.bf16.mxu0 %v750
        %814 = vmatpush1.bf16.msra.mxu0 %v749
        %815 = vmatprep.subr.bf16.mxu0 %v752
        %816 = vmatpush1.bf16.msra.mxu0 %v751
        %817 = vmatprep.subr.bf16.mxu0 %v754
        %818 = vmatpush1.bf16.msra.mxu0 %v753
        %819 = vmatprep.subr.bf16.mxu0 %v756
        %820 = vmatpush1.bf16.msra.mxu0 %v755
        %821 = vmatprep.mubr.bf16.mxu0 %v580
        %822 = vmatmul.mubr.bf16.gmra.mrb[0].mxu0 %v579
        %v823 = vpop.f32.mrb[0].mxu0
        %v824 = vadd.f32 %v622, %v823
        %v825 = vpop.f32.mrb[0].mxu0
        %v826 = vadd.f32 %v626, %v825
        %v827 = vpop.f32.mrb[0].mxu0
        %v828 = vadd.f32 %v622, %v827
        %v829 = vpop.f32.mrb[0].mxu0
        %v830 = vadd.f32 %v626, %v829
        %831 = vmatprep.mubr.bf16.mxu0 %v582
        %832 = vmatmul.mubr.bf16.gmra.mrb[0].mxu0 %v581
        %v833 = vpop.f32.mrb[0].mxu0
        %v834 = vadd.f32 %v622, %v833
        %v835 = vpop.f32.mrb[0].mxu0
        %v836 = vadd.f32 %v626, %v835
        %v837 = vpop.f32.mrb[0].mxu0
        %v838 = vadd.f32 %v622, %v837
        %v839 = vpop.f32.mrb[0].mxu0
        %v840 = vadd.f32 %v626, %v839
        %841 = vmatprep.mubr.bf16.mxu0 %v584
        %842 = vmatmul.mubr.bf16.gmra.mrb[0].mxu0 %v583
        %v843 = vpop.f32.mrb[0].mxu0
        %v844 = vadd.f32 %v622, %v843
        %v845 = vpop.f32.mrb[0].mxu0
        %v846 = vadd.f32 %v626, %v845
        %v847 = vpop.f32.mrb[0].mxu0
        %v848 = vpop.f32.mrb[0].mxu0
        %849 = vdwg.mxu0
        %v850 = vpack.c.bf16 %v828, %v824
        %v851 = vpack.c.bf16 %v830, %v826
        %v852 = vpack.c.bf16 %v838, %v834
        %v853 = vpack.c.bf16 %v840, %v836
        %v854 = vpack.c.bf16 %v844, %v844
        %v855 = vpack.c.bf16 %v846, %v846
        %v862 = vunpack.c.l.b16 %v850
        %v863 = vunpack.c.l.b16 %v851
        %v864 = vunpack.c.h.b16 %v850
        %v865 = vunpack.c.h.b16 %v851
        %v866 = vunpack.c.l.b16 %v852
        %v867 = vunpack.c.l.b16 %v853
        %v868 = vunpack.c.h.b16 %v852
        %v869 = vunpack.c.h.b16 %v853
        %v870 = vunpack.c.l.b16 %v854
        %v871 = vunpack.c.l.b16 %v855
        %v872 = vpack.c.b16 %v863, %v862
        %v873 = vpack.c.b16 %v865, %v864
        %v874 = vpack.c.b16 %v867, %v866
        %v875 = vpack.c.b16 %v869, %v868
        %v876 = vpack.c.b16 %v871, %v870
        %882 = vst [vmem:[%s423] sm:$0xff] %v872
        %883 = vst [vmem:[%s423 + $0x8] sm:$0xff] %v873
        %884 = vst [vmem:[%s423 + $0x10] sm:$0xff] %v874
        %885 = vst [vmem:[%s423 + $0x18] sm:$0xff] %v875
        %886 = vst [vmem:[%s423 + $0x20] sm:$0x11] %v876
        %s887 = sand.u32 %s158, 1
        %s888 = sand.u32 %s158, 1
        %s889 = smul.addr %s888, 40
        %s890 = scalar_lea.vmem [#allocation3], %s889
        // Predicated region
        $region79: #{clip_visual_forward.15} parent=73 // pred_check
          %p891 = pneg %p168
        $region80: #{clip_visual_forward.15} parent=73 // pred_check_branch
          %893 = sbr.rel (%p891) target = $region82
        $region81: #{clip_visual_forward.15} parent=73 // pred_region
          %s894 = smul.u32 5, %s20
          %s895 = smul.u32 2, %s21
          %s896 = smul.addr %s894, 6
          %s897 = sadd.s32 %s895, %s896
          %s898 = smul.addr %s897, 4
          %s899 = scalar_lea.vmem %s5, %s898
          // Predicated region
          $region83: #{clip_visual_forward.15} parent=81 // pred_check
            _
          $region84: #{clip_visual_forward.15} parent=81 // pred_check_branch
            %901 = sbr.rel (0) target = $region86
          $region85: #{clip_visual_forward.15} parent=81 // pred_region
            // Predicated region
            $region87: #{clip_visual_forward.15} parent=85 // pred_check
              _
            $region88: #{clip_visual_forward.15} parent=85 // pred_check_branch
              %903 = sbr.rel (0) target = $region90
            $region89: #{clip_visual_forward.15} parent=85 // pred_region
              // Predicated region
              $region102: #{clip_visual_forward.15} parent=89 // pred_check
                _
              $region103: #{clip_visual_forward.15} parent=89 // pred_check_branch
                %926 = sbr.rel (0) target = $region105
              $region104: #{clip_visual_forward.15} parent=89 // pred_region
                loop: start=0, step=1, limit=1
                $region106: #{clip_visual_forward.15} parent=104 // loop_pre_header
                  _
                $region107: #{clip_visual_forward.15} parent=104 // loop_header
                  %s928 = sphi 0, %s932
                  %p929 = scmp.ge.s32.totalorder %s928, 1
                  %s933 = sphi %s890, %s890
                  %s934 = sphi %s899, %s899
                $region108: #{clip_visual_forward.15} parent=104 // loop_header_branch
                  %931 = sbr.rel (%p929) target = $region112
                $region109: #{clip_visual_forward.15} parent=104 // loop_body
                  %v935 = vld [vmem:[%s933] sm:$0xff]
                  %936 = vst [vmem:[%s934] sm:$0xff] %v935
                  %v937 = vld [vmem:[%s933 + $0x8] sm:$0xff]
                  %938 = vst [vmem:[%s934 + $0x18] sm:$0xff] %v937
                  %v939 = vld [vmem:[%s933 + $0x10] sm:$0xff]
                  %940 = vst [vmem:[%s934 + $0x30] sm:$0xff] %v939
                  %v941 = vld [vmem:[%s933 + $0x18] sm:$0xff]
                  %942 = vst [vmem:[%s934 + $0x48] sm:$0xff] %v941
                  %v943 = vld [vmem:[%s933 + $0x20] sm:$0xff]
                  %944 = vst [vmem:[%s934 + $0x60] sm:$0xff] %v943
                $region110: #{clip_visual_forward.15} parent=104 // loop_footer
                  %s932 = sadd.s32 1, %s928
                $region111: #{clip_visual_forward.15} parent=104 // loop_footer_branch
                  %927 = sbr.rel target = $region107
                $region112: #{clip_visual_forward.15} parent=104 // loop_exit
                  _
              $region105: #{clip_visual_forward.15} parent=89 // pred_fallthru
                _
              // Predicated region
              $region113: #{clip_visual_forward.15} parent=89 // pred_check
                _
              $region114: #{clip_visual_forward.15} parent=89 // pred_check_branch
                %946 = sbr.rel target = $region116
              $region115: #{clip_visual_forward.15} parent=89 // pred_region
                _
              $region116: #{clip_visual_forward.15} parent=89 // pred_fallthru
                _
            $region90: #{clip_visual_forward.15} parent=85 // pred_fallthru
              _
            // Predicated region
            $region91: #{clip_visual_forward.15} parent=85 // pred_check
              _
            $region92: #{clip_visual_forward.15} parent=85 // pred_check_branch
              %905 = sbr.rel target = $region94
            $region93: #{clip_visual_forward.15} parent=85 // pred_region
              loop: start=0, step=1, limit=1
              $region95: #{clip_visual_forward.15} parent=93 // loop_pre_header
                _
              $region96: #{clip_visual_forward.15} parent=93 // loop_header
                %s908 = sphi 0, %s912
                %p909 = scmp.ge.s32.totalorder %s908, 1
                %s913 = sphi %s890, %s890
                %s914 = sphi %s899, %s899
              $region97: #{clip_visual_forward.15} parent=93 // loop_header_branch
                %911 = sbr.rel (%p909) target = $region101
              $region98: #{clip_visual_forward.15} parent=93 // loop_body
                %v915 = vld [vmem:[%s913] sm:$0xff]
                %916 = vst [vmem:[%s914] sm:$0xff] %v915
                %v917 = vld [vmem:[%s913 + $0x8] sm:$0xff]
                %918 = vst [vmem:[%s914 + $0x18] sm:$0xff] %v917
                %v919 = vld [vmem:[%s913 + $0x10] sm:$0xff]
                %920 = vst [vmem:[%s914 + $0x30] sm:$0xff] %v919
                %v921 = vld [vmem:[%s913 + $0x18] sm:$0xff]
                %922 = vst [vmem:[%s914 + $0x48] sm:$0xff] %v921
                %v923 = vld [vmem:[%s913 + $0x20] sm:$0xff]
                %924 = vst [vmem:[%s914 + $0x60] sm:$0xff] %v923
              $region99: #{clip_visual_forward.15} parent=93 // loop_footer
                %s912 = sadd.s32 1, %s908
              $region100: #{clip_visual_forward.15} parent=93 // loop_footer_branch
                %907 = sbr.rel target = $region96
              $region101: #{clip_visual_forward.15} parent=93 // loop_exit
                _
            $region94: #{clip_visual_forward.15} parent=85 // pred_fallthru
              _
          $region86: #{clip_visual_forward.15} parent=81 // pred_fallthru
            _
          %947 = vnop
        $region82: #{clip_visual_forward.15} parent=73 // pred_fallthru
          _
      $region74: #{clip_visual_forward.15} parent=5 // pred_fallthru
        _
      %p948 = scmp.le.s32.totalorder 2, %s11
      // Predicated region
      $region117: #{clip_visual_forward.15} parent=5 // pred_check
        %p949 = pneg %p948
      $region118: #{clip_visual_forward.15} parent=5 // pred_check_branch
        %951 = sbr.rel (%p949) target = $region120
      $region119: #{clip_visual_forward.15} parent=5 // pred_region
        %s952 = ssub.s32 %s11, 2
        // Predicated region
        $region121: #{clip_visual_forward.15} parent=119 // pred_check
          %p953 = pneg %p174
        $region122: #{clip_visual_forward.15} parent=119 // pred_check_branch
          %955 = sbr.rel (%p953) target = $region124
        $region123: #{clip_visual_forward.15} parent=119 // pred_region
          %s956 = sand.u32 %s159, 1
          %s957 = sand.u32 %s159, 1
          %s958 = smul.addr %s957, 40
          %s959 = scalar_lea.vmem [#allocation3], %s958
        $region124: #{clip_visual_forward.15} parent=119 // pred_fallthru
          _
      $region120: #{clip_visual_forward.15} parent=5 // pred_fallthru
        _
    $region6: #{clip_visual_forward.15} parent=1 // loop_footer
      %s15 = sadd.s32 1, %s11
    $region7: #{clip_visual_forward.15} parent=1 // loop_footer_branch
      %10 = sbr.rel target = $region3
    $region8: #{clip_visual_forward.15} parent=1 // loop_exit
      _

// kernel: clip_visual_forward.16
$region0: #{clip_visual_forward.16}
  #allocation0 [shape = 'u32[]', space=smem, size = 0x4, offset = 0x4, fixed_abs, tag = 'smem constant byte address 0x4 - core index']
  #allocation1 [shape = 'u32[144,128]{1,0:T(1,128)}', space=vmem, size = 0x12000, scoped, tag = 'internal scratch']
  %s0 = inlined_call_operand.vmem [shape: bf16[2,17,768], index: 0, kind: input, shape index: {}, may-alias: {0,1,2}]
  %s1 = inlined_call_operand.vmem [shape: bf16[2,17,768], index: 1, kind: input, shape index: {}, may-alias: {0,1,2}]
  %s2 = inlined_call_operand.vmem [shape: bf16[2,17,768], index: 2, kind: input, shape index: {}, may-alias: {0,1,2}]
  %s3 = inlined_call_operand.vmem [shape: bf16[2,17,256], index: 3, kind: output, shape index: {}]
  %s4 = sld [smem:[#allocation0]]
  $region205: #{clip_visual_forward.16} parent=0
    _
  %s6 = ssub.s32 1, %s4
  %s7 = scalar_select 0, %s6, %s4
  $region1: #{clip_visual_forward.16} parent=0
    #allocation2 [shape = 'u8[12288]{0}', space=vmem, size = 0x3000, scoped, tag = 'input window, operand 0']
    #allocation3 [shape = 'u8[12288]{0}', space=vmem, size = 0x3000, scoped, tag = 'input window, operand 1']
    #allocation4 [shape = 'u8[12288]{0}', space=vmem, size = 0x3000, scoped, tag = 'input window, operand 2']
    #allocation5 [shape = 'u8[12288]{0}', space=vmem, size = 0x3000, scoped, tag = 'output window, operand 0']
    loop: start=0, step=1, limit=6
    $region2: #{clip_visual_forward.16} parent=1 // loop_pre_header
      _
    $region3: #{clip_visual_forward.16} parent=1 // loop_header
      %s9 = sphi 0, %s13
      %p10 = scmp.ge.s32.totalorder %s9, 6
      %s16 = sphi 0, %s28
      %s17 = sphi 0, %s24
      %s18 = sphi 0, %s16
      %s19 = sphi 0, %s17
      %s20 = sphi 0, %s18
      %s21 = sphi 0, %s19
      %s33 = sphi 0, %s35
      %s36 = sphi 0, %s33
      %s37 = sphi 0, %s36
      %s53 = sphi 0, %s37
      %s63 = sphi 0, %s65
      %s66 = sphi 0, %s63
      %s67 = sphi 0, %s66
      %s83 = sphi 0, %s67
      %s93 = sphi 0, %s95
      %s96 = sphi 0, %s93
      %s97 = sphi 0, %s96
      %s113 = sphi 0, %s97
      %s121 = sphi 0, %s123
      %s124 = sphi 0, %s121
      %s125 = sphi 0, %s124
      %s141 = sphi 0, %s125
    $region4: #{clip_visual_forward.16} parent=1 // loop_header_branch
      %12 = sbr.rel (%p10) target = $region8
    $region5: #{clip_visual_forward.16} parent=1 // loop_body
      %s14 = ssub.s32 %s9, 1
      %s15 = ssub.s32 %s9, 2
      %s22 = sadd.s32 1, %s17
      %p23 = scmp.ge.s32.totalorder %s22, 2
      %s24 = scalar_select %p23, 0, %s22
      %s25 = sadd.s32 1, %s16
      %s26 = scalar_select %p23, %s25, %s16
      %p27 = scmp.ge.s32.totalorder %s26, 2
      %s28 = scalar_select %p27, 0, %s26
      %s29 = ssub.s32 %s16, %s28
      %s30 = ssub.s32 %s17, %s24
      %s31 = sor.u32 %s29, %s30
      %p32 = scmp.eq.s32.totalorder %s31, 0
      %s34 = sadd.s32 %s33, 1
      %s35 = scalar_select %p32, %s33, %s34
      %p38 = pneg %p32
      %p39 = scmp.eq.s32.totalorder %s9, 3
      %p40 = por %p38, %p39
      %p41 = scmp.ne.s32.totalorder %s33, %s36
      %p42 = scmp.eq.s32.totalorder %s9, 0
      %p43 = por %p41, %p42
      %p44 = scmp.ne.s32.totalorder %s33, %s36
      %p45 = scmp.eq.s32.totalorder %s14, 3
      %p46 = por %p44, %p45
      %p47 = scmp.ne.s32.totalorder %s36, %s37
      %p48 = scmp.eq.s32.totalorder %s14, 0
      %p49 = por %p47, %p48
      %p50 = scmp.ne.s32.totalorder %s36, %s37
      %p51 = scmp.eq.s32.totalorder %s15, 3
      %p52 = por %p50, %p51
      %p54 = scmp.ne.s32.totalorder %s37, %s53
      %p55 = scmp.eq.s32.totalorder %s15, 0
      %p56 = por %p54, %p55
      %s57 = sadd.s32 %s17, 2
      %s58 = sadd.s32 %s24, 2
      %s59 = ssub.s32 %s16, %s28
      %s60 = ssub.s32 %s57, %s58
      %s61 = sor.u32 %s59, %s60
      %p62 = scmp.eq.s32.totalorder %s61, 0
      %s64 = sadd.s32 %s63, 1
      %s65 = scalar_select %p62, %s63, %s64
      %p68 = pneg %p62
      %p69 = scmp.eq.s32.totalorder %s9, 3
      %p70 = por %p68, %p69
      %p71 = scmp.ne.s32.totalorder %s63, %s66
      %p72 = scmp.eq.s32.totalorder %s9, 0
      %p73 = por %p71, %p72
      %p74 = scmp.ne.s32.totalorder %s63, %s66
      %p75 = scmp.eq.s32.totalorder %s14, 3
      %p76 = por %p74, %p75
      %p77 = scmp.ne.s32.totalorder %s66, %s67
      %p78 = scmp.eq.s32.totalorder %s14, 0
      %p79 = por %p77, %p78
      %p80 = scmp.ne.s32.totalorder %s66, %s67
      %p81 = scmp.eq.s32.totalorder %s15, 3
      %p82 = por %p80, %p81
      %p84 = scmp.ne.s32.totalorder %s67, %s83
      %p85 = scmp.eq.s32.totalorder %s15, 0
      %p86 = por %p84, %p85
      %s87 = sadd.s32 %s17, 4
      %s88 = sadd.s32 %s24, 4
      %s89 = ssub.s32 %s16, %s28
      %s90 = ssub.s32 %s87, %s88
      %s91 = sor.u32 %s89, %s90
      %p92 = scmp.eq.s32.totalorder %s91, 0
      %s94 = sadd.s32 %s93, 1
      %s95 = scalar_select %p92, %s93, %s94
      %p98 = pneg %p92
      %p99 = scmp.eq.s32.totalorder %s9, 3
      %p100 = por %p98, %p99
      %p101 = scmp.ne.s32.totalorder %s93, %s96
      %p102 = scmp.eq.s32.totalorder %s9, 0
      %p103 = por %p101, %p102
      %p104 = scmp.ne.s32.totalorder %s93, %s96
      %p105 = scmp.eq.s32.totalorder %s14, 3
      %p106 = por %p104, %p105
      %p107 = scmp.ne.s32.totalorder %s96, %s97
      %p108 = scmp.eq.s32.totalorder %s14, 0
      %p109 = por %p107, %p108
      %p110 = scmp.ne.s32.totalorder %s96, %s97
      %p111 = scmp.eq.s32.totalorder %s15, 3
      %p112 = por %p110, %p111
      %p114 = scmp.ne.s32.totalorder %s97, %s113
      %p115 = scmp.eq.s32.totalorder %s15, 0
      %p116 = por %p114, %p115
      %s117 = ssub.s32 %s16, %s28
      %s118 = ssub.s32 %s17, %s24
      %s119 = sor.u32 %s117, %s118
      %p120 = scmp.eq.s32.totalorder %s119, 0
      %s122 = sadd.s32 %s121, 1
      %s123 = scalar_select %p120, %s121, %s122
      %p126 = pneg %p120
      %p127 = scmp.eq.s32.totalorder %s9, 3
      %p128 = por %p126, %p127
      %p129 = scmp.ne.s32.totalorder %s121, %s124
      %p130 = scmp.eq.s32.totalorder %s9, 0
      %p131 = por %p129, %p130
      %p132 = scmp.ne.s32.totalorder %s121, %s124
      %p133 = scmp.eq.s32.totalorder %s14, 3
      %p134 = por %p132, %p133
      %p135 = scmp.ne.s32.totalorder %s124, %s125
      %p136 = scmp.eq.s32.totalorder %s14, 0
      %p137 = por %p135, %p136
      %p138 = scmp.ne.s32.totalorder %s124, %s125
      %p139 = scmp.eq.s32.totalorder %s15, 3
      %p140 = por %p138, %p139
      %p142 = scmp.ne.s32.totalorder %s125, %s141
      %p143 = scmp.eq.s32.totalorder %s15, 0
      %p144 = por %p142, %p143
      %p145 = scmp.le.s32.totalorder 1, %s9
      %p146 = scmp.lt.s32.totalorder %s9, 5
      %p147 = pnand %p145, %p146
      %p148 = pneg %p147
      // Predicated region
      $region9: #{clip_visual_forward.16} parent=5 // pred_check
        _
      $region10: #{clip_visual_forward.16} parent=5 // pred_check_branch
        %150 = sbr.rel (%p147) target = $region12
      $region11: #{clip_visual_forward.16} parent=5 // pred_region
        %s151 = ssub.s32 %s9, 1
      $region12: #{clip_visual_forward.16} parent=5 // pred_fallthru
        _
      %p152 = scmp.lt.s32.totalorder %s9, 4
      // Predicated region
      $region13: #{clip_visual_forward.16} parent=5 // pred_check
        %p153 = pneg %p152
      $region14: #{clip_visual_forward.16} parent=5 // pred_check_branch
        %155 = sbr.rel (%p153) target = $region16
      $region15: #{clip_visual_forward.16} parent=5 // pred_region
        // Predicated region
        $region17: #{clip_visual_forward.16} parent=15 // pred_check
          %p156 = pneg %p43
        $region18: #{clip_visual_forward.16} parent=15 // pred_check_branch
          %158 = sbr.rel (%p156) target = $region20
        $region19: #{clip_visual_forward.16} parent=15 // pred_region
          %s159 = sand.u32 %s33, 1
          %s160 = sand.u32 %s33, 1
          %s161 = smul.addr %s160, 12
          %s162 = scalar_lea.vmem [#allocation2], %s161
          %s163 = smul.addr %s16, 18
          %s164 = sadd.s32 %s17, %s163
          %s165 = smul.addr %s164, 4
          %s166 = scalar_lea.vmem %s0, %s165
          // Predicated region
          $region21: #{clip_visual_forward.16} parent=19 // pred_check
            _
          $region22: #{clip_visual_forward.16} parent=19 // pred_check_branch
            %168 = sbr.rel (0) target = $region24
          $region23: #{clip_visual_forward.16} parent=19 // pred_region
            // Predicated region
            $region25: #{clip_visual_forward.16} parent=23 // pred_check
              _
            $region26: #{clip_visual_forward.16} parent=23 // pred_check_branch
              %170 = sbr.rel target = $region28
            $region27: #{clip_visual_forward.16} parent=23 // pred_region
              // Predicated region
              $region40: #{clip_visual_forward.16} parent=27 // pred_check
                _
              $region41: #{clip_visual_forward.16} parent=27 // pred_check_branch
                %189 = sbr.rel (0) target = $region43
              $region42: #{clip_visual_forward.16} parent=27 // pred_region
                loop: start=0, step=1, limit=1
                $region44: #{clip_visual_forward.16} parent=42 // loop_pre_header
                  _
                $region45: #{clip_visual_forward.16} parent=42 // loop_header
                  %s191 = sphi 0, %s195
                  %p192 = scmp.ge.s32.totalorder %s191, 1
                  %s196 = sphi %s166, %s166
                  %s197 = sphi %s162, %s162
                $region46: #{clip_visual_forward.16} parent=42 // loop_header_branch
                  %194 = sbr.rel (%p192) target = $region50
                $region47: #{clip_visual_forward.16} parent=42 // loop_body
                  _
                $region48: #{clip_visual_forward.16} parent=42 // loop_footer
                  %s195 = sadd.s32 1, %s191
                $region49: #{clip_visual_forward.16} parent=42 // loop_footer_branch
                  %190 = sbr.rel target = $region45
                $region50: #{clip_visual_forward.16} parent=42 // loop_exit
                  _
                loop: start=0, step=1, limit=1
                $region51: #{clip_visual_forward.16} parent=42 // loop_pre_header
                  _
                $region52: #{clip_visual_forward.16} parent=42 // loop_header
                  %s200 = sphi 0, %s204
                  %p201 = scmp.ge.s32.totalorder %s200, 1
                  %s205 = sphi %s166, %s166
                  %s206 = sphi %s162, %s162
                $region53: #{clip_visual_forward.16} parent=42 // loop_header_branch
                  %203 = sbr.rel (%p201) target = $region57
                $region54: #{clip_visual_forward.16} parent=42 // loop_body
                  %v207 = vld [vmem:[%s205] sm:$0xf]
                  %208 = vst [vmem:[%s206] sm:$0xf] %v207
                  %v209 = vld [vmem:[%s205 + $0x18] sm:$0xf]
                  %210 = vst [vmem:[%s206 + $0x4] sm:$0xf] %v209
                  %v211 = vld [vmem:[%s205 + $0x30] sm:$0xf]
                  %212 = vst [vmem:[%s206 + $0x8] sm:$0xf] %v211
                $region55: #{clip_visual_forward.16} parent=42 // loop_footer
                  %s204 = sadd.s32 1, %s200
                $region56: #{clip_visual_forward.16} parent=42 // loop_footer_branch
                  %199 = sbr.rel target = $region52
                $region57: #{clip_visual_forward.16} parent=42 // loop_exit
                  _
              $region43: #{clip_visual_forward.16} parent=27 // pred_fallthru
                _
            $region28: #{clip_visual_forward.16} parent=23 // pred_fallthru
              _
            // Predicated region
            $region29: #{clip_visual_forward.16} parent=23 // pred_check
              _
            $region30: #{clip_visual_forward.16} parent=23 // pred_check_branch
              %172 = sbr.rel (0) target = $region32
            $region31: #{clip_visual_forward.16} parent=23 // pred_region
              loop: start=0, step=1, limit=1
              $region33: #{clip_visual_forward.16} parent=31 // loop_pre_header
                _
              $region34: #{clip_visual_forward.16} parent=31 // loop_header
                %s175 = sphi 0, %s179
                %p176 = scmp.ge.s32.totalorder %s175, 1
                %s180 = sphi %s166, %s166
                %s181 = sphi %s162, %s162
              $region35: #{clip_visual_forward.16} parent=31 // loop_header_branch
                %178 = sbr.rel (%p176) target = $region39
              $region36: #{clip_visual_forward.16} parent=31 // loop_body
                %v182 = vld [vmem:[%s180] sm:$0xf]
                %183 = vst [vmem:[%s181] sm:$0xf] %v182
                %v184 = vld [vmem:[%s180 + $0x18] sm:$0xf]
                %185 = vst [vmem:[%s181 + $0x4] sm:$0xf] %v184
                %v186 = vld [vmem:[%s180 + $0x30] sm:$0xf]
                %187 = vst [vmem:[%s181 + $0x8] sm:$0xf] %v186
              $region37: #{clip_visual_forward.16} parent=31 // loop_footer
                %s179 = sadd.s32 1, %s175
              $region38: #{clip_visual_forward.16} parent=31 // loop_footer_branch
                %174 = sbr.rel target = $region34
              $region39: #{clip_visual_forward.16} parent=31 // loop_exit
                _
            $region32: #{clip_visual_forward.16} parent=23 // pred_fallthru
              _
          $region24: #{clip_visual_forward.16} parent=19 // pred_fallthru
            _
          %213 = vnop
        $region20: #{clip_visual_forward.16} parent=15 // pred_fallthru
          _
        // Predicated region
        $region58: #{clip_visual_forward.16} parent=15 // pred_check
          %p214 = pneg %p73
        $region59: #{clip_visual_forward.16} parent=15 // pred_check_branch
          %216 = sbr.rel (%p214) target = $region61
        $region60: #{clip_visual_forward.16} parent=15 // pred_region
          %s217 = sand.u32 %s63, 1
          %s218 = sand.u32 %s63, 1
          %s219 = smul.addr %s218, 12
          %s220 = scalar_lea.vmem [#allocation3], %s219
          %s221 = sadd.s32 %s17, 2
          %s222 = smul.addr %s16, 18
          %s223 = sadd.s32 %s221, %s222
          %s224 = smul.addr %s223, 4
          %s225 = scalar_lea.vmem %s1, %s224
          // Predicated region
          $region62: #{clip_visual_forward.16} parent=60 // pred_check
            _
          $region63: #{clip_visual_forward.16} parent=60 // pred_check_branch
            %227 = sbr.rel (0) target = $region65
          $region64: #{clip_visual_forward.16} parent=60 // pred_region
            // Predicated region
            $region66: #{clip_visual_forward.16} parent=64 // pred_check
              _
            $region67: #{clip_visual_forward.16} parent=64 // pred_check_branch
              %229 = sbr.rel target = $region69
            $region68: #{clip_visual_forward.16} parent=64 // pred_region
              // Predicated region
              $region81: #{clip_visual_forward.16} parent=68 // pred_check
                _
              $region82: #{clip_visual_forward.16} parent=68 // pred_check_branch
                %248 = sbr.rel (0) target = $region84
              $region83: #{clip_visual_forward.16} parent=68 // pred_region
                loop: start=0, step=1, limit=1
                $region85: #{clip_visual_forward.16} parent=83 // loop_pre_header
                  _
                $region86: #{clip_visual_forward.16} parent=83 // loop_header
                  %s250 = sphi 0, %s254
                  %p251 = scmp.ge.s32.totalorder %s250, 1
                  %s255 = sphi %s225, %s225
                  %s256 = sphi %s220, %s220
                $region87: #{clip_visual_forward.16} parent=83 // loop_header_branch
                  %253 = sbr.rel (%p251) target = $region91
                $region88: #{clip_visual_forward.16} parent=83 // loop_body
                  _
                $region89: #{clip_visual_forward.16} parent=83 // loop_footer
                  %s254 = sadd.s32 1, %s250
                $region90: #{clip_visual_forward.16} parent=83 // loop_footer_branch
                  %249 = sbr.rel target = $region86
                $region91: #{clip_visual_forward.16} parent=83 // loop_exit
                  _
                loop: start=0, step=1, limit=1
                $region92: #{clip_visual_forward.16} parent=83 // loop_pre_header
                  _
                $region93: #{clip_visual_forward.16} parent=83 // loop_header
                  %s259 = sphi 0, %s263
                  %p260 = scmp.ge.s32.totalorder %s259, 1
                  %s264 = sphi %s225, %s225
                  %s265 = sphi %s220, %s220
                $region94: #{clip_visual_forward.16} parent=83 // loop_header_branch
                  %262 = sbr.rel (%p260) target = $region98
                $region95: #{clip_visual_forward.16} parent=83 // loop_body
                  %v266 = vld [vmem:[%s264] sm:$0xf]
                  %267 = vst [vmem:[%s265] sm:$0xf] %v266
                  %v268 = vld [vmem:[%s264 + $0x18] sm:$0xf]
                  %269 = vst [vmem:[%s265 + $0x4] sm:$0xf] %v268
                  %v270 = vld [vmem:[%s264 + $0x30] sm:$0xf]
                  %271 = vst [vmem:[%s265 + $0x8] sm:$0xf] %v270
                $region96: #{clip_visual_forward.16} parent=83 // loop_footer
                  %s263 = sadd.s32 1, %s259
                $region97: #{clip_visual_forward.16} parent=83 // loop_footer_branch
                  %258 = sbr.rel target = $region93
                $region98: #{clip_visual_forward.16} parent=83 // loop_exit
                  _
              $region84: #{clip_visual_forward.16} parent=68 // pred_fallthru
                _
            $region69: #{clip_visual_forward.16} parent=64 // pred_fallthru
              _
            // Predicated region
            $region70: #{clip_visual_forward.16} parent=64 // pred_check
              _
            $region71: #{clip_visual_forward.16} parent=64 // pred_check_branch
              %231 = sbr.rel (0) target = $region73
            $region72: #{clip_visual_forward.16} parent=64 // pred_region
              loop: start=0, step=1, limit=1
              $region74: #{clip_visual_forward.16} parent=72 // loop_pre_header
                _
              $region75: #{clip_visual_forward.16} parent=72 // loop_header
                %s234 = sphi 0, %s238
                %p235 = scmp.ge.s32.totalorder %s234, 1
                %s239 = sphi %s225, %s225
                %s240 = sphi %s220, %s220
              $region76: #{clip_visual_forward.16} parent=72 // loop_header_branch
                %237 = sbr.rel (%p235) target = $region80
              $region77: #{clip_visual_forward.16} parent=72 // loop_body
                %v241 = vld [vmem:[%s239] sm:$0xf]
                %242 = vst [vmem:[%s240] sm:$0xf] %v241
                %v243 = vld [vmem:[%s239 + $0x18] sm:$0xf]
                %244 = vst [vmem:[%s240 + $0x4] sm:$0xf] %v243
                %v245 = vld [vmem:[%s239 + $0x30] sm:$0xf]
                %246 = vst [vmem:[%s240 + $0x8] sm:$0xf] %v245
              $region78: #{clip_visual_forward.16} parent=72 // loop_footer
                %s238 = sadd.s32 1, %s234
              $region79: #{clip_visual_forward.16} parent=72 // loop_footer_branch
                %233 = sbr.rel target = $region75
              $region80: #{clip_visual_forward.16} parent=72 // loop_exit
                _
            $region73: #{clip_visual_forward.16} parent=64 // pred_fallthru
              _
          $region65: #{clip_visual_forward.16} parent=60 // pred_fallthru
            _
          %272 = vnop
        $region61: #{clip_visual_forward.16} parent=15 // pred_fallthru
          _
        // Predicated region
        $region99: #{clip_visual_forward.16} parent=15 // pred_check
          %p273 = pneg %p103
        $region100: #{clip_visual_forward.16} parent=15 // pred_check_branch
          %275 = sbr.rel (%p273) target = $region102
        $region101: #{clip_visual_forward.16} parent=15 // pred_region
          %s276 = sand.u32 %s93, 1
          %s277 = sand.u32 %s93, 1
          %s278 = smul.addr %s277, 12
          %s279 = scalar_lea.vmem [#allocation4], %s278
          %s280 = sadd.s32 %s17, 4
          %s281 = smul.addr %s16, 18
          %s282 = sadd.s32 %s280, %s281
          %s283 = smul.addr %s282, 4
          %s284 = scalar_lea.vmem %s2, %s283
          // Predicated region
          $region103: #{clip_visual_forward.16} parent=101 // pred_check
            _
          $region104: #{clip_visual_forward.16} parent=101 // pred_check_branch
            %286 = sbr.rel (0) target = $region106
          $region105: #{clip_visual_forward.16} parent=101 // pred_region
            // Predicated region
            $region107: #{clip_visual_forward.16} parent=105 // pred_check
              _
            $region108: #{clip_visual_forward.16} parent=105 // pred_check_branch
              %288 = sbr.rel target = $region110
            $region109: #{clip_visual_forward.16} parent=105 // pred_region
              // Predicated region
              $region122: #{clip_visual_forward.16} parent=109 // pred_check
                _
              $region123: #{clip_visual_forward.16} parent=109 // pred_check_branch
                %307 = sbr.rel (0) target = $region125
              $region124: #{clip_visual_forward.16} parent=109 // pred_region
                loop: start=0, step=1, limit=1
                $region126: #{clip_visual_forward.16} parent=124 // loop_pre_header
                  _
                $region127: #{clip_visual_forward.16} parent=124 // loop_header
                  %s309 = sphi 0, %s313
                  %p310 = scmp.ge.s32.totalorder %s309, 1
                  %s314 = sphi %s284, %s284
                  %s315 = sphi %s279, %s279
                $region128: #{clip_visual_forward.16} parent=124 // loop_header_branch
                  %312 = sbr.rel (%p310) target = $region132
                $region129: #{clip_visual_forward.16} parent=124 // loop_body
                  _
                $region130: #{clip_visual_forward.16} parent=124 // loop_footer
                  %s313 = sadd.s32 1, %s309
                $region131: #{clip_visual_forward.16} parent=124 // loop_footer_branch
                  %308 = sbr.rel target = $region127
                $region132: #{clip_visual_forward.16} parent=124 // loop_exit
                  _
                loop: start=0, step=1, limit=1
                $region133: #{clip_visual_forward.16} parent=124 // loop_pre_header
                  _
                $region134: #{clip_visual_forward.16} parent=124 // loop_header
                  %s318 = sphi 0, %s322
                  %p319 = scmp.ge.s32.totalorder %s318, 1
                  %s323 = sphi %s284, %s284
                  %s324 = sphi %s279, %s279
                $region135: #{clip_visual_forward.16} parent=124 // loop_header_branch
                  %321 = sbr.rel (%p319) target = $region139
                $region136: #{clip_visual_forward.16} parent=124 // loop_body
                  %v325 = vld [vmem:[%s323] sm:$0xf]
                  %326 = vst [vmem:[%s324] sm:$0xf] %v325
                  %v327 = vld [vmem:[%s323 + $0x18] sm:$0xf]
                  %328 = vst [vmem:[%s324 + $0x4] sm:$0xf] %v327
                  %v329 = vld [vmem:[%s323 + $0x30] sm:$0xf]
                  %330 = vst [vmem:[%s324 + $0x8] sm:$0xf] %v329
                $region137: #{clip_visual_forward.16} parent=124 // loop_footer
                  %s322 = sadd.s32 1, %s318
                $region138: #{clip_visual_forward.16} parent=124 // loop_footer_branch
                  %317 = sbr.rel target = $region134
                $region139: #{clip_visual_forward.16} parent=124 // loop_exit
                  _
              $region125: #{clip_visual_forward.16} parent=109 // pred_fallthru
                _
            $region110: #{clip_visual_forward.16} parent=105 // pred_fallthru
              _
            // Predicated region
            $region111: #{clip_visual_forward.16} parent=105 // pred_check
              _
            $region112: #{clip_visual_forward.16} parent=105 // pred_check_branch
              %290 = sbr.rel (0) target = $region114
            $region113: #{clip_visual_forward.16} parent=105 // pred_region
              loop: start=0, step=1, limit=1
              $region115: #{clip_visual_forward.16} parent=113 // loop_pre_header
                _
              $region116: #{clip_visual_forward.16} parent=113 // loop_header
                %s293 = sphi 0, %s297
                %p294 = scmp.ge.s32.totalorder %s293, 1
                %s298 = sphi %s284, %s284
                %s299 = sphi %s279, %s279
              $region117: #{clip_visual_forward.16} parent=113 // loop_header_branch
                %296 = sbr.rel (%p294) target = $region121
              $region118: #{clip_visual_forward.16} parent=113 // loop_body
                %v300 = vld [vmem:[%s298] sm:$0xf]
                %301 = vst [vmem:[%s299] sm:$0xf] %v300
                %v302 = vld [vmem:[%s298 + $0x18] sm:$0xf]
                %303 = vst [vmem:[%s299 + $0x4] sm:$0xf] %v302
                %v304 = vld [vmem:[%s298 + $0x30] sm:$0xf]
                %305 = vst [vmem:[%s299 + $0x8] sm:$0xf] %v304
              $region119: #{clip_visual_forward.16} parent=113 // loop_footer
                %s297 = sadd.s32 1, %s293
              $region120: #{clip_visual_forward.16} parent=113 // loop_footer_branch
                %292 = sbr.rel target = $region116
              $region121: #{clip_visual_forward.16} parent=113 // loop_exit
                _
            $region114: #{clip_visual_forward.16} parent=105 // pred_fallthru
              _
          $region106: #{clip_visual_forward.16} parent=101 // pred_fallthru
            _
          %331 = vnop
        $region102: #{clip_visual_forward.16} parent=15 // pred_fallthru
          _
      $region16: #{clip_visual_forward.16} parent=5 // pred_fallthru
        _
      %p332 = scmp.le.s32.totalorder 1, %s9
      %p333 = scmp.lt.s32.totalorder %s9, 5
      %p334 = pnand %p332, %p333
      %p335 = pneg %p334
      // Predicated region
      $region140: #{clip_visual_forward.16} parent=5 // pred_check
        _
      $region141: #{clip_visual_forward.16} parent=5 // pred_check_branch
        %337 = sbr.rel (%p334) target = $region143
      $region142: #{clip_visual_forward.16} parent=5 // pred_region
        %s338 = ssub.s32 %s9, 1
        %s339 = sand.u32 %s36, 1
        %s340 = sand.u32 %s36, 1
        %s341 = smul.addr %s340, 12
        %s342 = scalar_lea.vmem [#allocation2], %s341
        // Predicated region
        $region144: #{clip_visual_forward.16} parent=142 // pred_check
          %p343 = pneg %p49
        $region145: #{clip_visual_forward.16} parent=142 // pred_check_branch
          %345 = sbr.rel (%p343) target = $region147
        $region146: #{clip_visual_forward.16} parent=142 // pred_region
          _
        $region147: #{clip_visual_forward.16} parent=142 // pred_fallthru
          _
        %s346 = sand.u32 %s66, 1
        %s347 = sand.u32 %s66, 1
        %s348 = smul.addr %s347, 12
        %s349 = scalar_lea.vmem [#allocation3], %s348
        // Predicated region
        $region148: #{clip_visual_forward.16} parent=142 // pred_check
          %p350 = pneg %p79
        $region149: #{clip_visual_forward.16} parent=142 // pred_check_branch
          %352 = sbr.rel (%p350) target = $region151
        $region150: #{clip_visual_forward.16} parent=142 // pred_region
          _
        $region151: #{clip_visual_forward.16} parent=142 // pred_fallthru
          _
        %s353 = sand.u32 %s96, 1
        %s354 = sand.u32 %s96, 1
        %s355 = smul.addr %s354, 12
        %s356 = scalar_lea.vmem [#allocation4], %s355
        // Predicated region
        $region152: #{clip_visual_forward.16} parent=142 // pred_check
          %p357 = pneg %p109
        $region153: #{clip_visual_forward.16} parent=142 // pred_check_branch
          %359 = sbr.rel (%p357) target = $region155
        $region154: #{clip_visual_forward.16} parent=142 // pred_region
          _
        $region155: #{clip_visual_forward.16} parent=142 // pred_fallthru
          _
        %s360 = sand.u32 %s36, 1
        %s361 = sand.u32 %s36, 1
        %s362 = smul.addr %s361, 12
        %s363 = scalar_lea.vmem [#allocation2], %s362
        %p364 = pneg %p49
        %p365 = pneg %p46
        %s366 = sand.u32 %s66, 1
        %s367 = sand.u32 %s66, 1
        %s368 = smul.addr %s367, 12
        %s369 = scalar_lea.vmem [#allocation3], %s368
        %p370 = pneg %p79
        %p371 = pneg %p76
        %s372 = sand.u32 %s96, 1
        %s373 = sand.u32 %s96, 1
        %s374 = smul.addr %s373, 12
        %s375 = scalar_lea.vmem [#allocation4], %s374
        %p376 = pneg %p109
        %p377 = pneg %p106
        %p378 = pneg %p137
        %p379 = pneg %p134
        %s380 = sand.u32 %s124, 1
        %s381 = sand.u32 %s124, 1
        %s382 = smul.addr %s381, 12
        %s383 = scalar_lea.vmem [#allocation5], %s382
        %s384 = sadd.s32 %s19, 2
        %s385 = sadd.s32 %s19, 4
        %v387 = vld [vmem:[%s342] sm:$0xf]
        %v388 = vld [vmem:[%s342 + $0x4] sm:$0xf]
        %v389 = vld [vmem:[%s342 + $0x8] sm:$0x1]
        %v390 = vld [vmem:[%s349] sm:$0xf]
        %v391 = vld [vmem:[%s349 + $0x4] sm:$0xf]
        %v392 = vld [vmem:[%s349 + $0x8] sm:$0x1]
        %v393 = vld [vmem:[%s356] sm:$0xf]
        %v394 = vld [vmem:[%s356 + $0x4] sm:$0xf]
        %v395 = vld [vmem:[%s356 + $0x8] sm:$0x1]
        %v399 = vunpack.c.l.b16 %v387
        %v400 = vunpack.c.l.b16 %v388
        %v401 = vunpack.c.l.b16 %v389
        %v402 = vpack.c.b16 %v400, %v399
        %v403 = vpack.c.b16 %v401, %v401
        %v409 = vunpack.c.l.b16 %v390
        %v410 = vunpack.c.l.b16 %v391
        %v411 = vunpack.c.l.b16 %v392
        %v412 = vpack.c.b16 %v410, %v409
        %v413 = vpack.c.b16 %v411, %v411
        %416 = vmatprep.subr.bf16.mxu0 0
        %417 = vmatpush1.bf16.xpose.msra.mxu0 %v412
        %418 = vmatprep.subr.bf16.mxu0 0
        %419 = vmatpush1.bf16.xpose.msra.mxu0 %v413
        %420 = vmatprep.subr.bf16.mxu0 0
        %421 = vmatpush1.bf16.xpose.msra.mxu0 0
        %422 = vmatprep.subr.bf16.mxu0 0
        %423 = vmatpush1.bf16.xpose.msra.mxu0 0
        %424 = vmatprep.subr.bf16.mxu0 0
        %425 = vmatpush1.bf16.xpose.msra.mxu0 0
        %426 = vmatprep.subr.bf16.mxu0 0
        %427 = vmatpush1.bf16.xpose.msra.mxu0 0
        %428 = vmatprep.subr.bf16.mxu0 0
        %429 = vmatpush1.bf16.xpose.msra.mxu0 0
        %430 = vmatprep.subr.bf16.mxu0 0
        %431 = vmatpush1.bf16.xpose.msra.mxu0 0
        %432 = vmatprep.subr.bf16.mxu0 0
        %433 = vmatpush1.bf16.xpose.msra.mxu0 0
        %434 = vmatprep.subr.bf16.mxu0 0
        %435 = vmatpush1.bf16.xpose.msra.mxu0 0
        %436 = vmatprep.subr.bf16.mxu0 0
        %437 = vmatpush1.bf16.xpose.msra.mxu0 0
        %438 = vmatprep.subr.bf16.mxu0 0
        %439 = vmatpush1.bf16.xpose.msra.mxu0 0
        %440 = vmatprep.subr.bf16.mxu0 0
        %441 = vmatpush1.bf16.xpose.msra.mxu0 0
        %442 = vmatprep.subr.bf16.mxu0 0
        %443 = vmatpush1.bf16.xpose.msra.mxu0 0
        %444 = vmatprep.subr.bf16.mxu0 0
        %445 = vmatpush1.bf16.xpose.msra.mxu0 0
        %446 = vmatprep.subr.bf16.mxu0 0
        %447 = vmatpush1.bf16.xpose.msra.mxu0 0
        %448 = vmatprep.mubr.bf16.mxu0 0
        %449 = vmatmul.mubr.bf16.gmra.mrb[0].mxu0 %v402
        %v450 = vpop.f32.mrb[0].mxu0
        %v451 = vadd.f32 0.0, %v450
        %v452 = vpop.f32.mrb[0].mxu0
        %v453 = vpop.f32.mrb[0].mxu0
        %v454 = vadd.f32 0.0, %v453
        %v455 = vpop.f32.mrb[0].mxu0
        %456 = vmatprep.mubr.bf16.mxu0 0
        %457 = vmatmul.mubr.bf16.gmra.mrb[0].mxu0 %v403
        %v458 = vpop.f32.mrb[0].mxu0
        %v459 = vadd.f32 0.0, %v458
        %v460 = vpop.f32.mrb[0].mxu0
        %v461 = vpop.f32.mrb[0].mxu0
        %v462 = vpop.f32.mrb[0].mxu0
        %463 = vdwg.mxu0
        %v464 = vmul.f32 %v451, 0.088388346
        %v465 = vmul.f32 %v454, 0.088388346
        %v466 = vmul.f32 %v459, 0.088388346
        %vm467 = vcmask 138240
        %v468 = vsel %vm467, %v464, -inf
        %469 = vmax.xlane.f32.xlu0 %v468
        %v470 = vpop.xlane.xlu0 %469
        %v471 = vsel %vm467, %v465, -inf
        %472 = vmax.xlane.f32.xlu0 %v471
        %v473 = vpop.xlane.xlu0 %472
        %vm474 = vcmask 131072
        %v475 = vsel %vm474, %v466, -inf
        %476 = vmax.xlane.f32.xlu0 %v475
        %v477 = vpop.xlane.xlu0 %476
        %v478 = vsub.f32 %v464, %v470
        %v479 = vsub.f32 %v465, %v473
        %v480 = vsub.f32 %v466, %v477
        %v481 = vmul.f32 %v478, 1.442695
        %v482 = vpow.pop %v481
        %v483 = vmul.f32 %v479, 1.442695
        %v484 = vpow.pop %v483
        %v485 = vmul.f32 %v480, 1.442695
        %v486 = vpow.pop %v485
        %v487 = vsel %vm467, %v482, 0.0
        %488 = vadd.xlane.f32.xlu0 %v487
        %v489 = vpop.xlane.xlu0 %488
        %v490 = vsel %vm467, %v484, 0.0
        %491 = vadd.xlane.f32.xlu0 %v490
        %v492 = vpop.xlane.xlu0 %491
        %v493 = vsel %vm474, %v486, 0.0
        %494 = vadd.xlane.f32.xlu0 %v493
        %v495 = vpop.xlane.xlu0 %494
        %v496 = vpack.c.bf16 %v484, %v482
        %v497 = vpack.c.bf16 %v486, %v486
        %v501 = vunpack.c.l.b16 %v393
        %v502 = vunpack.c.l.b16 %v394
        %v503 = vunpack.c.l.b16 %v395
        %v504 = vpack.c.b16 %v502, %v501
        %v505 = vpack.c.b16 %v503, %v503
        %v508 = vsel %vm467, %v496, 0
        %v511 = vsel %vm467, %v497, 0
        %vm513 = vcmask 1040384
        %v514 = vsel 0, 4294967295, 65535
        %v515 = vsel %vm513, %v514, 0
        %v517 = vand.u32 %v505, %v515
        %519 = vmatprep.subr.bf16.mxu0 0
        %520 = vmatpush1.bf16.msra.mxu0 %v504
        %521 = vmatprep.subr.bf16.mxu0 0
        %522 = vmatpush1.bf16.msra.mxu0 %v517
        %523 = vmatprep.subr.bf16.mxu0 0
        %524 = vmatpush1.bf16.msra.mxu0 0
        %525 = vmatprep.subr.bf16.mxu0 0
        %526 = vmatpush1.bf16.msra.mxu0 0
        %527 = vmatprep.subr.bf16.mxu0 0
        %528 = vmatpush1.bf16.msra.mxu0 0
        %529 = vmatprep.subr.bf16.mxu0 0
        %530 = vmatpush1.bf16.msra.mxu0 0
        %531 = vmatprep.subr.bf16.mxu0 0
        %532 = vmatpush1.bf16.msra.mxu0 0
        %533 = vmatprep.subr.bf16.mxu0 0
        %534 = vmatpush1.bf16.msra.mxu0 0
        %535 = vmatprep.subr.bf16.mxu0 0
        %536 = vmatpush1.bf16.msra.mxu0 0
        %537 = vmatprep.subr.bf16.mxu0 0
        %538 = vmatpush1.bf16.msra.mxu0 0
        %539 = vmatprep.subr.bf16.mxu0 0
        %540 = vmatpush1.bf16.msra.mxu0 0
        %541 = vmatprep.subr.bf16.mxu0 0
        %542 = vmatpush1.bf16.msra.mxu0 0
        %543 = vmatprep.subr.bf16.mxu0 0
        %544 = vmatpush1.bf16.msra.mxu0 0
        %545 = vmatprep.subr.bf16.mxu0 0
        %546 = vmatpush1.bf16.msra.mxu0 0
        %547 = vmatprep.subr.bf16.mxu0 0
        %548 = vmatpush1.bf16.msra.mxu0 0
        %549 = vmatprep.subr.bf16.mxu0 0
        %550 = vmatpush1.bf16.msra.mxu0 0
        %551 = vmatprep.mubr.bf16.mxu0 0
        %552 = vmatmul.mubr.bf16.gmra.mrb[0].mxu0 %v508
        %v553 = vpop.f32.mrb[0].mxu0
        %v554 = vadd.f32 0.0, %v553
        %v555 = vpop.f32.mrb[0].mxu0
        %v556 = vpop.f32.mrb[0].mxu0
        %v557 = vadd.f32 0.0, %v556
        %v558 = vpop.f32.mrb[0].mxu0
        %559 = vmatprep.mubr.bf16.mxu0 0
        %560 = vmatmul.mubr.bf16.gmra.mrb[0].mxu0 %v511
        %v561 = vpop.f32.mrb[0].mxu0
        %v562 = vadd.f32 0.0, %v561
        %v563 = vpop.f32.mrb[0].mxu0
        %v564 = vpop.f32.mrb[0].mxu0
        %v565 = vpop.f32.mrb[0].mxu0
        %566 = vdwg.mxu0
        %v567 = vrcp.pop %v489
        %v568 = vrcp.pop %v492
        %v569 = vrcp.pop %v495
        %v570 = vmul.f32 %v554, %v567
        %v571 = vmul.f32 %v557, %v568
        %v572 = vmul.f32 %v562, %v569
        %v573 = vpack.c.bf16 %v571, %v570
        %v574 = vpack.c.bf16 %v572, %v572
        %v577 = vunpack.c.l.b16 %v573
        %v578 = vunpack.c.h.b16 %v573
        %v579 = vunpack.c.l.b16 %v574
        %v580 = vpack.c.b16 %v577, %v577
        %v581 = vpack.c.b16 %v578, %v578
        %v582 = vpack.c.b16 %v579, %v579
        %586 = vst [vmem:[%s383] sm:$0xf] %v580
        %587 = vst [vmem:[%s383 + $0x4] sm:$0xf] %v581
        %vm588 = vcmask 1040384
        %vm589 = vsmask.f32 256
        %vm590 = vmand %vm588, %vm589
        %v591 = vld [vmem:[%s383 + $0x8] sm:$0x1]
        %v592 = vsel %vm590, %v582, %v591
        %593 = vst [vmem:[%s383 + $0x8] sm:$0x1] %v592
        %s594 = sand.u32 %s124, 1
        %s595 = sand.u32 %s124, 1
        %s596 = smul.addr %s595, 12
        %s597 = scalar_lea.vmem [#allocation5], %s596
        // Predicated region
        $region156: #{clip_visual_forward.16} parent=142 // pred_check
          %p598 = pneg %p134
        $region157: #{clip_visual_forward.16} parent=142 // pred_check_branch
          %600 = sbr.rel (%p598) target = $region159
        $region158: #{clip_visual_forward.16} parent=142 // pred_region
          %s601 = smul.addr %s18, 6
          %s602 = sadd.s32 %s19, %s601
          %s603 = smul.addr %s602, 4
          %s604 = scalar_lea.vmem %s3, %s603
          // Predicated region
          $region160: #{clip_visual_forward.16} parent=158 // pred_check
            _
          $region161: #{clip_visual_forward.16} parent=158 // pred_check_branch
            %606 = sbr.rel (0) target = $region163
          $region162: #{clip_visual_forward.16} parent=158 // pred_region
            // Predicated region
            $region164: #{clip_visual_forward.16} parent=162 // pred_check
              _
            $region165: #{clip_visual_forward.16} parent=162 // pred_check_branch
              %608 = sbr.rel target = $region167
            $region166: #{clip_visual_forward.16} parent=162 // pred_region
              // Predicated region
              $region179: #{clip_visual_forward.16} parent=166 // pred_check
                _
              $region180: #{clip_visual_forward.16} parent=166 // pred_check_branch
                %627 = sbr.rel (0) target = $region182
              $region181: #{clip_visual_forward.16} parent=166 // pred_region
                loop: start=0, step=1, limit=1
                $region183: #{clip_visual_forward.16} parent=181 // loop_pre_header
                  _
                $region184: #{clip_visual_forward.16} parent=181 // loop_header
                  %s629 = sphi 0, %s633
                  %p630 = scmp.ge.s32.totalorder %s629, 1
                  %s634 = sphi %s597, %s597
                  %s635 = sphi %s604, %s604
                $region185: #{clip_visual_forward.16} parent=181 // loop_header_branch
                  %632 = sbr.rel (%p630) target = $region189
                $region186: #{clip_visual_forward.16} parent=181 // loop_body
                  _
                $region187: #{clip_visual_forward.16} parent=181 // loop_footer
                  %s633 = sadd.s32 1, %s629
                $region188: #{clip_visual_forward.16} parent=181 // loop_footer_branch
                  %628 = sbr.rel target = $region184
                $region189: #{clip_visual_forward.16} parent=181 // loop_exit
                  _
                loop: start=0, step=1, limit=1
                $region190: #{clip_visual_forward.16} parent=181 // loop_pre_header
                  _
                $region191: #{clip_visual_forward.16} parent=181 // loop_header
                  %s638 = sphi 0, %s642
                  %p639 = scmp.ge.s32.totalorder %s638, 1
                  %s643 = sphi %s597, %s597
                  %s644 = sphi %s604, %s604
                $region192: #{clip_visual_forward.16} parent=181 // loop_header_branch
                  %641 = sbr.rel (%p639) target = $region196
                $region193: #{clip_visual_forward.16} parent=181 // loop_body
                  %v645 = vld [vmem:[%s643] sm:$0xf]
                  %646 = vst [vmem:[%s644] sm:$0xf] %v645
                  %v647 = vld [vmem:[%s643 + $0x4] sm:$0xf]
                  %648 = vst [vmem:[%s644 + $0x8] sm:$0xf] %v647
                  %v649 = vld [vmem:[%s643 + $0x8] sm:$0xf]
                  %650 = vst [vmem:[%s644 + $0x10] sm:$0xf] %v649
                $region194: #{clip_visual_forward.16} parent=181 // loop_footer
                  %s642 = sadd.s32 1, %s638
                $region195: #{clip_visual_forward.16} parent=181 // loop_footer_branch
                  %637 = sbr.rel target = $region191
                $region196: #{clip_visual_forward.16} parent=181 // loop_exit
                  _
              $region182: #{clip_visual_forward.16} parent=166 // pred_fallthru
                _
            $region167: #{clip_visual_forward.16} parent=162 // pred_fallthru
              _
            // Predicated region
            $region168: #{clip_visual_forward.16} parent=162 // pred_check
              _
            $region169: #{clip_visual_forward.16} parent=162 // pred_check_branch
              %610 = sbr.rel (0) target = $region171
            $region170: #{clip_visual_forward.16} parent=162 // pred_region
              loop: start=0, step=1, limit=1
              $region172: #{clip_visual_forward.16} parent=170 // loop_pre_header
                _
              $region173: #{clip_visual_forward.16} parent=170 // loop_header
                %s613 = sphi 0, %s617
                %p614 = scmp.ge.s32.totalorder %s613, 1
                %s618 = sphi %s597, %s597
                %s619 = sphi %s604, %s604
              $region174: #{clip_visual_forward.16} parent=170 // loop_header_branch
                %616 = sbr.rel (%p614) target = $region178
              $region175: #{clip_visual_forward.16} parent=170 // loop_body
                %v620 = vld [vmem:[%s618] sm:$0xf]
                %621 = vst [vmem:[%s619] sm:$0xf] %v620
                %v622 = vld [vmem:[%s618 + $0x4] sm:$0xf]
                %623 = vst [vmem:[%s619 + $0x8] sm:$0xf] %v622
                %v624 = vld [vmem:[%s618 + $0x8] sm:$0xf]
                %625 = vst [vmem:[%s619 + $0x10] sm:$0xf] %v624
              $region176: #{clip_visual_forward.16} parent=170 // loop_footer
                %s617 = sadd.s32 1, %s613
              $region177: #{clip_visual_forward.16} parent=170 // loop_footer_branch
                %612 = sbr.rel target = $region173
              $region178: #{clip_visual_forward.16} parent=170 // loop_exit
                _
            $region171: #{clip_visual_forward.16} parent=162 // pred_fallthru
              _
          $region163: #{clip_visual_forward.16} parent=158 // pred_fallthru
            _
          %651 = vnop
        $region159: #{clip_visual_forward.16} parent=142 // pred_fallthru
          _
      $region143: #{clip_visual_forward.16} parent=5 // pred_fallthru
        _
      %p652 = scmp.le.s32.totalorder 2, %s9
      // Predicated region
      $region197: #{clip_visual_forward.16} parent=5 // pred_check
        %p653 = pneg %p652
      $region198: #{clip_visual_forward.16} parent=5 // pred_check_branch
        %655 = sbr.rel (%p653) target = $region200
      $region199: #{clip_visual_forward.16} parent=5 // pred_region
        %s656 = ssub.s32 %s9, 2
        // Predicated region
        $region201: #{clip_visual_forward.16} parent=199 // pred_check
          %p657 = pneg %p140
        $region202: #{clip_visual_forward.16} parent=199 // pred_check_branch
          %659 = sbr.rel (%p657) target = $region204
        $region203: #{clip_visual_forward.16} parent=199 // pred_region
          %s660 = sand.u32 %s125, 1
          %s661 = sand.u32 %s125, 1
          %s662 = smul.addr %s661, 12
          %s663 = scalar_lea.vmem [#allocation5], %s662
        $region204: #{clip_visual_forward.16} parent=199 // pred_fallthru
          _
      $region200: #{clip_visual_forward.16} parent=5 // pred_fallthru
        _
    $region6: #{clip_visual_forward.16} parent=1 // loop_footer
      %s13 = sadd.s32 1, %s9
    $region7: #{clip_visual_forward.16} parent=1 // loop_footer_branch
      %8 = sbr.rel target = $region3
    $region8: #{clip_visual_forward.16} parent=1 // loop_exit
      _

// kernel: clip_visual_forward.17
$region0: #{clip_visual_forward.17}
  #allocation0 [shape = 'u32[]', space=smem, size = 0x4, offset = 0x4, fixed_abs, tag = 'smem constant byte address 0x4 - core index']
  #allocation1 [shape = 'u32[144,128]{1,0:T(1,128)}', space=vmem, size = 0x12000, scoped, tag = 'internal scratch']
  %s0 = inlined_call_operand.vmem [shape: bf16[34,256], index: 0, kind: input, shape index: {}]
  %s1 = inlined_call_operand.vmem [shape: bf16[256,256], index: 1, kind: input, shape index: {}]
  %s2 = inlined_call_operand.vmem [shape: f32[1,256], index: 2, kind: input, shape index: {}]
  %s3 = inlined_call_operand.vmem [shape: f32[34,256], index: 3, kind: input, shape index: {}]
  %s4 = inlined_call_operand.vmem [shape: f32[34,256], index: 4, kind: output, shape index: {}]
  %s5 = sld [smem:[#allocation0]]
  $region26: #{clip_visual_forward.17} parent=0
    _
  %s7 = ssub.s32 1, %s5
  %s8 = scalar_select 0, %s7, %s5
  // Predicated region
  $region2: #{clip_visual_forward.17} parent=0 // pred_check
    _
  $region3: #{clip_visual_forward.17} parent=0 // pred_check_branch
    %10 = sbr.rel (0) target = $region5
  $region4: #{clip_visual_forward.17} parent=0 // pred_region
    _
  $region5: #{clip_visual_forward.17} parent=0 // pred_fallthru
    _
  // Predicated region
  $region6: #{clip_visual_forward.17} parent=0 // pred_check
    _
  $region7: #{clip_visual_forward.17} parent=0 // pred_check_branch
    %12 = sbr.rel (0) target = $region9
  $region8: #{clip_visual_forward.17} parent=0 // pred_region
    _
  $region9: #{clip_visual_forward.17} parent=0 // pred_fallthru
    _
  // Predicated region
  $region10: #{clip_visual_forward.17} parent=0 // pred_check
    _
  $region11: #{clip_visual_forward.17} parent=0 // pred_check_branch
    %14 = sbr.rel (0) target = $region13
  $region12: #{clip_visual_forward.17} parent=0 // pred_region
    _
  $region13: #{clip_visual_forward.17} parent=0 // pred_fallthru
    _
  // Predicated region
  $region14: #{clip_visual_forward.17} parent=0 // pred_check
    _
  $region15: #{clip_visual_forward.17} parent=0 // pred_check_branch
    %16 = sbr.rel (0) target = $region17
  $region16: #{clip_visual_forward.17} parent=0 // pred_region
    _
  $region17: #{clip_visual_forward.17} parent=0 // pred_fallthru
    _
  %v17 = vld [vmem:[%s0] sm:$0xff]
  %v18 = vld [vmem:[%s0 + $0x8] sm:$0xff]
  %v19 = vld [vmem:[%s0 + $0x10] sm:$0xff]
  %v20 = vld [vmem:[%s0 + $0x18] sm:$0xff]
  %v21 = vld [vmem:[%s0 + $0x20] sm:$0x11]
  %v22 = vld [vmem:[%s1] sm:$0xff]
  %v23 = vld [vmem:[%s1 + $0x8] sm:$0xff]
  %v24 = vld [vmem:[%s1 + $0x10] sm:$0xff]
  %v25 = vld [vmem:[%s1 + $0x18] sm:$0xff]
  %v26 = vld [vmem:[%s1 + $0x20] sm:$0xff]
  %v27 = vld [vmem:[%s1 + $0x28] sm:$0xff]
  %v28 = vld [vmem:[%s1 + $0x30] sm:$0xff]
  %v29 = vld [vmem:[%s1 + $0x38] sm:$0xff]
  %v30 = vld [vmem:[%s1 + $0x40] sm:$0xff]
  %v31 = vld [vmem:[%s1 + $0x48] sm:$0xff]
  %v32 = vld [vmem:[%s1 + $0x50] sm:$0xff]
  %v33 = vld [vmem:[%s1 + $0x58] sm:$0xff]
  %v34 = vld [vmem:[%s1 + $0x60] sm:$0xff]
  %v35 = vld [vmem:[%s1 + $0x68] sm:$0xff]
  %v36 = vld [vmem:[%s1 + $0x70] sm:$0xff]
  %v37 = vld [vmem:[%s1 + $0x78] sm:$0xff]
  %v38 = vld [vmem:[%s1 + $0x80] sm:$0xff]
  %v39 = vld [vmem:[%s1 + $0x88] sm:$0xff]
  %v40 = vld [vmem:[%s1 + $0x90] sm:$0xff]
  %v41 = vld [vmem:[%s1 + $0x98] sm:$0xff]
  %v42 = vld [vmem:[%s1 + $0xa0] sm:$0xff]
  %v43 = vld [vmem:[%s1 + $0xa8] sm:$0xff]
  %v44 = vld [vmem:[%s1 + $0xb0] sm:$0xff]
  %v45 = vld [vmem:[%s1 + $0xb8] sm:$0xff]
  %v46 = vld [vmem:[%s1 + $0xc0] sm:$0xff]
  %v47 = vld [vmem:[%s1 + $0xc8] sm:$0xff]
  %v48 = vld [vmem:[%s1 + $0xd0] sm:$0xff]
  %v49 = vld [vmem:[%s1 + $0xd8] sm:$0xff]
  %v50 = vld [vmem:[%s1 + $0xe0] sm:$0xff]
  %v51 = vld [vmem:[%s1 + $0xe8] sm:$0xff]
  %v52 = vld [vmem:[%s1 + $0xf0] sm:$0xff]
  %v53 = vld [vmem:[%s1 + $0xf8] sm:$0xff]
  %v54 = vld [vmem:[%s2] sm:$0x3]
  %v56 = vlaneseq
  %v57 = vshrl.u32 %v56, 7
  %v58 = vsub.s32 0, %v57
  %v59 = vrot.slane %v54, %v58
  %v60 = vlaneseq
  %v61 = vshrl.u32 %v60, 7
  %v62 = vsub.s32 1, %v61
  %v63 = vrot.slane %v54, %v62
  %v71 = vunpack.c.l.b16 %v17
  %v72 = vunpack.c.h.b16 %v17
  %v73 = vunpack.c.l.b16 %v18
  %v74 = vunpack.c.h.b16 %v18
  %v75 = vunpack.c.l.b16 %v19
  %v76 = vunpack.c.h.b16 %v19
  %v77 = vunpack.c.l.b16 %v20
  %v78 = vunpack.c.h.b16 %v20
  %v79 = vunpack.c.l.b16 %v21
  %v80 = vunpack.c.h.b16 %v21
  %v81 = vpack.c.b16 %v73, %v71
  %v82 = vpack.c.b16 %v74, %v72
  %v83 = vpack.c.b16 %v77, %v75
  %v84 = vpack.c.b16 %v78, %v76
  %v85 = vpack.c.b16 %v79, %v79
  %v86 = vpack.c.b16 %v80, %v80
  %v125 = vunpack.c.l.b16 %v22
  %v126 = vunpack.c.h.b16 %v22
  %v127 = vunpack.c.l.b16 %v23
  %v128 = vunpack.c.h.b16 %v23
  %v129 = vunpack.c.l.b16 %v24
  %v130 = vunpack.c.h.b16 %v24
  %v131 = vunpack.c.l.b16 %v25
  %v132 = vunpack.c.h.b16 %v25
  %v133 = vunpack.c.l.b16 %v26
  %v134 = vunpack.c.h.b16 %v26
  %v135 = vunpack.c.l.b16 %v27
  %v136 = vunpack.c.h.b16 %v27
  %v137 = vunpack.c.l.b16 %v28
  %v138 = vunpack.c.h.b16 %v28
  %v139 = vunpack.c.l.b16 %v29
  %v140 = vunpack.c.h.b16 %v29
  %v141 = vunpack.c.l.b16 %v30
  %v142 = vunpack.c.h.b16 %v30
  %v143 = vunpack.c.l.b16 %v31
  %v144 = vunpack.c.h.b16 %v31
  %v145 = vunpack.c.l.b16 %v32
  %v146 = vunpack.c.h.b16 %v32
  %v147 = vunpack.c.l.b16 %v33
  %v148 = vunpack.c.h.b16 %v33
  %v149 = vunpack.c.l.b16 %v34
  %v150 = vunpack.c.h.b16 %v34
  %v151 = vunpack.c.l.b16 %v35
  %v152 = vunpack.c.h.b16 %v35
  %v153 = vunpack.c.l.b16 %v36
  %v154 = vunpack.c.h.b16 %v36
  %v155 = vunpack.c.l.b16 %v37
  %v156 = vunpack.c.h.b16 %v37
  %v157 = vunpack.c.l.b16 %v38
  %v158 = vunpack.c.h.b16 %v38
  %v159 = vunpack.c.l.b16 %v39
  %v160 = vunpack.c.h.b16 %v39
  %v161 = vunpack.c.l.b16 %v40
  %v162 = vunpack.c.h.b16 %v40
  %v163 = vunpack.c.l.b16 %v41
  %v164 = vunpack.c.h.b16 %v41
  %v165 = vunpack.c.l.b16 %v42
  %v166 = vunpack.c.h.b16 %v42
  %v167 = vunpack.c.l.b16 %v43
  %v168 = vunpack.c.h.b16 %v43
  %v169 = vunpack.c.l.b16 %v44
  %v170 = vunpack.c.h.b16 %v44
  %v171 = vunpack.c.l.b16 %v45
  %v172 = vunpack.c.h.b16 %v45
  %v173 = vunpack.c.l.b16 %v46
  %v174 = vunpack.c.h.b16 %v46
  %v175 = vunpack.c.l.b16 %v47
  %v176 = vunpack.c.h.b16 %v47
  %v177 = vunpack.c.l.b16 %v48
  %v178 = vunpack.c.h.b16 %v48
  %v179 = vunpack.c.l.b16 %v49
  %v180 = vunpack.c.h.b16 %v49
  %v181 = vunpack.c.l.b16 %v50
  %v182 = vunpack.c.h.b16 %v50
  %v183 = vunpack.c.l.b16 %v51
  %v184 = vunpack.c.h.b16 %v51
  %v185 = vunpack.c.l.b16 %v52
  %v186 = vunpack.c.h.b16 %v52
  %v187 = vunpack.c.l.b16 %v53
  %v188 = vunpack.c.h.b16 %v53
  %v189 = vpack.c.b16 %v127, %v125
  %v190 = vpack.c.b16 %v128, %v126
  %v191 = vpack.c.b16 %v131, %v129
  %v192 = vpack.c.b16 %v132, %v130
  %v193 = vpack.c.b16 %v135, %v133
  %v194 = vpack.c.b16 %v136, %v134
  %v195 = vpack.c.b16 %v139, %v137
  %v196 = vpack.c.b16 %v140, %v138
  %v197 = vpack.c.b16 %v143, %v141
  %v198 = vpack.c.b16 %v144, %v142
  %v199 = vpack.c.b16 %v147, %v145
  %v200 = vpack.c.b16 %v148, %v146
  %v201 = vpack.c.b16 %v151, %v149
  %v202 = vpack.c.b16 %v152, %v150
  %v203 = vpack.c.b16 %v155, %v153
  %v204 = vpack.c.b16 %v156, %v154
  %v205 = vpack.c.b16 %v159, %v157
  %v206 = vpack.c.b16 %v160, %v158
  %v207 = vpack.c.b16 %v163, %v161
  %v208 = vpack.c.b16 %v164, %v162
  %v209 = vpack.c.b16 %v167, %v165
  %v210 = vpack.c.b16 %v168, %v166
  %v211 = vpack.c.b16 %v171, %v169
  %v212 = vpack.c.b16 %v172, %v170
  %v213 = vpack.c.b16 %v175, %v173
  %v214 = vpack.c.b16 %v176, %v174
  %v215 = vpack.c.b16 %v179, %v177
  %v216 = vpack.c.b16 %v180, %v178
  %v217 = vpack.c.b16 %v183, %v181
  %v218 = vpack.c.b16 %v184, %v182
  %v219 = vpack.c.b16 %v187, %v185
  %v220 = vpack.c.b16 %v188, %v186
  %253 = vmatprep.subr.bf16.mxu0 %v190
  %254 = vmatpush1.bf16.msra.mxu0 %v189
  %255 = vmatprep.subr.bf16.mxu0 %v192
  %256 = vmatpush1.bf16.msra.mxu0 %v191
  %257 = vmatprep.subr.bf16.mxu0 %v194
  %258 = vmatpush1.bf16.msra.mxu0 %v193
  %259 = vmatprep.subr.bf16.mxu0 %v196
  %260 = vmatpush1.bf16.msra.mxu0 %v195
  %261 = vmatprep.subr.bf16.mxu0 %v198
  %262 = vmatpush1.bf16.msra.mxu0 %v197
  %263 = vmatprep.subr.bf16.mxu0 %v200
  %264 = vmatpush1.bf16.msra.mxu0 %v199
  %265 = vmatprep.subr.bf16.mxu0 %v202
  %266 = vmatpush1.bf16.msra.mxu0 %v201
  %267 = vmatprep.subr.bf16.mxu0 %v204
  %268 = vmatpush1.bf16.msra.mxu0 %v203
  %269 = vmatprep.subr.bf16.mxu0 %v206
  %270 = vmatpush1.bf16.msra.mxu0 %v205
  %271 = vmatprep.subr.bf16.mxu0 %v208
  %272 = vmatpush1.bf16.msra.mxu0 %v207
  %273 = vmatprep.subr.bf16.mxu0 %v210
  %274 = vmatpush1.bf16.msra.mxu0 %v209
  %275 = vmatprep.subr.bf16.mxu0 %v212
  %276 = vmatpush1.bf16.msra.mxu0 %v211
  %277 = vmatprep.subr.bf16.mxu0 %v214
  %278 = vmatpush1.bf16.msra.mxu0 %v213
  %279 = vmatprep.subr.bf16.mxu0 %v216
  %280 = vmatpush1.bf16.msra.mxu0 %v215
  %281 = vmatprep.subr.bf16.mxu0 %v218
  %282 = vmatpush1.bf16.msra.mxu0 %v217
  %283 = vmatprep.subr.bf16.mxu0 %v220
  %284 = vmatpush1.bf16.msra.mxu0 %v219
  %285 = vmatprep.mubr.bf16.mxu0 %v82
  %286 = vmatmul.mubr.bf16.gmra.mrb[0].mxu0 %v81
  %v287 = vpop.f32.mrb[0].mxu0
  %v288 = vadd.f32 %v59, %v287
  %v289 = vpop.f32.mrb[0].mxu0
  %v290 = vadd.f32 %v63, %v289
  %v291 = vpop.f32.mrb[0].mxu0
  %v292 = vadd.f32 %v59, %v291
  %v293 = vpop.f32.mrb[0].mxu0
  %v294 = vadd.f32 %v63, %v293
  %295 = vmatprep.mubr.bf16.mxu0 %v84
  %296 = vmatmul.mubr.bf16.gmra.mrb[0].mxu0 %v83
  %v297 = vpop.f32.mrb[0].mxu0
  %v298 = vadd.f32 %v59, %v297
  %v299 = vpop.f32.mrb[0].mxu0
  %v300 = vadd.f32 %v63, %v299
  %v301 = vpop.f32.mrb[0].mxu0
  %v302 = vadd.f32 %v59, %v301
  %v303 = vpop.f32.mrb[0].mxu0
  %v304 = vadd.f32 %v63, %v303
  %305 = vmatprep.mubr.bf16.mxu0 %v86
  %306 = vmatmul.mubr.bf16.gmra.mrb[0].mxu0 %v85
  %v307 = vpop.f32.mrb[0].mxu0
  %v308 = vadd.f32 %v59, %v307
  %v309 = vpop.f32.mrb[0].mxu0
  %v310 = vadd.f32 %v63, %v309
  %v311 = vpop.f32.mrb[0].mxu0
  %v312 = vpop.f32.mrb[0].mxu0
  %313 = vdwg.mxu0
  %v314 = vld [vmem:[%s3] sm:$0xff]
  %v315 = vld [vmem:[%s3 + $0x8] sm:$0xff]
  %v316 = vld [vmem:[%s3 + $0x10] sm:$0xff]
  %v317 = vld [vmem:[%s3 + $0x18] sm:$0xff]
  %v318 = vld [vmem:[%s3 + $0x20] sm:$0xff]
  %v319 = vld [vmem:[%s3 + $0x28] sm:$0xff]
  %v320 = vld [vmem:[%s3 + $0x30] sm:$0xff]
  %v321 = vld [vmem:[%s3 + $0x38] sm:$0xff]
  %v322 = vld [vmem:[%s3 + $0x40] sm:$0x3]
  %v323 = vld [vmem:[%s3 + $0x48] sm:$0x3]
  %v324 = vadd.f32 %v288, %v314
  %v325 = vadd.f32 %v290, %v315
  %v326 = vadd.f32 %v292, %v316
  %v327 = vadd.f32 %v294, %v317
  %v328 = vadd.f32 %v298, %v318
  %v329 = vadd.f32 %v300, %v319
  %v330 = vadd.f32 %v302, %v320
  %v331 = vadd.f32 %v304, %v321
  %v332 = vadd.f32 %v308, %v322
  %v333 = vadd.f32 %v310, %v323
  %334 = vst [vmem:[%s4] sm:$0xff] %v324
  %335 = vst [vmem:[%s4 + $0x8] sm:$0xff] %v325
  %336 = vst [vmem:[%s4 + $0x10] sm:$0xff] %v326
  %337 = vst [vmem:[%s4 + $0x18] sm:$0xff] %v327
  %338 = vst [vmem:[%s4 + $0x20] sm:$0xff] %v328
  %339 = vst [vmem:[%s4 + $0x28] sm:$0xff] %v329
  %340 = vst [vmem:[%s4 + $0x30] sm:$0xff] %v330
  %341 = vst [vmem:[%s4 + $0x38] sm:$0xff] %v331
  %342 = vst [vmem:[%s4 + $0x40] sm:$0x3] %v332
  %343 = vst [vmem:[%s4 + $0x48] sm:$0x3] %v333
  // Predicated region
  $region18: #{clip_visual_forward.17} parent=0 // pred_check
    _
  $region19: #{clip_visual_forward.17} parent=0 // pred_check_branch
    %345 = sbr.rel (0) target = $region21
  $region20: #{clip_visual_forward.17} parent=0 // pred_region
    _
  $region21: #{clip_visual_forward.17} parent=0 // pred_fallthru
    _
  // Predicated region
  $region22: #{clip_visual_forward.17} parent=0 // pred_check
    _
  $region23: #{clip_visual_forward.17} parent=0 // pred_check_branch
    %347 = sbr.rel (0) target = $region25
  $region24: #{clip_visual_forward.17} parent=0 // pred_region
    _
  $region25: #{clip_visual_forward.17} parent=0 // pred_fallthru
    _

// kernel: clip_visual_forward.18
$region0: #{clip_visual_forward.18}
  #allocation0 [shape = 'u32[]', space=smem, size = 0x4, offset = 0x4, fixed_abs, tag = 'smem constant byte address 0x4 - core index']
  #allocation1 [shape = 'u32[144,128]{1,0:T(1,128)}', space=vmem, size = 0x12000, scoped, tag = 'internal scratch']
  %s0 = inlined_call_operand.vmem [shape: f32[34,256], index: 0, kind: input, shape index: {}]
  %s1 = inlined_call_operand.vmem [shape: bf16[256,1024], index: 1, kind: input, shape index: {}]
  %s2 = inlined_call_operand.vmem [shape: f32[1,1024], index: 2, kind: input, shape index: {}]
  %s3 = inlined_call_operand.vmem [shape: f32[1,256], index: 3, kind: input, shape index: {}]
  %s4 = inlined_call_operand.vmem [shape: f32[1,256], index: 4, kind: input, shape index: {}]
  %s5 = inlined_call_operand.vmem [shape: bf16[34,1024], index: 5, kind: output, shape index: {}]
  %s6 = sld [smem:[#allocation0]]
  $region125: #{clip_visual_forward.18} parent=0
    _
  %s8 = ssub.s32 1, %s6
  %s9 = scalar_select 0, %s8, %s6
  $region1: #{clip_visual_forward.18} parent=0
    #allocation2 [shape = 'u8[262144]{0}', space=vmem, size = 0x40000, scoped, tag = 'input window, operand 1']
    #allocation3 [shape = 'u8[40960]{0}', space=vmem, size = 0xa000, scoped, tag = 'output window, operand 0']
    loop: start=0, step=1, limit=6
    $region2: #{clip_visual_forward.18} parent=1 // loop_pre_header
      _
    $region3: #{clip_visual_forward.18} parent=1 // loop_header
      %s11 = sphi 0, %s15
      %p12 = scmp.ge.s32.totalorder %s11, 6
      %s18 = sphi 0, %s30
      %s19 = sphi 0, %s26
      %s20 = sphi 0, %s18
      %s21 = sphi 0, %s19
      %s22 = sphi 0, %s20
      %s23 = sphi 0, %s21
      %s33 = sphi 0, %s35
      %s36 = sphi 0, %s33
      %s37 = sphi 0, %s36
      %s53 = sphi 0, %s37
      %s59 = sphi 0, %s61
      %s62 = sphi 0, %s59
      %s63 = sphi 0, %s62
      %s79 = sphi 0, %s63
      %s85 = sphi 0, %s87
      %s88 = sphi 0, %s85
      %s89 = sphi 0, %s88
      %s105 = sphi 0, %s89
      %s109 = sphi 0, %s109
      %s111 = sphi 0, %s109
      %s112 = sphi 0, %s111
      %s126 = sphi 0, %s112
      %s130 = sphi 0, %s130
      %s132 = sphi 0, %s130
      %s133 = sphi 0, %s132
      %s147 = sphi 0, %s133
      %s155 = sphi 0, %s157
      %s158 = sphi 0, %s155
      %s159 = sphi 0, %s158
      %s175 = sphi 0, %s159
    $region4: #{clip_visual_forward.18} parent=1 // loop_header_branch
      %14 = sbr.rel (%p12) target = $region8
    $region5: #{clip_visual_forward.18} parent=1 // loop_body
      %s16 = ssub.s32 %s11, 1
      %s17 = ssub.s32 %s11, 2
      %s24 = sadd.s32 1, %s19
      %p25 = scmp.ge.s32.totalorder %s24, 4
      %s26 = scalar_select %p25, 0, %s24
      %s27 = sadd.s32 1, %s18
      %s28 = scalar_select %p25, %s27, %s18
      %p29 = scmp.ge.s32.totalorder %s28, 1
      %s30 = scalar_select %p29, 0, %s28
      %s31 = ssub.s32 %s18, %s30
      %p32 = scmp.eq.s32.totalorder %s31, 0
      %s34 = sadd.s32 %s33, 1
      %s35 = scalar_select %p32, %s33, %s34
      %p38 = pneg %p32
      %p39 = scmp.eq.s32.totalorder %s11, 3
      %p40 = por %p38, %p39
      %p41 = scmp.ne.s32.totalorder %s33, %s36
      %p42 = scmp.eq.s32.totalorder %s11, 0
      %p43 = por %p41, %p42
      %p44 = scmp.ne.s32.totalorder %s33, %s36
      %p45 = scmp.eq.s32.totalorder %s16, 3
      %p46 = por %p44, %p45
      %p47 = scmp.ne.s32.totalorder %s36, %s37
      %p48 = scmp.eq.s32.totalorder %s16, 0
      %p49 = por %p47, %p48
      %p50 = scmp.ne.s32.totalorder %s36, %s37
      %p51 = scmp.eq.s32.totalorder %s17, 3
      %p52 = por %p50, %p51
      %p54 = scmp.ne.s32.totalorder %s37, %s53
      %p55 = scmp.eq.s32.totalorder %s17, 0
      %p56 = por %p54, %p55
      %s57 = ssub.s32 %s19, %s26
      %p58 = scmp.eq.s32.totalorder %s57, 0
      %s60 = sadd.s32 %s59, 1
      %s61 = scalar_select %p58, %s59, %s60
      %p64 = pneg %p58
      %p65 = scmp.eq.s32.totalorder %s11, 3
      %p66 = por %p64, %p65
      %p67 = scmp.ne.s32.totalorder %s59, %s62
      %p68 = scmp.eq.s32.totalorder %s11, 0
      %p69 = por %p67, %p68
      %p70 = scmp.ne.s32.totalorder %s59, %s62
      %p71 = scmp.eq.s32.totalorder %s16, 3
      %p72 = por %p70, %p71
      %p73 = scmp.ne.s32.totalorder %s62, %s63
      %p74 = scmp.eq.s32.totalorder %s16, 0
      %p75 = por %p73, %p74
      %p76 = scmp.ne.s32.totalorder %s62, %s63
      %p77 = scmp.eq.s32.totalorder %s17, 3
      %p78 = por %p76, %p77
      %p80 = scmp.ne.s32.totalorder %s63, %s79
      %p81 = scmp.eq.s32.totalorder %s17, 0
      %p82 = por %p80, %p81
      %s83 = ssub.s32 %s19, %s26
      %p84 = scmp.eq.s32.totalorder %s83, 0
      %s86 = sadd.s32 %s85, 1
      %s87 = scalar_select %p84, %s85, %s86
      %p90 = pneg %p84
      %p91 = scmp.eq.s32.totalorder %s11, 3
      %p92 = por %p90, %p91
      %p93 = scmp.ne.s32.totalorder %s85, %s88
      %p94 = scmp.eq.s32.totalorder %s11, 0
      %p95 = por %p93, %p94
      %p96 = scmp.ne.s32.totalorder %s85, %s88
      %p97 = scmp.eq.s32.totalorder %s16, 3
      %p98 = por %p96, %p97
      %p99 = scmp.ne.s32.totalorder %s88, %s89
      %p100 = scmp.eq.s32.totalorder %s16, 0
      %p101 = por %p99, %p100
      %p102 = scmp.ne.s32.totalorder %s88, %s89
      %p103 = scmp.eq.s32.totalorder %s17, 3
      %p104 = por %p102, %p103
      %p106 = scmp.ne.s32.totalorder %s89, %s105
      %p107 = scmp.eq.s32.totalorder %s17, 0
      %p108 = por %p106, %p107
      %s110 = sadd.s32 %s109, 1
      %p113 = scmp.eq.s32.totalorder %s11, 3
      %p114 = scmp.ne.s32.totalorder %s109, %s111
      %p115 = scmp.eq.s32.totalorder %s11, 0
      %p116 = por %p114, %p115
      %p117 = scmp.ne.s32.totalorder %s109, %s111
      %p118 = scmp.eq.s32.totalorder %s16, 3
      %p119 = por %p117, %p118
      %p120 = scmp.ne.s32.totalorder %s111, %s112
      %p121 = scmp.eq.s32.totalorder %s16, 0
      %p122 = por %p120, %p121
      %p123 = scmp.ne.s32.totalorder %s111, %s112
      %p124 = scmp.eq.s32.totalorder %s17, 3
      %p125 = por %p123, %p124
      %p127 = scmp.ne.s32.totalorder %s112, %s126
      %p128 = scmp.eq.s32.totalorder %s17, 0
      %p129 = por %p127, %p128
      %s131 = sadd.s32 %s130, 1
      %p134 = scmp.eq.s32.totalorder %s11, 3
      %p135 = scmp.ne.s32.totalorder %s130, %s132
      %p136 = scmp.eq.s32.totalorder %s11, 0
      %p137 = por %p135, %p136
      %p138 = scmp.ne.s32.totalorder %s130, %s132
      %p139 = scmp.eq.s32.totalorder %s16, 3
      %p140 = por %p138, %p139
      %p141 = scmp.ne.s32.totalorder %s132, %s133
      %p142 = scmp.eq.s32.totalorder %s16, 0
      %p143 = por %p141, %p142
      %p144 = scmp.ne.s32.totalorder %s132, %s133
      %p145 = scmp.eq.s32.totalorder %s17, 3
      %p146 = por %p144, %p145
      %p148 = scmp.ne.s32.totalorder %s133, %s147
      %p149 = scmp.eq.s32.totalorder %s17, 0
      %p150 = por %p148, %p149
      %s151 = ssub.s32 %s18, %s30
      %s152 = ssub.s32 %s19, %s26
      %s153 = sor.u32 %s151, %s152
      %p154 = scmp.eq.s32.totalorder %s153, 0
      %s156 = sadd.s32 %s155, 1
      %s157 = scalar_select %p154, %s155, %s156
      %p160 = pneg %p154
      %p161 = scmp.eq.s32.totalorder %s11, 3
      %p162 = por %p160, %p161
      %p163 = scmp.ne.s32.totalorder %s155, %s158
      %p164 = scmp.eq.s32.totalorder %s11, 0
      %p165 = por %p163, %p164
      %p166 = scmp.ne.s32.totalorder %s155, %s158
      %p167 = scmp.eq.s32.totalorder %s16, 3
      %p168 = por %p166, %p167
      %p169 = scmp.ne.s32.totalorder %s158, %s159
      %p170 = scmp.eq.s32.totalorder %s16, 0
      %p171 = por %p169, %p170
      %p172 = scmp.ne.s32.totalorder %s158, %s159
      %p173 = scmp.eq.s32.totalorder %s17, 3
      %p174 = por %p172, %p173
      %p176 = scmp.ne.s32.totalorder %s159, %s175
      %p177 = scmp.eq.s32.totalorder %s17, 0
      %p178 = por %p176, %p177
      %p179 = scmp.le.s32.totalorder 1, %s11
      %p180 = scmp.lt.s32.totalorder %s11, 5
      %p181 = pnand %p179, %p180
      %p182 = pneg %p181
      // Predicated region
      $region9: #{clip_visual_forward.18} parent=5 // pred_check
        _
      $region10: #{clip_visual_forward.18} parent=5 // pred_check_branch
        %184 = sbr.rel (%p181) target = $region12
      $region11: #{clip_visual_forward.18} parent=5 // pred_region
        %s185 = ssub.s32 %s11, 1
        // Predicated region
        $region13: #{clip_visual_forward.18} parent=11 // pred_check
          %p186 = pneg %p49
        $region14: #{clip_visual_forward.18} parent=11 // pred_check_branch
          %188 = sbr.rel (%p186) target = $region16
        $region15: #{clip_visual_forward.18} parent=11 // pred_region
          %s189 = smul.u32 5, %s20
          %p190 = scmp.lt.s32.totalorder %s189, 4
          %s191 = scalar_select %p190, %s189, 4
          %s192 = smul.addr %s191, 2
          %s193 = smul.addr %s192, 8
          %s194 = scalar_lea.vmem %s0, %s193
          %s195 = smul.u32 5, %s20
        $region16: #{clip_visual_forward.18} parent=11 // pred_fallthru
          _
        // Predicated region
        $region17: #{clip_visual_forward.18} parent=11 // pred_check
          %p196 = pneg %p122
        $region18: #{clip_visual_forward.18} parent=11 // pred_check_branch
          %198 = sbr.rel (%p196) target = $region20
        $region19: #{clip_visual_forward.18} parent=11 // pred_region
          _
        $region20: #{clip_visual_forward.18} parent=11 // pred_fallthru
          _
        // Predicated region
        $region21: #{clip_visual_forward.18} parent=11 // pred_check
          %p199 = pneg %p143
        $region22: #{clip_visual_forward.18} parent=11 // pred_check_branch
          %201 = sbr.rel (%p199) target = $region24
        $region23: #{clip_visual_forward.18} parent=11 // pred_region
          _
        $region24: #{clip_visual_forward.18} parent=11 // pred_fallthru
          _
      $region12: #{clip_visual_forward.18} parent=5 // pred_fallthru
        _
      %p202 = scmp.lt.s32.totalorder %s11, 4
      // Predicated region
      $region25: #{clip_visual_forward.18} parent=5 // pred_check
        %p203 = pneg %p202
      $region26: #{clip_visual_forward.18} parent=5 // pred_check_branch
        %205 = sbr.rel (%p203) target = $region28
      $region27: #{clip_visual_forward.18} parent=5 // pred_region
        // Predicated region
        $region29: #{clip_visual_forward.18} parent=27 // pred_check
          %p206 = pneg %p69
        $region30: #{clip_visual_forward.18} parent=27 // pred_check_branch
          %208 = sbr.rel (%p206) target = $region32
        $region31: #{clip_visual_forward.18} parent=27 // pred_region
          %s209 = sand.u32 %s59, 1
          %s210 = sand.u32 %s59, 1
          %s211 = smul.addr %s210, 256
          %s212 = scalar_lea.vmem [#allocation2], %s211
          %s213 = smul.u32 2, %s19
          %s214 = smul.addr %s213, 4
          %s215 = scalar_lea.vmem %s1, %s214
          // Predicated region
          $region33: #{clip_visual_forward.18} parent=31 // pred_check
            _
          $region34: #{clip_visual_forward.18} parent=31 // pred_check_branch
            %217 = sbr.rel (0) target = $region36
          $region35: #{clip_visual_forward.18} parent=31 // pred_region
            // Predicated region
            $region37: #{clip_visual_forward.18} parent=35 // pred_check
              _
            $region38: #{clip_visual_forward.18} parent=35 // pred_check_branch
              %219 = sbr.rel (0) target = $region40
            $region39: #{clip_visual_forward.18} parent=35 // pred_region
              // Predicated region
              $region52: #{clip_visual_forward.18} parent=39 // pred_check
                _
              $region53: #{clip_visual_forward.18} parent=39 // pred_check_branch
                %296 = sbr.rel (0) target = $region55
              $region54: #{clip_visual_forward.18} parent=39 // pred_region
                loop: start=0, step=1, limit=1
                $region56: #{clip_visual_forward.18} parent=54 // loop_pre_header
                  _
                $region57: #{clip_visual_forward.18} parent=54 // loop_header
                  %s298 = sphi 0, %s302
                  %p299 = scmp.ge.s32.totalorder %s298, 1
                  %s303 = sphi %s215, %s215
                  %s304 = sphi %s212, %s212
                $region58: #{clip_visual_forward.18} parent=54 // loop_header_branch
                  %301 = sbr.rel (%p299) target = $region62
                $region59: #{clip_visual_forward.18} parent=54 // loop_body
                  %v305 = vld [vmem:[%s303] sm:$0xff]
                  %306 = vst [vmem:[%s304] sm:$0xff] %v305
                  %v307 = vld [vmem:[%s303 + $0x20] sm:$0xff]
                  %308 = vst [vmem:[%s304 + $0x8] sm:$0xff] %v307
                  %v309 = vld [vmem:[%s303 + $0x40] sm:$0xff]
                  %310 = vst [vmem:[%s304 + $0x10] sm:$0xff] %v309
                  %v311 = vld [vmem:[%s303 + $0x60] sm:$0xff]
                  %312 = vst [vmem:[%s304 + $0x18] sm:$0xff] %v311
                  %v313 = vld [vmem:[%s303 + $0x80] sm:$0xff]
                  %314 = vst [vmem:[%s304 + $0x20] sm:$0xff] %v313
                  %v315 = vld [vmem:[%s303 + $0xa0] sm:$0xff]
                  %316 = vst [vmem:[%s304 + $0x28] sm:$0xff] %v315
                  %v317 = vld [vmem:[%s303 + $0xc0] sm:$0xff]
                  %318 = vst [vmem:[%s304 + $0x30] sm:$0xff] %v317
                  %v319 = vld [vmem:[%s303 + $0xe0] sm:$0xff]
                  %320 = vst [vmem:[%s304 + $0x38] sm:$0xff] %v319
                  %v321 = vld [vmem:[%s303 + $0x100] sm:$0xff]
                  %322 = vst [vmem:[%s304 + $0x40] sm:$0xff] %v321
                  %v323 = vld [vmem:[%s303 + $0x120] sm:$0xff]
                  %324 = vst [vmem:[%s304 + $0x48] sm:$0xff] %v323
                  %v325 = vld [vmem:[%s303 + $0x140] sm:$0xff]
                  %326 = vst [vmem:[%s304 + $0x50] sm:$0xff] %v325
                  %v327 = vld [vmem:[%s303 + $0x160] sm:$0xff]
                  %328 = vst [vmem:[%s304 + $0x58] sm:$0xff] %v327
                  %v329 = vld [vmem:[%s303 + $0x180] sm:$0xff]
                  %330 = vst [vmem:[%s304 + $0x60] sm:$0xff] %v329
                  %v331 = vld [vmem:[%s303 + $0x1a0] sm:$0xff]
                  %332 = vst [vmem:[%s304 + $0x68] sm:$0xff] %v331
                  %v333 = vld [vmem:[%s303 + $0x1c0] sm:$0xff]
                  %334 = vst [vmem:[%s304 + $0x70] sm:$0xff] %v333
                  %v335 = vld [vmem:[%s303 + $0x1e0] sm:$0xff]
                  %336 = vst [vmem:[%s304 + $0x78] sm:$0xff] %v335
                  %v337 = vld [vmem:[%s303 + $0x200] sm:$0xff]
                  %338 = vst [vmem:[%s304 + $0x80] sm:$0xff] %v337
                  %v339 = vld [vmem:[%s303 + $0x220] sm:$0xff]
                  %340 = vst [vmem:[%s304 + $0x88] sm:$0xff] %v339
                  %v341 = vld [vmem:[%s303 + $0x240] sm:$0xff]
                  %342 = vst [vmem:[%s304 + $0x90] sm:$0xff] %v341
                  %v343 = vld [vmem:[%s303 + $0x260] sm:$0xff]
                  %344 = vst [vmem:[%s304 + $0x98] sm:$0xff] %v343
                  %v345 = vld [vmem:[%s303 + $0x280] sm:$0xff]
                  %346 = vst [vmem:[%s304 + $0xa0] sm:$0xff] %v345
                  %v347 = vld [vmem:[%s303 + $0x2a0] sm:$0xff]
                  %348 = vst [vmem:[%s304 + $0xa8] sm:$0xff] %v347
                  %v349 = vld [vmem:[%s303 + $0x2c0] sm:$0xff]
                  %350 = vst [vmem:[%s304 + $0xb0] sm:$0xff] %v349
                  %v351 = vld [vmem:[%s303 + $0x2e0] sm:$0xff]
                  %352 = vst [vmem:[%s304 + $0xb8] sm:$0xff] %v351
                  %v353 = vld [vmem:[%s303 + $0x300] sm:$0xff]
                  %354 = vst [vmem:[%s304 + $0xc0] sm:$0xff] %v353
                  %v355 = vld [vmem:[%s303 + $0x320] sm:$0xff]
                  %356 = vst [vmem:[%s304 + $0xc8] sm:$0xff] %v355
                  %v357 = vld [vmem:[%s303 + $0x340] sm:$0xff]
                  %358 = vst [vmem:[%s304 + $0xd0] sm:$0xff] %v357
                  %v359 = vld [vmem:[%s303 + $0x360] sm:$0xff]
                  %360 = vst [vmem:[%s304 + $0xd8] sm:$0xff] %v359
                  %v361 = vld [vmem:[%s303 + $0x380] sm:$0xff]
                  %362 = vst [vmem:[%s304 + $0xe0] sm:$0xff] %v361
                  %v363 = vld [vmem:[%s303 + $0x3a0] sm:$0xff]
                  %364 = vst [vmem:[%s304 + $0xe8] sm:$0xff] %v363
                  %v365 = vld [vmem:[%s303 + $0x3c0] sm:$0xff]
                  %366 = vst [vmem:[%s304 + $0xf0] sm:$0xff] %v365
                  %v367 = vld [vmem:[%s303 + $0x3e0] sm:$0xff]
                  %368 = vst [vmem:[%s304 + $0xf8] sm:$0xff] %v367
                $region60: #{clip_visual_forward.18} parent=54 // loop_footer
                  %s302 = sadd.s32 1, %s298
                $region61: #{clip_visual_forward.18} parent=54 // loop_footer_branch
                  %297 = sbr.rel target = $region57
                $region62: #{clip_visual_forward.18} parent=54 // loop_exit
                  _
              $region55: #{clip_visual_forward.18} parent=39 // pred_fallthru
                _
              // Predicated region
              $region63: #{clip_visual_forward.18} parent=39 // pred_check
                _
              $region64: #{clip_visual_forward.18} parent=39 // pred_check_branch
                %370 = sbr.rel target = $region66
              $region65: #{clip_visual_forward.18} parent=39 // pred_region
                _
              $region66: #{clip_visual_forward.18} parent=39 // pred_fallthru
                _
            $region40: #{clip_visual_forward.18} parent=35 // pred_fallthru
              _
            // Predicated region
            $region41: #{clip_visual_forward.18} parent=35 // pred_check
              _
            $region42: #{clip_visual_forward.18} parent=35 // pred_check_branch
              %221 = sbr.rel target = $region44
            $region43: #{clip_visual_forward.18} parent=35 // pred_region
              loop: start=0, step=1, limit=1
              $region45: #{clip_visual_forward.18} parent=43 // loop_pre_header
                _
              $region46: #{clip_visual_forward.18} parent=43 // loop_header
                %s224 = sphi 0, %s228
                %p225 = scmp.ge.s32.totalorder %s224, 1
                %s229 = sphi %s215, %s215
                %s230 = sphi %s212, %s212
              $region47: #{clip_visual_forward.18} parent=43 // loop_header_branch
                %227 = sbr.rel (%p225) target = $region51
              $region48: #{clip_visual_forward.18} parent=43 // loop_body
                %v231 = vld [vmem:[%s229] sm:$0xff]
                %232 = vst [vmem:[%s230] sm:$0xff] %v231
                %v233 = vld [vmem:[%s229 + $0x20] sm:$0xff]
                %234 = vst [vmem:[%s230 + $0x8] sm:$0xff] %v233
                %v235 = vld [vmem:[%s229 + $0x40] sm:$0xff]
                %236 = vst [vmem:[%s230 + $0x10] sm:$0xff] %v235
                %v237 = vld [vmem:[%s229 + $0x60] sm:$0xff]
                %238 = vst [vmem:[%s230 + $0x18] sm:$0xff] %v237
                %v239 = vld [vmem:[%s229 + $0x80] sm:$0xff]
                %240 = vst [vmem:[%s230 + $0x20] sm:$0xff] %v239
                %v241 = vld [vmem:[%s229 + $0xa0] sm:$0xff]
                %242 = vst [vmem:[%s230 + $0x28] sm:$0xff] %v241
                %v243 = vld [vmem:[%s229 + $0xc0] sm:$0xff]
                %244 = vst [vmem:[%s230 + $0x30] sm:$0xff] %v243
                %v245 = vld [vmem:[%s229 + $0xe0] sm:$0xff]
                %246 = vst [vmem:[%s230 + $0x38] sm:$0xff] %v245
                %v247 = vld [vmem:[%s229 + $0x100] sm:$0xff]
                %248 = vst [vmem:[%s230 + $0x40] sm:$0xff] %v247
                %v249 = vld [vmem:[%s229 + $0x120] sm:$0xff]
                %250 = vst [vmem:[%s230 + $0x48] sm:$0xff] %v249
                %v251 = vld [vmem:[%s229 + $0x140] sm:$0xff]
                %252 = vst [vmem:[%s230 + $0x50] sm:$0xff] %v251
                %v253 = vld [vmem:[%s229 + $0x160] sm:$0xff]
                %254 = vst [vmem:[%s230 + $0x58] sm:$0xff] %v253
                %v255 = vld [vmem:[%s229 + $0x180] sm:$0xff]
                %256 = vst [vmem:[%s230 + $0x60] sm:$0xff] %v255
                %v257 = vld [vmem:[%s229 + $0x1a0] sm:$0xff]
                %258 = vst [vmem:[%s230 + $0x68] sm:$0xff] %v257
                %v259 = vld [vmem:[%s229 + $0x1c0] sm:$0xff]
                %260 = vst [vmem:[%s230 + $0x70] sm:$0xff] %v259
                %v261 = vld [vmem:[%s229 + $0x1e0] sm:$0xff]
                %262 = vst [vmem:[%s230 + $0x78] sm:$0xff] %v261
                %v263 = vld [vmem:[%s229 + $0x200] sm:$0xff]
                %264 = vst [vmem:[%s230 + $0x80] sm:$0xff] %v263
                %v265 = vld [vmem:[%s229 + $0x220] sm:$0xff]
                %266 = vst [vmem:[%s230 + $0x88] sm:$0xff] %v265
                %v267 = vld [vmem:[%s229 + $0x240] sm:$0xff]
                %268 = vst [vmem:[%s230 + $0x90] sm:$0xff] %v267
                %v269 = vld [vmem:[%s229 + $0x260] sm:$0xff]
                %270 = vst [vmem:[%s230 + $0x98] sm:$0xff] %v269
                %v271 = vld [vmem:[%s229 + $0x280] sm:$0xff]
                %272 = vst [vmem:[%s230 + $0xa0] sm:$0xff] %v271
                %v273 = vld [vmem:[%s229 + $0x2a0] sm:$0xff]
                %274 = vst [vmem:[%s230 + $0xa8] sm:$0xff] %v273
                %v275 = vld [vmem:[%s229 + $0x2c0] sm:$0xff]
                %276 = vst [vmem:[%s230 + $0xb0] sm:$0xff] %v275
                %v277 = vld [vmem:[%s229 + $0x2e0] sm:$0xff]
                %278 = vst [vmem:[%s230 + $0xb8] sm:$0xff] %v277
                %v279 = vld [vmem:[%s229 + $0x300] sm:$0xff]
                %280 = vst [vmem:[%s230 + $0xc0] sm:$0xff] %v279
                %v281 = vld [vmem:[%s229 + $0x320] sm:$0xff]
                %282 = vst [vmem:[%s230 + $0xc8] sm:$0xff] %v281
                %v283 = vld [vmem:[%s229 + $0x340] sm:$0xff]
                %284 = vst [vmem:[%s230 + $0xd0] sm:$0xff] %v283
                %v285 = vld [vmem:[%s229 + $0x360] sm:$0xff]
                %286 = vst [vmem:[%s230 + $0xd8] sm:$0xff] %v285
                %v287 = vld [vmem:[%s229 + $0x380] sm:$0xff]
                %288 = vst [vmem:[%s230 + $0xe0] sm:$0xff] %v287
                %v289 = vld [vmem:[%s229 + $0x3a0] sm:$0xff]
                %290 = vst [vmem:[%s230 + $0xe8] sm:$0xff] %v289
                %v291 = vld [vmem:[%s229 + $0x3c0] sm:$0xff]
                %292 = vst [vmem:[%s230 + $0xf0] sm:$0xff] %v291
                %v293 = vld [vmem:[%s229 + $0x3e0] sm:$0xff]
                %294 = vst [vmem:[%s230 + $0xf8] sm:$0xff] %v293
              $region49: #{clip_visual_forward.18} parent=43 // loop_footer
                %s228 = sadd.s32 1, %s224
              $region50: #{clip_visual_forward.18} parent=43 // loop_footer_branch
                %223 = sbr.rel target = $region46
              $region51: #{clip_visual_forward.18} parent=43 // loop_exit
                _
            $region44: #{clip_visual_forward.18} parent=35 // pred_fallthru
              _
          $region36: #{clip_visual_forward.18} parent=31 // pred_fallthru
            _
          %371 = vnop
        $region32: #{clip_visual_forward.18} parent=27 // pred_fallthru
          _
        // Predicated region
        $region67: #{clip_visual_forward.18} parent=27 // pred_check
          %p372 = pneg %p95
        $region68: #{clip_visual_forward.18} parent=27 // pred_check_branch
          %374 = sbr.rel (%p372) target = $region70
        $region69: #{clip_visual_forward.18} parent=27 // pred_region
          %s375 = smul.u32 2, %s19
          %p376 = scmp.lt.s32.totalorder %s375, 7
          %s377 = scalar_select %p376, %s375, 7
          %s378 = scalar_lea.vmem %s2, %s377
          %s379 = smul.u32 2, %s19
        $region70: #{clip_visual_forward.18} parent=27 // pred_fallthru
          _
      $region28: #{clip_visual_forward.18} parent=5 // pred_fallthru
        _
      %p380 = scmp.le.s32.totalorder 1, %s11
      %p381 = scmp.lt.s32.totalorder %s11, 5
      %p382 = pnand %p380, %p381
      %p383 = pneg %p382
      // Predicated region
      $region71: #{clip_visual_forward.18} parent=5 // pred_check
        _
      $region72: #{clip_visual_forward.18} parent=5 // pred_check_branch
        %385 = sbr.rel (%p382) target = $region74
      $region73: #{clip_visual_forward.18} parent=5 // pred_region
        %s386 = ssub.s32 %s11, 1
        %s387 = sand.u32 %s62, 1
        %s388 = sand.u32 %s62, 1
        %s389 = smul.addr %s388, 256
        %s390 = scalar_lea.vmem [#allocation2], %s389
        // Predicated region
        $region75: #{clip_visual_forward.18} parent=73 // pred_check
          %p391 = pneg %p75
        $region76: #{clip_visual_forward.18} parent=73 // pred_check_branch
          %393 = sbr.rel (%p391) target = $region78
        $region77: #{clip_visual_forward.18} parent=73 // pred_region
          _
        $region78: #{clip_visual_forward.18} parent=73 // pred_fallthru
          _
        %s394 = smul.u32 5, %s20
        %p395 = scmp.lt.s32.totalorder %s394, 4
        %s396 = scalar_select %p395, %s394, 4
        %s397 = smul.addr %s396, 2
        %s398 = smul.addr %s397, 8
        %s399 = scalar_lea.vmem %s0, %s398
        %p400 = pneg %p49
        %p401 = pneg %p46
        %s402 = sand.u32 %s62, 1
        %s403 = sand.u32 %s62, 1
        %s404 = smul.addr %s403, 256
        %s405 = scalar_lea.vmem [#allocation2], %s404
        %p406 = pneg %p75
        %p407 = pneg %p72
        %s408 = smul.u32 2, %s21
        %p409 = scmp.lt.s32.totalorder %s408, 7
        %s410 = scalar_select %p409, %s408, 7
        %s411 = scalar_lea.vmem %s2, %s410
        %p412 = pneg %p101
        %p413 = pneg %p98
        %p414 = pneg %p122
        %p415 = pneg %p119
        %p416 = pneg %p143
        %p417 = pneg %p140
        %p418 = pneg %p171
        %p419 = pneg %p168
        %s420 = sand.u32 %s158, 1
        %s421 = sand.u32 %s158, 1
        %s422 = smul.addr %s421, 40
        %s423 = scalar_lea.vmem [#allocation3], %s422
        %s424 = smul.u32 5, %s20
        %p425 = scmp.lt.s32.totalorder %s424, 4
        %s426 = scalar_select %p425, %s424, 4
        %s427 = smul.addr %s426, 2
        %s428 = smul.addr %s427, 8
        %s429 = scalar_lea.vmem %s0, %s428
        %s430 = smul.u32 5, %s20
        %s431 = smul.u32 2, %s21
        %s432 = smul.u32 2, %s21
        %p433 = scmp.lt.s32.totalorder %s432, 7
        %s434 = scalar_select %p433, %s432, 7
        %s435 = scalar_lea.vmem %s2, %s434
        %s436 = smul.u32 2, %s21
        %s437 = smul.u32 5, %s20
        %s438 = smul.u32 2, %s21
        %v439 = vld [vmem:[%s429] sm:$0xff]
        %v440 = vld [vmem:[%s429 + $0x8] sm:$0xff]
        %v441 = vld [vmem:[%s429 + $0x10] sm:$0xff]
        %v442 = vld [vmem:[%s429 + $0x18] sm:$0xff]
        %v443 = vld [vmem:[%s429 + $0x20] sm:$0xff]
        %v444 = vld [vmem:[%s429 + $0x28] sm:$0xff]
        %v445 = vld [vmem:[%s429 + $0x30] sm:$0xff]
        %v446 = vld [vmem:[%s429 + $0x38] sm:$0xff]
        %v447 = vld [vmem:[%s429 + $0x40] sm:$0x3]
        %v448 = vld [vmem:[%s429 + $0x48] sm:$0x3]
        %v449 = vadd.f32 %v439, %v440
        %450 = vadd.xlane.f32.xlu0 %v449
        %v451 = vpop.xlane.xlu0 %450
        %v452 = vadd.f32 %v441, %v442
        %453 = vadd.xlane.f32.xlu0 %v452
        %v454 = vpop.xlane.xlu0 %453
        %v455 = vadd.f32 %v443, %v444
        %456 = vadd.xlane.f32.xlu0 %v455
        %v457 = vpop.xlane.xlu0 %456
        %v458 = vadd.f32 %v445, %v446
        %459 = vadd.xlane.f32.xlu0 %v458
        %v460 = vpop.xlane.xlu0 %459
        %vm461 = vcmask 1041408
        %v462 = vsel %vm461, %v447, 0.0
        %v463 = vsel %vm461, %v448, 0.0
        %v464 = vadd.f32 %v462, %v463
        %465 = vadd.xlane.f32.xlu0 %v464
        %v466 = vpop.xlane.xlu0 %465
        %v467 = vrcp.pop 256.0
        %v468 = vmul.f32 %v451, %v467
        %v469 = vmul.f32 %v454, %v467
        %v470 = vmul.f32 %v457, %v467
        %v471 = vmul.f32 %v460, %v467
        %v472 = vmul.f32 %v466, %v467
        %v473 = vsub.f32 %v439, %v468
        %v474 = vsub.f32 %v440, %v468
        %v475 = vsub.f32 %v441, %v469
        %v476 = vsub.f32 %v442, %v469
        %v477 = vsub.f32 %v443, %v470
        %v478 = vsub.f32 %v444, %v470
        %v479 = vsub.f32 %v445, %v471
        %v480 = vsub.f32 %v446, %v471
        %v481 = vsub.f32 %v447, %v472
        %v482 = vsub.f32 %v448, %v472
        %v483 = vmul.f32 %v473, %v473
        %v484 = vmul.f32 %v474, %v474
        %v485 = vmul.f32 %v475, %v475
        %v486 = vmul.f32 %v476, %v476
        %v487 = vmul.f32 %v477, %v477
        %v488 = vmul.f32 %v478, %v478
        %v489 = vmul.f32 %v479, %v479
        %v490 = vmul.f32 %v480, %v480
        %v491 = vmul.f32 %v481, %v481
        %v492 = vmul.f32 %v482, %v482
        %v493 = vadd.f32 %v483, %v484
        %494 = vadd.xlane.f32.xlu0 %v493
        %v495 = vpop.xlane.xlu0 %494
        %v496 = vadd.f32 %v485, %v486
        %497 = vadd.xlane.f32.xlu0 %v496
        %v498 = vpop.xlane.xlu0 %497
        %v499 = vadd.f32 %v487, %v488
        %500 = vadd.xlane.f32.xlu0 %v499
        %v501 = vpop.xlane.xlu0 %500
        %v502 = vadd.f32 %v489, %v490
        %503 = vadd.xlane.f32.xlu0 %v502
        %v504 = vpop.xlane.xlu0 %503
        %v505 = vsel %vm461, %v491, 0.0
        %v506 = vsel %vm461, %v492, 0.0
        %v507 = vadd.f32 %v505, %v506
        %508 = vadd.xlane.f32.xlu0 %v507
        %v509 = vpop.xlane.xlu0 %508
        %v510 = vmul.f32 %v495, %v467
        %v511 = vmul.f32 %v498, %v467
        %v512 = vmul.f32 %v501, %v467
        %v513 = vmul.f32 %v504, %v467
        %v514 = vmul.f32 %v509, %v467
        %v515 = vadd.f32 %v510, 1e-05
        %v516 = vadd.f32 %v511, 1e-05
        %v517 = vadd.f32 %v512, 1e-05
        %v518 = vadd.f32 %v513, 1e-05
        %v519 = vadd.f32 %v514, 1e-05
        %v520 = vrsqrt.pop %v515
        %v521 = vrsqrt.pop %v516
        %v522 = vrsqrt.pop %v517
        %v523 = vrsqrt.pop %v518
        %v524 = vrsqrt.pop %v519
        %v525 = vmul.f32 %v473, %v520
        %v526 = vmul.f32 %v474, %v520
        %v527 = vmul.f32 %v475, %v521
        %v528 = vmul.f32 %v476, %v521
        %v529 = vmul.f32 %v477, %v522
        %v530 = vmul.f32 %v478, %v522
        %v531 = vmul.f32 %v479, %v523
        %v532 = vmul.f32 %v480, %v523
        %v533 = vmul.f32 %v481, %v524
        %v534 = vmul.f32 %v482, %v524
        %v535 = vld [vmem:[%s3] sm:$0x3]
        %v537 = vlaneseq
        %v538 = vshrl.u32 %v537, 7
        %v539 = vsub.s32 0, %v538
        %v540 = vrot.slane %v535, %v539
        %v541 = vlaneseq
        %v542 = vshrl.u32 %v541, 7
        %v543 = vsub.s32 1, %v542
        %v544 = vrot.slane %v535, %v543
        %v547 = vmul.f32 %v525, %v540
        %v548 = vmul.f32 %v526, %v544
        %v549 = vmul.f32 %v527, %v540
        %v550 = vmul.f32 %v528, %v544
        %v551 = vmul.f32 %v529, %v540
        %v552 = vmul.f32 %v530, %v544
        %v553 = vmul.f32 %v531, %v540
        %v554 = vmul.f32 %v532, %v544
        %v555 = vmul.f32 %v533, %v540
        %v556 = vmul.f32 %v534, %v544
        %v557 = vld [vmem:[%s4] sm:$0x3]
        %v559 = vlaneseq
        %v560 = vshrl.u32 %v559, 7
        %v561 = vsub.s32 0, %v560
        %v562 = vrot.slane %v557, %v561
        %v563 = vlaneseq
        %v564 = vshrl.u32 %v563, 7
        %v565 = vsub.s32 1, %v564
        %v566 = vrot.slane %v557, %v565
        %v569 = vadd.f32 %v547, %v562
        %v570 = vadd.f32 %v548, %v566
        %v571 = vadd.f32 %v549, %v562
        %v572 = vadd.f32 %v550, %v566
        %v573 = vadd.f32 %v551, %v562
        %v574 = vadd.f32 %v552, %v566
        %v575 = vadd.f32 %v553, %v562
        %v576 = vadd.f32 %v554, %v566
        %v577 = vadd.f32 %v555, %v562
        %v578 = vadd.f32 %v556, %v566
        %v579 = vpack.c.bf16 %v571, %v569
        %v580 = vpack.c.bf16 %v572, %v570
        %v581 = vpack.c.bf16 %v575, %v573
        %v582 = vpack.c.bf16 %v576, %v574
        %v583 = vpack.c.bf16 %v577, %v577
        %v584 = vpack.c.bf16 %v578, %v578
        %v585 = vld [vmem:[%s390] sm:$0xff]
        %v586 = vld [vmem:[%s390 + $0x8] sm:$0xff]
        %v587 = vld [vmem:[%s390 + $0x10] sm:$0xff]
        %v588 = vld [vmem:[%s390 + $0x18] sm:$0xff]
        %v589 = vld [vmem:[%s390 + $0x20] sm:$0xff]
        %v590 = vld [vmem:[%s390 + $0x28] sm:$0xff]
        %v591 = vld [vmem:[%s390 + $0x30] sm:$0xff]
        %v592 = vld [vmem:[%s390 + $0x38] sm:$0xff]
        %v593 = vld [vmem:[%s390 + $0x40] sm:$0xff]
        %v594 = vld [vmem:[%s390 + $0x48] sm:$0xff]
        %v595 = vld [vmem:[%s390 + $0x50] sm:$0xff]
        %v596 = vld [vmem:[%s390 + $0x58] sm:$0xff]
        %v597 = vld [vmem:[%s390 + $0x60] sm:$0xff]
        %v598 = vld [vmem:[%s390 + $0x68] sm:$0xff]
        %v599 = vld [vmem:[%s390 + $0x70] sm:$0xff]
        %v600 = vld [vmem:[%s390 + $0x78] sm:$0xff]
        %v601 = vld [vmem:[%s390 + $0x80] sm:$0xff]
        %v602 = vld [vmem:[%s390 + $0x88] sm:$0xff]
        %v603 = vld [vmem:[%s390 + $0x90] sm:$0xff]
        %v604 = vld [vmem:[%s390 + $0x98] sm:$0xff]
        %v605 = vld [vmem:[%s390 + $0xa0] sm:$0xff]
        %v606 = vld [vmem:[%s390 + $0xa8] sm:$0xff]
        %v607 = vld [vmem:[%s390 + $0xb0] sm:$0xff]
        %v608 = vld [vmem:[%s390 + $0xb8] sm:$0xff]
        %v609 = vld [vmem:[%s390 + $0xc0] sm:$0xff]
        %v610 = vld [vmem:[%s390 + $0xc8] sm:$0xff]
        %v611 = vld [vmem:[%s390 + $0xd0] sm:$0xff]
        %v612 = vld [vmem:[%s390 + $0xd8] sm:$0xff]
        %v613 = vld [vmem:[%s390 + $0xe0] sm:$0xff]
        %v614 = vld [vmem:[%s390 + $0xe8] sm:$0xff]
        %v615 = vld [vmem:[%s390 + $0xf0] sm:$0xff]
        %v616 = vld [vmem:[%s390 + $0xf8] sm:$0xff]
        %v617 = vld [vmem:[%s435] sm:$0x3]
        %v619 = vlaneseq
        %v620 = vshrl.u32 %v619, 7
        %v621 = vsub.s32 0, %v620
        %v622 = vrot.slane %v617, %v621
        %v623 = vlaneseq
        %v624 = vshrl.u32 %v623, 7
        %v625 = vsub.s32 1, %v624
        %v626 = vrot.slane %v617, %v625
        %v661 = vunpack.c.l.b16 %v585
        %v662 = vunpack.c.h.b16 %v585
        %v663 = vunpack.c.l.b16 %v586
        %v664 = vunpack.c.h.b16 %v586
        %v665 = vunpack.c.l.b16 %v587
        %v666 = vunpack.c.h.b16 %v587
        %v667 = vunpack.c.l.b16 %v588
        %v668 = vunpack.c.h.b16 %v588
        %v669 = vunpack.c.l.b16 %v589
        %v670 = vunpack.c.h.b16 %v589
        %v671 = vunpack.c.l.b16 %v590
        %v672 = vunpack.c.h.b16 %v590
        %v673 = vunpack.c.l.b16 %v591
        %v674 = vunpack.c.h.b16 %v591
        %v675 = vunpack.c.l.b16 %v592
        %v676 = vunpack.c.h.b16 %v592
        %v677 = vunpack.c.l.b16 %v593
        %v678 = vunpack.c.h.b16 %v593
        %v679 = vunpack.c.l.b16 %v594
        %v680 = vunpack.c.h.b16 %v594
        %v681 = vunpack.c.l.b16 %v595
        %v682 = vunpack.c.h.b16 %v595
        %v683 = vunpack.c.l.b16 %v596
        %v684 = vunpack.c.h.b16 %v596
        %v685 = vunpack.c.l.b16 %v597
        %v686 = vunpack.c.h.b16 %v597
        %v687 = vunpack.c.l.b16 %v598
        %v688 = vunpack.c.h.b16 %v598
        %v689 = vunpack.c.l.b16 %v599
        %v690 = vunpack.c.h.b16 %v599
        %v691 = vunpack.c.l.b16 %v600
        %v692 = vunpack.c.h.b16 %v600
        %v693 = vunpack.c.l.b16 %v601
        %v694 = vunpack.c.h.b16 %v601
        %v695 = vunpack.c.l.b16 %v602
        %v696 = vunpack.c.h.b16 %v602
        %v697 = vunpack.c.l.b16 %v603
        %v698 = vunpack.c.h.b16 %v603
        %v699 = vunpack.c.l.b16 %v604
        %v700 = vunpack.c.h.b16 %v604
        %v701 = vunpack.c.l.b16 %v605
        %v702 = vunpack.c.h.b16 %v605
        %v703 = vunpack.c.l.b16 %v606
        %v704 = vunpack.c.h.b16 %v606
        %v705 = vunpack.c.l.b16 %v607
        %v706 = vunpack.c.h.b16 %v607
        %v707 = vunpack.c.l.b16 %v608
        %v708 = vunpack.c.h.b16 %v608
        %v709 = vunpack.c.l.b16 %v609
        %v710 = vunpack.c.h.b16 %v609
        %v711 = vunpack.c.l.b16 %v610
        %v712 = vunpack.c.h.b16 %v610
        %v713 = vunpack.c.l.b16 %v611
        %v714 = vunpack.c.h.b16 %v611
        %v715 = vunpack.c.l.b16 %v612
        %v716 = vunpack.c.h.b16 %v612
        %v717 = vunpack.c.l.b16 %v613
        %v718 = vunpack.c.h.b16 %v613
        %v719 = vunpack.c.l.b16 %v614
        %v720 = vunpack.c.h.b16 %v614
        %v721 = vunpack.c.l.b16 %v615
        %v722 = vunpack.c.h.b16 %v615
        %v723 = vunpack.c.l.b16 %v616
        %v724 = vunpack.c.h.b16 %v616
        %v725 = vpack.c.b16 %v663, %v661
        %v726 = vpack.c.b16 %v664, %v662
        %v727 = vpack.c.b16 %v667, %v665
        %v728 = vpack.c.b16 %v668, %v666
        %v729 = vpack.c.b16 %v671, %v669
        %v730 = vpack.c.b16 %v672, %v670
        %v731 = vpack.c.b16 %v675, %v673
        %v732 = vpack.c.b16 %v676, %v674
        %v733 = vpack.c.b16 %v679, %v677
        %v734 = vpack.c.b16 %v680, %v678
        %v735 = vpack.c.b16 %v683, %v681
        %v736 = vpack.c.b16 %v684, %v682
        %v737 = vpack.c.b16 %v687, %v685
        %v738 = vpack.c.b16 %v688, %v686
        %v739 = vpack.c.b16 %v691, %v689
        %v740 = vpack.c.b16 %v692, %v690
        %v741 = vpack.c.b16 %v695, %v693
        %v742 = vpack.c.b16 %v696, %v694
        %v743 = vpack.c.b16 %v699, %v697
        %v744 = vpack.c.b16 %v700, %v698
        %v745 = vpack.c.b16 %v703, %v701
        %v746 = vpack.c.b16 %v704, %v702
        %v747 = vpack.c.b16 %v707, %v705
        %v748 = vpack.c.b16 %v708, %v706
        %v749 = vpack.c.b16 %v711, %v709
        %v750 = vpack.c.b16 %v712, %v710
        %v751 = vpack.c.b16 %v715, %v713
        %v752 = vpack.c.b16 %v716, %v714
        %v753 = vpack.c.b16 %v719, %v717
        %v754 = vpack.c.b16 %v720, %v718
        %v755 = vpack.c.b16 %v723, %v721
        %v756 = vpack.c.b16 %v724, %v722
        %789 = vmatprep.subr.bf16.mxu0 %v726
        %790 = vmatpush1.bf16.msra.mxu0 %v725
        %791 = vmatprep.subr.bf16.mxu0 %v728
        %792 = vmatpush1.bf16.msra.mxu0 %v727
        %793 = vmatprep.subr.bf16.mxu0 %v730
        %794 = vmatpush1.bf16.msra.mxu0 %v729
        %795 = vmatprep.subr.bf16.mxu0 %v732
        %796 = vmatpush1.bf16.msra.mxu0 %v731
        %797 = vmatprep.subr.bf16.mxu0 %v734
        %798 = vmatpush1.bf16.msra.mxu0 %v733
        %799 = vmatprep.subr.bf16.mxu0 %v736
        %800 = vmatpush1.bf16.msra.mxu0 %v735
        %801 = vmatprep.subr.bf16.mxu0 %v738
        %802 = vmatpush1.bf16.msra.mxu0 %v737
        %803 = vmatprep.subr.bf16.mxu0 %v740
        %804 = vmatpush1.bf16.msra.mxu0 %v739
        %805 = vmatprep.subr.bf16.mxu0 %v742
        %806 = vmatpush1.bf16.msra.mxu0 %v741
        %807 = vmatprep.subr.bf16.mxu0 %v744
        %808 = vmatpush1.bf16.msra.mxu0 %v743
        %809 = vmatprep.subr.bf16.mxu0 %v746
        %810 = vmatpush1.bf16.msra.mxu0 %v745
        %811 = vmatprep.subr.bf16.mxu0 %v748
        %812 = vmatpush1.bf16.msra.mxu0 %v747
        %813 = vmatprep.subr.bf16.mxu0 %v750
        %814 = vmatpush1.bf16.msra.mxu0 %v749
        %815 = vmatprep.subr.bf16.mxu0 %v752
        %816 = vmatpush1.bf16.msra.mxu0 %v751
        %817 = vmatprep.subr.bf16.mxu0 %v754
        %818 = vmatpush1.bf16.msra.mxu0 %v753
        %819 = vmatprep.subr.bf16.mxu0 %v756
        %820 = vmatpush1.bf16.msra.mxu0 %v755
        %821 = vmatprep.mubr.bf16.mxu0 %v580
        %822 = vmatmul.mubr.bf16.gmra.mrb[0].mxu0 %v579
        %v823 = vpop.f32.mrb[0].mxu0
        %v824 = vadd.f32 %v622, %v823
        %v825 = vpop.f32.mrb[0].mxu0
        %v826 = vadd.f32 %v626, %v825
        %v827 = vpop.f32.mrb[0].mxu0
        %v828 = vadd.f32 %v622, %v827
        %v829 = vpop.f32.mrb[0].mxu0
        %v830 = vadd.f32 %v626, %v829
        %831 = vmatprep.mubr.bf16.mxu0 %v582
        %832 = vmatmul.mubr.bf16.gmra.mrb[0].mxu0 %v581
        %v833 = vpop.f32.mrb[0].mxu0
        %v834 = vadd.f32 %v622, %v833
        %v835 = vpop.f32.mrb[0].mxu0
        %v836 = vadd.f32 %v626, %v835
        %v837 = vpop.f32.mrb[0].mxu0
        %v838 = vadd.f32 %v622, %v837
        %v839 = vpop.f32.mrb[0].mxu0
        %v840 = vadd.f32 %v626, %v839
        %841 = vmatprep.mubr.bf16.mxu0 %v584
        %842 = vmatmul.mubr.bf16.gmra.mrb[0].mxu0 %v583
        %v843 = vpop.f32.mrb[0].mxu0
        %v844 = vadd.f32 %v622, %v843
        %v845 = vpop.f32.mrb[0].mxu0
        %v846 = vadd.f32 %v626, %v845
        %v847 = vpop.f32.mrb[0].mxu0
        %v848 = vpop.f32.mrb[0].mxu0
        %849 = vdwg.mxu0
        %v850 = vmul.f32 %v824, 1.702
        %v851 = vmul.f32 %v826, 1.702
        %v852 = vmul.f32 %v828, 1.702
        %v853 = vmul.f32 %v830, 1.702
        %v854 = vmul.f32 %v834, 1.702
        %v855 = vmul.f32 %v836, 1.702
        %v856 = vmul.f32 %v838, 1.702
        %v857 = vmul.f32 %v840, 1.702
        %v858 = vmul.f32 %v844, 1.702
        %v859 = vmul.f32 %v846, 1.702
        %v860 = vxor.u32 %v850, 2147483648
        %v861 = vxor.u32 %v851, 2147483648
        %v862 = vxor.u32 %v852, 2147483648
        %v863 = vxor.u32 %v853, 2147483648
        %v864 = vxor.u32 %v854, 2147483648
        %v865 = vxor.u32 %v855, 2147483648
        %v866 = vxor.u32 %v856, 2147483648
        %v867 = vxor.u32 %v857, 2147483648
        %v868 = vxor.u32 %v858, 2147483648
        %v869 = vxor.u32 %v859, 2147483648
        %v870 = vmul.f32 %v860, 1.442695
        %v871 = vpow.pop %v870
        %v872 = vmul.f32 %v861, 1.442695
        %v873 = vpow.pop %v872
        %v874 = vmul.f32 %v862, 1.442695
        %v875 = vpow.pop %v874
        %v876 = vmul.f32 %v863, 1.442695
        %v877 = vpow.pop %v876
        %v878 = vmul.f32 %v864, 1.442695
        %v879 = vpow.pop %v878
        %v880 = vmul.f32 %v865, 1.442695
        %v881 = vpow.pop %v880
        %v882 = vmul.f32 %v866, 1.442695
        %v883 = vpow.pop %v882
        %v884 = vmul.f32 %v867, 1.442695
        %v885 = vpow.pop %v884
        %v886 = vmul.f32 %v868, 1.442695
        %v887 = vpow.pop %v886
        %v888 = vmul.f32 %v869, 1.442695
        %v889 = vpow.pop %v888
        %v890 = vadd.f32 %v871, 1.0
        %v891 = vadd.f32 %v873, 1.0
        %v892 = vadd.f32 %v875, 1.0
        %v893 = vadd.f32 %v877, 1.0
        %v894 = vadd.f32 %v879, 1.0
        %v895 = vadd.f32 %v881, 1.0
        %v896 = vadd.f32 %v883, 1.0
        %v897 = vadd.f32 %v885, 1.0
        %v898 = vadd.f32 %v887, 1.0
        %v899 = vadd.f32 %v889, 1.0
        %v900 = vrcp.pop %v890
        %v901 = vmul.f32 1.0, %v900
        %v902 = vrcp.pop %v891
        %v903 = vmul.f32 1.0, %v902
        %v904 = vrcp.pop %v892
        %v905 = vmul.f32 1.0, %v904
        %v906 = vrcp.pop %v893
        %v907 = vmul.f32 1.0, %v906
        %v908 = vrcp.pop %v894
        %v909 = vmul.f32 1.0, %v908
        %v910 = vrcp.pop %v895
        %v911 = vmul.f32 1.0, %v910
        %v912 = vrcp.pop %v896
        %v913 = vmul.f32 1.0, %v912
        %v914 = vrcp.pop %v897
        %v915 = vmul.f32 1.0, %v914
        %v916 = vrcp.pop %v898
        %v917 = vmul.f32 1.0, %v916
        %v918 = vrcp.pop %v899
        %v919 = vmul.f32 1.0, %v918
        %v920 = vmul.f32 %v824, %v901
        %v921 = vmul.f32 %v826, %v903
        %v922 = vmul.f32 %v828, %v905
        %v923 = vmul.f32 %v830, %v907
        %v924 = vmul.f32 %v834, %v909
        %v925 = vmul.f32 %v836, %v911
        %v926 = vmul.f32 %v838, %v913
        %v927 = vmul.f32 %v840, %v915
        %v928 = vmul.f32 %v844, %v917
        %v929 = vmul.f32 %v846, %v919
        %v930 = vpack.c.bf16 %v922, %v920
        %v931 = vpack.c.bf16 %v923, %v921
        %v932 = vpack.c.bf16 %v926, %v924
        %v933 = vpack.c.bf16 %v927, %v925
        %v934 = vpack.c.bf16 %v928, %v928
        %v935 = vpack.c.bf16 %v929, %v929
        %v942 = vunpack.c.l.b16 %v930
        %v943 = vunpack.c.l.b16 %v931
        %v944 = vunpack.c.h.b16 %v930
        %v945 = vunpack.c.h.b16 %v931
        %v946 = vunpack.c.l.b16 %v932
        %v947 = vunpack.c.l.b16 %v933
        %v948 = vunpack.c.h.b16 %v932
        %v949 = vunpack.c.h.b16 %v933
        %v950 = vunpack.c.l.b16 %v934
        %v951 = vunpack.c.l.b16 %v935
        %v952 = vpack.c.b16 %v943, %v942
        %v953 = vpack.c.b16 %v945, %v944
        %v954 = vpack.c.b16 %v947, %v946
        %v955 = vpack.c.b16 %v949, %v948
        %v956 = vpack.c.b16 %v951, %v950
        %962 = vst [vmem:[%s423] sm:$0xff] %v952
        %963 = vst [vmem:[%s423 + $0x8] sm:$0xff] %v953
        %964 = vst [vmem:[%s423 + $0x10] sm:$0xff] %v954
        %965 = vst [vmem:[%s423 + $0x18] sm:$0xff] %v955
        %966 = vst [vmem:[%s423 + $0x20] sm:$0x11] %v956
        %s967 = sand.u32 %s158, 1
        %s968 = sand.u32 %s158, 1
        %s969 = smul.addr %s968, 40
        %s970 = scalar_lea.vmem [#allocation3], %s969
        // Predicated region
        $region79: #{clip_visual_forward.18} parent=73 // pred_check
          %p971 = pneg %p168
        $region80: #{clip_visual_forward.18} parent=73 // pred_check_branch
          %973 = sbr.rel (%p971) target = $region82
        $region81: #{clip_visual_forward.18} parent=73 // pred_region
          %s974 = smul.u32 5, %s20
          %s975 = smul.u32 2, %s21
          %s976 = smul.addr %s974, 8
          %s977 = sadd.s32 %s975, %s976
          %s978 = smul.addr %s977, 4
          %s979 = scalar_lea.vmem %s5, %s978
          // Predicated region
          $region83: #{clip_visual_forward.18} parent=81 // pred_check
            _
          $region84: #{clip_visual_forward.18} parent=81 // pred_check_branch
            %981 = sbr.rel (0) target = $region86
          $region85: #{clip_visual_forward.18} parent=81 // pred_region
            // Predicated region
            $region87: #{clip_visual_forward.18} parent=85 // pred_check
              _
            $region88: #{clip_visual_forward.18} parent=85 // pred_check_branch
              %983 = sbr.rel (0) target = $region90
            $region89: #{clip_visual_forward.18} parent=85 // pred_region
              // Predicated region
              $region102: #{clip_visual_forward.18} parent=89 // pred_check
                _
              $region103: #{clip_visual_forward.18} parent=89 // pred_check_branch
                %1006 = sbr.rel (0) target = $region105
              $region104: #{clip_visual_forward.18} parent=89 // pred_region
                loop: start=0, step=1, limit=1
                $region106: #{clip_visual_forward.18} parent=104 // loop_pre_header
                  _
                $region107: #{clip_visual_forward.18} parent=104 // loop_header
                  %s1008 = sphi 0, %s1012
                  %p1009 = scmp.ge.s32.totalorder %s1008, 1
                  %s1013 = sphi %s970, %s970
                  %s1014 = sphi %s979, %s979
                $region108: #{clip_visual_forward.18} parent=104 // loop_header_branch
                  %1011 = sbr.rel (%p1009) target = $region112
                $region109: #{clip_visual_forward.18} parent=104 // loop_body
                  %v1015 = vld [vmem:[%s1013] sm:$0xff]
                  %1016 = vst [vmem:[%s1014] sm:$0xff] %v1015
                  %v1017 = vld [vmem:[%s1013 + $0x8] sm:$0xff]
                  %1018 = vst [vmem:[%s1014 + $0x20] sm:$0xff] %v1017
                  %v1019 = vld [vmem:[%s1013 + $0x10] sm:$0xff]
                  %1020 = vst [vmem:[%s1014 + $0x40] sm:$0xff] %v1019
                  %v1021 = vld [vmem:[%s1013 + $0x18] sm:$0xff]
                  %1022 = vst [vmem:[%s1014 + $0x60] sm:$0xff] %v1021
                  %v1023 = vld [vmem:[%s1013 + $0x20] sm:$0xff]
                  %1024 = vst [vmem:[%s1014 + $0x80] sm:$0xff] %v1023
                $region110: #{clip_visual_forward.18} parent=104 // loop_footer
                  %s1012 = sadd.s32 1, %s1008
                $region111: #{clip_visual_forward.18} parent=104 // loop_footer_branch
                  %1007 = sbr.rel target = $region107
                $region112: #{clip_visual_forward.18} parent=104 // loop_exit
                  _
              $region105: #{clip_visual_forward.18} parent=89 // pred_fallthru
                _
              // Predicated region
              $region113: #{clip_visual_forward.18} parent=89 // pred_check
                _
              $region114: #{clip_visual_forward.18} parent=89 // pred_check_branch
                %1026 = sbr.rel target = $region116
              $region115: #{clip_visual_forward.18} parent=89 // pred_region
                _
              $region116: #{clip_visual_forward.18} parent=89 // pred_fallthru
                _
            $region90: #{clip_visual_forward.18} parent=85 // pred_fallthru
              _
            // Predicated region
            $region91: #{clip_visual_forward.18} parent=85 // pred_check
              _
            $region92: #{clip_visual_forward.18} parent=85 // pred_check_branch
              %985 = sbr.rel target = $region94
            $region93: #{clip_visual_forward.18} parent=85 // pred_region
              loop: start=0, step=1, limit=1
              $region95: #{clip_visual_forward.18} parent=93 // loop_pre_header
                _
              $region96: #{clip_visual_forward.18} parent=93 // loop_header
                %s988 = sphi 0, %s992
                %p989 = scmp.ge.s32.totalorder %s988, 1
                %s993 = sphi %s970, %s970
                %s994 = sphi %s979, %s979
              $region97: #{clip_visual_forward.18} parent=93 // loop_header_branch
                %991 = sbr.rel (%p989) target = $region101
              $region98: #{clip_visual_forward.18} parent=93 // loop_body
                %v995 = vld [vmem:[%s993] sm:$0xff]
                %996 = vst [vmem:[%s994] sm:$0xff] %v995
                %v997 = vld [vmem:[%s993 + $0x8] sm:$0xff]
                %998 = vst [vmem:[%s994 + $0x20] sm:$0xff] %v997
                %v999 = vld [vmem:[%s993 + $0x10] sm:$0xff]
                %1000 = vst [vmem:[%s994 + $0x40] sm:$0xff] %v999
                %v1001 = vld [vmem:[%s993 + $0x18] sm:$0xff]
                %1002 = vst [vmem:[%s994 + $0x60] sm:$0xff] %v1001
                %v1003 = vld [vmem:[%s993 + $0x20] sm:$0xff]
                %1004 = vst [vmem:[%s994 + $0x80] sm:$0xff] %v1003
              $region99: #{clip_visual_forward.18} parent=93 // loop_footer
                %s992 = sadd.s32 1, %s988
              $region100: #{clip_visual_forward.18} parent=93 // loop_footer_branch
                %987 = sbr.rel target = $region96
              $region101: #{clip_visual_forward.18} parent=93 // loop_exit
                _
            $region94: #{clip_visual_forward.18} parent=85 // pred_fallthru
              _
          $region86: #{clip_visual_forward.18} parent=81 // pred_fallthru
            _
          %1027 = vnop
        $region82: #{clip_visual_forward.18} parent=73 // pred_fallthru
          _
      $region74: #{clip_visual_forward.18} parent=5 // pred_fallthru
        _
      %p1028 = scmp.le.s32.totalorder 2, %s11
      // Predicated region
      $region117: #{clip_visual_forward.18} parent=5 // pred_check
        %p1029 = pneg %p1028
      $region118: #{clip_visual_forward.18} parent=5 // pred_check_branch
        %1031 = sbr.rel (%p1029) target = $region120
      $region119: #{clip_visual_forward.18} parent=5 // pred_region
        %s1032 = ssub.s32 %s11, 2
        // Predicated region
        $region121: #{clip_visual_forward.18} parent=119 // pred_check
          %p1033 = pneg %p174
        $region122: #{clip_visual_forward.18} parent=119 // pred_check_branch
          %1035 = sbr.rel (%p1033) target = $region124
        $region123: #{clip_visual_forward.18} parent=119 // pred_region
          %s1036 = sand.u32 %s159, 1
          %s1037 = sand.u32 %s159, 1
          %s1038 = smul.addr %s1037, 40
          %s1039 = scalar_lea.vmem [#allocation3], %s1038
        $region124: #{clip_visual_forward.18} parent=119 // pred_fallthru
          _
      $region120: #{clip_visual_forward.18} parent=5 // pred_fallthru
        _
    $region6: #{clip_visual_forward.18} parent=1 // loop_footer
      %s15 = sadd.s32 1, %s11
    $region7: #{clip_visual_forward.18} parent=1 // loop_footer_branch
      %10 = sbr.rel target = $region3
    $region8: #{clip_visual_forward.18} parent=1 // loop_exit
      _

// kernel: clip_visual_forward.25
$region0: #{clip_visual_forward.25}
  #allocation0 [shape = 'u32[]', space=smem, size = 0x4, offset = 0x4, fixed_abs, tag = 'smem constant byte address 0x4 - core index']
  #allocation1 [shape = 'u32[144,128]{1,0:T(1,128)}', space=vmem, size = 0x12000, scoped, tag = 'internal scratch']
  %s0 = inlined_call_operand.vmem [shape: f32[2,256], index: 0, kind: input, shape index: {}]
  %s1 = inlined_call_operand.vmem [shape: bf16[256,128], index: 1, kind: input, shape index: {}]
  %s2 = inlined_call_operand.vmem [shape: f32[1,256], index: 2, kind: input, shape index: {}]
  %s3 = inlined_call_operand.vmem [shape: f32[1,256], index: 3, kind: input, shape index: {}]
  %s4 = inlined_call_operand.hbm [shape: f32[2,128], index: 4, kind: output, shape index: {}]
  %s5 = sld [smem:[#allocation0]]
  $region26: #{clip_visual_forward.25} parent=0
    _
  %s7 = ssub.s32 1, %s5
  %s8 = scalar_select 0, %s7, %s5
  $region1: #{clip_visual_forward.25} parent=0
    #allocation2 [shape = 'u8[1024]{0}', space=vmem, size = 0x400, scoped, tag = 'output window, operand 0, single buffered']
    #allocation3 [shape = 's32[1]{0}', space=sflag, size = 0x4, scoped, tag = 'scoped memory for clip_visual_forward.25']
    %9 = vsyncpa [#allocation3], 0
    // Predicated region
    $region2: #{clip_visual_forward.25} parent=1 // pred_check
      _
    $region3: #{clip_visual_forward.25} parent=1 // pred_check_branch
      %11 = sbr.rel (0) target = $region5
    $region4: #{clip_visual_forward.25} parent=1 // pred_region
      _
    $region5: #{clip_visual_forward.25} parent=1 // pred_fallthru
      _
    // Predicated region
    $region6: #{clip_visual_forward.25} parent=1 // pred_check
      _
    $region7: #{clip_visual_forward.25} parent=1 // pred_check_branch
      %13 = sbr.rel (0) target = $region9
    $region8: #{clip_visual_forward.25} parent=1 // pred_region
      _
    $region9: #{clip_visual_forward.25} parent=1 // pred_fallthru
      _
    // Predicated region
    $region10: #{clip_visual_forward.25} parent=1 // pred_check
      _
    $region11: #{clip_visual_forward.25} parent=1 // pred_check_branch
      %15 = sbr.rel (0) target = $region13
    $region12: #{clip_visual_forward.25} parent=1 // pred_region
      _
    $region13: #{clip_visual_forward.25} parent=1 // pred_fallthru
      _
    // Predicated region
    $region14: #{clip_visual_forward.25} parent=1 // pred_check
      _
    $region15: #{clip_visual_forward.25} parent=1 // pred_check_branch
      %17 = sbr.rel (0) target = $region17
    $region16: #{clip_visual_forward.25} parent=1 // pred_region
      _
    $region17: #{clip_visual_forward.25} parent=1 // pred_fallthru
      _
    %v19 = vld [vmem:[%s0] sm:$0xf]
    %v22 = vunpack.c.l.s4 1983009808
    %v23 = vunpack.c.0.s8 %v22
    %v24 = vlaneseq
    %v25 = vshrl.u32 %v24, 7
    %v26 = vsub.s32 %v23, %v25
    %v27 = vrot.slane %v19, %v26
    %v28 = vcombine.high %v27, %v27
    %vm31 = vcmask 1041408
    %v32 = vsel %vm31, %v27, 0.0
    %v33 = vsel %vm31, %v28, 0.0
    %v34 = vadd.f32 %v32, %v33
    %35 = vadd.xlane.f32.xlu0 %v34
    %v36 = vpop.xlane.xlu0 %35
    %v37 = vrcp.pop 256.0
    %v38 = vmul.f32 %v36, %v37
    %v41 = vunpack.c.l.s4 269488144
    %v42 = vunpack.c.0.s8 %v41
    %v43 = vlaneseq
    %v44 = vshrl.u32 %v43, 7
    %v45 = vsub.s32 %v42, %v44
    %v46 = vrot.slane %v38, %v45
    %v48 = vsub.f32 %v19, %v46
    %v49 = vmul.f32 %v48, %v48
    %v52 = vunpack.c.l.s4 1983009808
    %v53 = vunpack.c.0.s8 %v52
    %v54 = vlaneseq
    %v55 = vshrl.u32 %v54, 7
    %v56 = vsub.s32 %v53, %v55
    %v57 = vrot.slane %v49, %v56
    %v58 = vcombine.high %v57, %v57
    %v61 = vsel %vm31, %v57, 0.0
    %v62 = vsel %vm31, %v58, 0.0
    %v63 = vadd.f32 %v61, %v62
    %64 = vadd.xlane.f32.xlu0 %v63
    %v65 = vpop.xlane.xlu0 %64
    %v66 = vmul.f32 %v65, %v37
    %v67 = vadd.f32 %v66, 1e-05
    %v68 = vrsqrt.pop %v67
    %v71 = vunpack.c.l.s4 269488144
    %v72 = vunpack.c.0.s8 %v71
    %v73 = vlaneseq
    %v74 = vshrl.u32 %v73, 7
    %v75 = vsub.s32 %v72, %v74
    %v76 = vrot.slane %v68, %v75
    %v78 = vmul.f32 %v48, %v76
    %v79 = vld [vmem:[%s2] sm:$0x3]
    %v81 = vlaneseq
    %v82 = vshrl.u32 %v81, 7
    %v83 = vsub.s32 0, %v82
    %v84 = vrot.slane %v79, %v83
    %v85 = vlaneseq
    %v86 = vshrl.u32 %v85, 7
    %v87 = vsub.s32 1, %v86
    %v88 = vrot.slane %v79, %v87
    %v89 = vcombine.low %v84, %v88
    %v91 = vunpack.c.l.s4 1983009808
    %v92 = vunpack.c.0.s8 %v91
    %v93 = vlaneseq
    %v94 = vshrl.u32 %v93, 7
    %v95 = vsub.s32 %v92, %v94
    %v96 = vrot.slane %v89, %v95
    %v98 = vmul.f32 %v78, %v96
    %v99 = vld [vmem:[%s3] sm:$0x3]
    %v101 = vlaneseq
    %v102 = vshrl.u32 %v101, 7
    %v103 = vsub.s32 0, %v102
    %v104 = vrot.slane %v99, %v103
    %v105 = vlaneseq
    %v106 = vshrl.u32 %v105, 7
    %v107 = vsub.s32 1, %v106
    %v108 = vrot.slane %v99, %v107
    %v109 = vcombine.low %v104, %v108
    %v111 = vunpack.c.l.s4 1983009808
    %v112 = vunpack.c.0.s8 %v111
    %v113 = vlaneseq
    %v114 = vshrl.u32 %v113, 7
    %v115 = vsub.s32 %v112, %v114
    %v116 = vrot.slane %v109, %v115
    %v118 = vadd.f32 %v98, %v116
    %v121 = vunpack.c.l.s4 1983009808
    %v122 = vunpack.c.0.s8 %v121
    %v123 = vlaneseq
    %v124 = vshrl.u32 %v123, 7
    %v125 = vsub.s32 %v122, %v124
    %v126 = vrot.slane %v118, %v125
    %v127 = vcombine.high %v126, %v126
    %v130 = vpack.c.bf16 %v126, %v126
    %v131 = vpack.c.bf16 %v127, %v127
    %v132 = vld [vmem:[%s1] sm:$0xf]
    %v133 = vld [vmem:[%s1 + $0x4] sm:$0xf]
    %v134 = vld [vmem:[%s1 + $0x8] sm:$0xf]
    %v135 = vld [vmem:[%s1 + $0xc] sm:$0xf]
    %v136 = vld [vmem:[%s1 + $0x10] sm:$0xf]
    %v137 = vld [vmem:[%s1 + $0x14] sm:$0xf]
    %v138 = vld [vmem:[%s1 + $0x18] sm:$0xf]
    %v139 = vld [vmem:[%s1 + $0x1c] sm:$0xf]
    %v140 = vld [vmem:[%s1 + $0x20] sm:$0xf]
    %v141 = vld [vmem:[%s1 + $0x24] sm:$0xf]
    %v142 = vld [vmem:[%s1 + $0x28] sm:$0xf]
    %v143 = vld [vmem:[%s1 + $0x2c] sm:$0xf]
    %v144 = vld [vmem:[%s1 + $0x30] sm:$0xf]
    %v145 = vld [vmem:[%s1 + $0x34] sm:$0xf]
    %v146 = vld [vmem:[%s1 + $0x38] sm:$0xf]
    %v147 = vld [vmem:[%s1 + $0x3c] sm:$0xf]
    %v148 = vld [vmem:[%s1 + $0x40] sm:$0xf]
    %v149 = vld [vmem:[%s1 + $0x44] sm:$0xf]
    %v150 = vld [vmem:[%s1 + $0x48] sm:$0xf]
    %v151 = vld [vmem:[%s1 + $0x4c] sm:$0xf]
    %v152 = vld [vmem:[%s1 + $0x50] sm:$0xf]
    %v153 = vld [vmem:[%s1 + $0x54] sm:$0xf]
    %v154 = vld [vmem:[%s1 + $0x58] sm:$0xf]
    %v155 = vld [vmem:[%s1 + $0x5c] sm:$0xf]
    %v156 = vld [vmem:[%s1 + $0x60] sm:$0xf]
    %v157 = vld [vmem:[%s1 + $0x64] sm:$0xf]
    %v158 = vld [vmem:[%s1 + $0x68] sm:$0xf]
    %v159 = vld [vmem:[%s1 + $0x6c] sm:$0xf]
    %v160 = vld [vmem:[%s1 + $0x70] sm:$0xf]
    %v161 = vld [vmem:[%s1 + $0x74] sm:$0xf]
    %v162 = vld [vmem:[%s1 + $0x78] sm:$0xf]
    %v163 = vld [vmem:[%s1 + $0x7c] sm:$0xf]
    %v196 = vunpack.c.l.b16 %v132
    %v197 = vunpack.c.l.b16 %v133
    %v198 = vunpack.c.l.b16 %v134
    %v199 = vunpack.c.l.b16 %v135
    %v200 = vunpack.c.l.b16 %v136
    %v201 = vunpack.c.l.b16 %v137
    %v202 = vunpack.c.l.b16 %v138
    %v203 = vunpack.c.l.b16 %v139
    %v204 = vunpack.c.l.b16 %v140
    %v205 = vunpack.c.l.b16 %v141
    %v206 = vunpack.c.l.b16 %v142
    %v207 = vunpack.c.l.b16 %v143
    %v208 = vunpack.c.l.b16 %v144
    %v209 = vunpack.c.l.b16 %v145
    %v210 = vunpack.c.l.b16 %v146
    %v211 = vunpack.c.l.b16 %v147
    %v212 = vunpack.c.l.b16 %v148
    %v213 = vunpack.c.l.b16 %v149
    %v214 = vunpack.c.l.b16 %v150
    %v215 = vunpack.c.l.b16 %v151
    %v216 = vunpack.c.l.b16 %v152
    %v217 = vunpack.c.l.b16 %v153
    %v218 = vunpack.c.l.b16 %v154
    %v219 = vunpack.c.l.b16 %v155
    %v220 = vunpack.c.l.b16 %v156
    %v221 = vunpack.c.l.b16 %v157
    %v222 = vunpack.c.l.b16 %v158
    %v223 = vunpack.c.l.b16 %v159
    %v224 = vunpack.c.l.b16 %v160
    %v225 = vunpack.c.l.b16 %v161
    %v226 = vunpack.c.l.b16 %v162
    %v227 = vunpack.c.l.b16 %v163
    %v228 = vpack.c.b16 %v197, %v196
    %v229 = vpack.c.b16 %v199, %v198
    %v230 = vpack.c.b16 %v201, %v200
    %v231 = vpack.c.b16 %v203, %v202
    %v232 = vpack.c.b16 %v205, %v204
    %v233 = vpack.c.b16 %v207, %v206
    %v234 = vpack.c.b16 %v209, %v208
    %v235 = vpack.c.b16 %v211, %v210
    %v236 = vpack.c.b16 %v213, %v212
    %v237 = vpack.c.b16 %v215, %v214
    %v238 = vpack.c.b16 %v217, %v216
    %v239 = vpack.c.b16 %v219, %v218
    %v240 = vpack.c.b16 %v221, %v220
    %v241 = vpack.c.b16 %v223, %v222
    %v242 = vpack.c.b16 %v225, %v224
    %v243 = vpack.c.b16 %v227, %v226
    %260 = vmatprep.subr.bf16.mxu0 0
    %261 = vmatpush1.bf16.msra.mxu0 %v228
    %262 = vmatprep.subr.bf16.mxu0 0
    %263 = vmatpush1.bf16.msra.mxu0 %v229
    %264 = vmatprep.subr.bf16.mxu0 0
    %265 = vmatpush1.bf16.msra.mxu0 %v230
    %266 = vmatprep.subr.bf16.mxu0 0
    %267 = vmatpush1.bf16.msra.mxu0 %v231
    %268 = vmatprep.subr.bf16.mxu0 0
    %269 = vmatpush1.bf16.msra.mxu0 %v232
    %270 = vmatprep.subr.bf16.mxu0 0
    %271 = vmatpush1.bf16.msra.mxu0 %v233
    %272 = vmatprep.subr.bf16.mxu0 0
    %273 = vmatpush1.bf16.msra.mxu0 %v234
    %274 = vmatprep.subr.bf16.mxu0 0
    %275 = vmatpush1.bf16.msra.mxu0 %v235
    %276 = vmatprep.subr.bf16.mxu0 0
    %277 = vmatpush1.bf16.msra.mxu0 %v236
    %278 = vmatprep.subr.bf16.mxu0 0
    %279 = vmatpush1.bf16.msra.mxu0 %v237
    %280 = vmatprep.subr.bf16.mxu0 0
    %281 = vmatpush1.bf16.msra.mxu0 %v238
    %282 = vmatprep.subr.bf16.mxu0 0
    %283 = vmatpush1.bf16.msra.mxu0 %v239
    %284 = vmatprep.subr.bf16.mxu0 0
    %285 = vmatpush1.bf16.msra.mxu0 %v240
    %286 = vmatprep.subr.bf16.mxu0 0
    %287 = vmatpush1.bf16.msra.mxu0 %v241
    %288 = vmatprep.subr.bf16.mxu0 0
    %289 = vmatpush1.bf16.msra.mxu0 %v242
    %290 = vmatprep.subr.bf16.mxu0 0
    %291 = vmatpush1.bf16.msra.mxu0 %v243
    %292 = vmatprep.mubr.bf16.mxu0 %v131
    %293 = vmatmul.mubr.bf16.gmra.mrb[0].mxu0 %v130
    %v294 = vpop.f32.mrb[0].mxu0
    %v295 = vadd.f32 0.0, %v294
    %v296 = vpop.f32.mrb[0].mxu0
    %v297 = vpop.f32.mrb[0].mxu0
    %v298 = vpop.f32.mrb[0].mxu0
    %299 = vdwg.mxu0
    %300 = vst [vmem:[#allocation2] sm:$0x3] %v295
    // Predicated region
    $region18: #{clip_visual_forward.25} parent=1 // pred_check
      _
    $region19: #{clip_visual_forward.25} parent=1 // pred_check_branch
      %302 = sbr.rel (0) target = $region21
    $region20: #{clip_visual_forward.25} parent=1 // pred_region
      %s304 = ssub.s32 32, 32
      %305 = vsyncadd [#allocation3], %s304
      %s307 = sshll.u32 [#allocation2], 4
      %s308 = int_to_ptr.vmem [resolvable:$true] %s307
      %310 = dma.vmem_to_hbm [thread:$0]  %s308, 32, %s4, [#allocation3]
    $region21: #{clip_visual_forward.25} parent=1 // pred_fallthru
      _
    // Predicated region
    $region22: #{clip_visual_forward.25} parent=1 // pred_check
      _
    $region23: #{clip_visual_forward.25} parent=1 // pred_check_branch
      %312 = sbr.rel (0) target = $region25
    $region24: #{clip_visual_forward.25} parent=1 // pred_region
      %313 = dma.done [#allocation3], 32
    $region25: #{clip_visual_forward.25} parent=1 // pred_fallthru
      _
    %314 = vsyncpa [#allocation3], 1

// kernel: clip_visual_forward.19
$region0: #{clip_visual_forward.19}
  #allocation0 [shape = 'u32[]', space=smem, size = 0x4, offset = 0x4, fixed_abs, tag = 'smem constant byte address 0x4 - core index']
  #allocation1 [shape = 'u32[144,128]{1,0:T(1,128)}', space=vmem, size = 0x12000, scoped, tag = 'internal scratch']
  %s0 = inlined_call_operand.vmem [shape: bf16[34,1024], index: 0, kind: input, shape index: {}]
  %s1 = inlined_call_operand.vmem [shape: bf16[1024,256], index: 1, kind: input, shape index: {}]
  %s2 = inlined_call_operand.vmem [shape: f32[1,256], index: 2, kind: input, shape index: {}]
  %s3 = inlined_call_operand.vmem [shape: f32[34,256], index: 3, kind: input, shape index: {}]
  %s4 = inlined_call_operand.vmem [shape: f32[34,256], index: 4, kind: output, shape index: {}]
  %s5 = sld [smem:[#allocation0]]
  $region26: #{clip_visual_forward.19} parent=0
    _
  %s7 = ssub.s32 1, %s5
  %s8 = scalar_select 0, %s7, %s5
  // Predicated region
  $region2: #{clip_visual_forward.19} parent=0 // pred_check
    _
  $region3: #{clip_visual_forward.19} parent=0 // pred_check_branch
    %10 = sbr.rel (0) target = $region5
  $region4: #{clip_visual_forward.19} parent=0 // pred_region
    _
  $region5: #{clip_visual_forward.19} parent=0 // pred_fallthru
    _
  // Predicated region
  $region6: #{clip_visual_forward.19} parent=0 // pred_check
    _
  $region7: #{clip_visual_forward.19} parent=0 // pred_check_branch
    %12 = sbr.rel (0) target = $region9
  $region8: #{clip_visual_forward.19} parent=0 // pred_region
    _
  $region9: #{clip_visual_forward.19} parent=0 // pred_fallthru
    _
  // Predicated region
  $region10: #{clip_visual_forward.19} parent=0 // pred_check
    _
  $region11: #{clip_visual_forward.19} parent=0 // pred_check_branch
    %14 = sbr.rel (0) target = $region13
  $region12: #{clip_visual_forward.19} parent=0 // pred_region
    _
  $region13: #{clip_visual_forward.19} parent=0 // pred_fallthru
    _
  // Predicated region
  $region14: #{clip_visual_forward.19} parent=0 // pred_check
    _
  $region15: #{clip_visual_forward.19} parent=0 // pred_check_branch
    %16 = sbr.rel (0) target = $region17
  $region16: #{clip_visual_forward.19} parent=0 // pred_region
    _
  $region17: #{clip_visual_forward.19} parent=0 // pred_fallthru
    _
  %v17 = vld [vmem:[%s0] sm:$0xff]
  %v18 = vld [vmem:[%s0 + $0x8] sm:$0xff]
  %v19 = vld [vmem:[%s0 + $0x10] sm:$0xff]
  %v20 = vld [vmem:[%s0 + $0x18] sm:$0xff]
  %v21 = vld [vmem:[%s0 + $0x20] sm:$0xff]
  %v22 = vld [vmem:[%s0 + $0x28] sm:$0xff]
  %v23 = vld [vmem:[%s0 + $0x30] sm:$0xff]
  %v24 = vld [vmem:[%s0 + $0x38] sm:$0xff]
  %v25 = vld [vmem:[%s0 + $0x40] sm:$0xff]
  %v26 = vld [vmem:[%s0 + $0x48] sm:$0xff]
  %v27 = vld [vmem:[%s0 + $0x50] sm:$0xff]
  %v28 = vld [vmem:[%s0 + $0x58] sm:$0xff]
  %v29 = vld [vmem:[%s0 + $0x60] sm:$0xff]
  %v30 = vld [vmem:[%s0 + $0x68] sm:$0xff]
  %v31 = vld [vmem:[%s0 + $0x70] sm:$0xff]
  %v32 = vld [vmem:[%s0 + $0x78] sm:$0xff]
  %v33 = vld [vmem:[%s0 + $0x80] sm:$0x11]
  %v34 = vld [vmem:[%s0 + $0x88] sm:$0x11]
  %v35 = vld [vmem:[%s0 + $0x90] sm:$0x11]
  %v36 = vld [vmem:[%s0 + $0x98] sm:$0x11]
  %v37 = vld [vmem:[%s1] sm:$0xff]
  %v38 = vld [vmem:[%s1 + $0x8] sm:$0xff]
  %v39 = vld [vmem:[%s1 + $0x10] sm:$0xff]
  %v40 = vld [vmem:[%s1 + $0x18] sm:$0xff]
  %v41 = vld [vmem:[%s1 + $0x20] sm:$0xff]
  %v42 = vld [vmem:[%s1 + $0x28] sm:$0xff]
  %v43 = vld [vmem:[%s1 + $0x30] sm:$0xff]
  %v44 = vld [vmem:[%s1 + $0x38] sm:$0xff]
  %v45 = vld [vmem:[%s1 + $0x40] sm:$0xff]
  %v46 = vld [vmem:[%s1 + $0x48] sm:$0xff]
  %v47 = vld [vmem:[%s1 + $0x50] sm:$0xff]
  %v48 = vld [vmem:[%s1 + $0x58] sm:$0xff]
  %v49 = vld [vmem:[%s1 + $0x60] sm:$0xff]
  %v50 = vld [vmem:[%s1 + $0x68] sm:$0xff]
  %v51 = vld [vmem:[%s1 + $0x70] sm:$0xff]
  %v52 = vld [vmem:[%s1 + $0x78] sm:$0xff]
  %v53 = vld [vmem:[%s1 + $0x80] sm:$0xff]
  %v54 = vld [vmem:[%s1 + $0x88] sm:$0xff]
  %v55 = vld [vmem:[%s1 + $0x90] sm:$0xff]
  %v56 = vld [vmem:[%s1 + $0x98] sm:$0xff]
  %v57 = vld [vmem:[%s1 + $0xa0] sm:$0xff]
  %v58 = vld [vmem:[%s1 + $0xa8] sm:$0xff]
  %v59 = vld [vmem:[%s1 + $0xb0] sm:$0xff]
  %v60 = vld [vmem:[%s1 + $0xb8] sm:$0xff]
  %v61 = vld [vmem:[%s1 + $0xc0] sm:$0xff]
  %v62 = vld [vmem:[%s1 + $0xc8] sm:$0xff]
  %v63 = vld [vmem:[%s1 + $0xd0] sm:$0xff]
  %v64 = vld [vmem:[%s1 + $0xd8] sm:$0xff]
  %v65 = vld [vmem:[%s1 + $0xe0] sm:$0xff]
  %v66 = vld [vmem:[%s1 + $0xe8] sm:$0xff]
  %v67 = vld [vmem:[%s1 + $0xf0] sm:$0xff]
  %v68 = vld [vmem:[%s1 + $0xf8] sm:$0xff]
  %v69 = vld [vmem:[%s1 + $0x100] sm:$0xff]
  %v70 = vld [vmem:[%s1 + $0x108] sm:$0xff]
  %v71 = vld [vmem:[%s1 + $0x110] sm:$0xff]
  %v72 = vld [vmem:[%s1 + $0x118] sm:$0xff]
  %v73 = vld [vmem:[%s1 + $0x120] sm:$0xff]
  %v74 = vld [vmem:[%s1 + $0x128] sm:$0xff]
  %v75 = vld [vmem:[%s1 + $0x130] sm:$0xff]
  %v76 = vld [vmem:[%s1 + $0x138] sm:$0xff]
  %v77 = vld [vmem:[%s1 + $0x140] sm:$0xff]
  %v78 = vld [vmem:[%s1 + $0x148] sm:$0xff]
  %v79 = vld [vmem:[%s1 + $0x150] sm:$0xff]
  %v80 = vld [vmem:[%s1 + $0x158] sm:$0xff]
  %v81 = vld [vmem:[%s1 + $0x160] sm:$0xff]
  %v82 = vld [vmem:[%s1 + $0x168] sm:$0xff]
  %v83 = vld [vmem:[%s1 + $0x170] sm:$0xff]
  %v84 = vld [vmem:[%s1 + $0x178] sm:$0xff]
  %v85 = vld [vmem:[%s1 + $0x180] sm:$0xff]
  %v86 = vld [vmem:[%s1 + $0x188] sm:$0xff]
  %v87 = vld [vmem:[%s1 + $0x190] sm:$0xff]
  %v88 = vld [vmem:[%s1 + $0x198] sm:$0xff]
  %v89 = vld [vmem:[%s1 + $0x1a0] sm:$0xff]
  %v90 = vld [vmem:[%s1 + $0x1a8] sm:$0xff]
  %v91 = vld [vmem:[%s1 + $0x1b0] sm:$0xff]
  %v92 = vld [vmem:[%s1 + $0x1b8] sm:$0xff]
  %v93 = vld [vmem:[%s1 + $0x1c0] sm:$0xff]
  %v94 = vld [vmem:[%s1 + $0x1c8] sm:$0xff]
  %v95 = vld [vmem:[%s1 + $0x1d0] sm:$0xff]
  %v96 = vld [vmem:[%s1 + $0x1d8] sm:$0xff]
  %v97 = vld [vmem:[%s1 + $0x1e0] sm:$0xff]
  %v98 = vld [vmem:[%s1 + $0x1e8] sm:$0xff]
  %v99 = vld [vmem:[%s1 + $0x1f0] sm:$0xff]
  %v100 = vld [vmem:[%s1 + $0x1f8] sm:$0xff]
  %v101 = vld [vmem:[%s1 + $0x200] sm:$0xff]
  %v102 = vld [vmem:[%s1 + $0x208] sm:$0xff]
  %v103 = vld [vmem:[%s1 + $0x210] sm:$0xff]
  %v104 = vld [vmem:[%s1 + $0x218] sm:$0xff]
  %v105 = vld [vmem:[%s1 + $0x220] sm:$0xff]
  %v106 = vld [vmem:[%s1 + $0x228] sm:$0xff]
  %v107 = vld [vmem:[%s1 + $0x230] sm:$0xff]
  %v108 = vld [vmem:[%s1 + $0x238] sm:$0xff]
  %v109 = vld [vmem:[%s1 + $0x240] sm:$0xff]
  %v110 = vld [vmem:[%s1 + $0x248] sm:$0xff]
  %v111 = vld [vmem:[%s1 + $0x250] sm:$0xff]
  %v112 = vld [vmem:[%s1 + $0x258] sm:$0xff]
  %v113 = vld [vmem:[%s1 + $0x260] sm:$0xff]
  %v114 = vld [vmem:[%s1 + $0x268] sm:$0xff]
  %v115 = vld [vmem:[%s1 + $0x270] sm:$0xff]
  %v116 = vld [vmem:[%s1 + $0x278] sm:$0xff]
  %v117 = vld [vmem:[%s1 + $0x280] sm:$0xff]
  %v118 = vld [vmem:[%s1 + $0x288] sm:$0xff]
  %v119 = vld [vmem:[%s1 + $0x290] sm:$0xff]
  %v120 = vld [vmem:[%s1 + $0x298] sm:$0xff]
  %v121 = vld [vmem:[%s1 + $0x2a0] sm:$0xff]
  %v122 = vld [vmem:[%s1 + $0x2a8] sm:$0xff]
  %v123 = vld [vmem:[%s1 + $0x2b0] sm:$0xff]
  %v124 = vld [vmem:[%s1 + $0x2b8] sm:$0xff]
  %v125 = vld [vmem:[%s1 + $0x2c0] sm:$0xff]
  %v126 = vld [vmem:[%s1 + $0x2c8] sm:$0xff]
  %v127 = vld [vmem:[%s1 + $0x2d0] sm:$0xff]
  %v128 = vld [vmem:[%s1 + $0x2d8] sm:$0xff]
  %v129 = vld [vmem:[%s1 + $0x2e0] sm:$0xff]
  %v130 = vld [vmem:[%s1 + $0x2e8] sm:$0xff]
  %v131 = vld [vmem:[%s1 + $0x2f0] sm:$0xff]
  %v132 = vld [vmem:[%s1 + $0x2f8] sm:$0xff]
  %v133 = vld [vmem:[%s1 + $0x300] sm:$0xff]
  %v134 = vld [vmem:[%s1 + $0x308] sm:$0xff]
  %v135 = vld [vmem:[%s1 + $0x310] sm:$0xff]
  %v136 = vld [vmem:[%s1 + $0x318] sm:$0xff]
  %v137 = vld [vmem:[%s1 + $0x320] sm:$0xff]
  %v138 = vld [vmem:[%s1 + $0x328] sm:$0xff]
  %v139 = vld [vmem:[%s1 + $0x330] sm:$0xff]
  %v140 = vld [vmem:[%s1 + $0x338] sm:$0xff]
  %v141 = vld [vmem:[%s1 + $0x340] sm:$0xff]
  %v142 = vld [vmem:[%s1 + $0x348] sm:$0xff]
  %v143 = vld [vmem:[%s1 + $0x350] sm:$0xff]
  %v144 = vld [vmem:[%s1 + $0x358] sm:$0xff]
  %v145 = vld [vmem:[%s1 + $0x360] sm:$0xff]
  %v146 = vld [vmem:[%s1 + $0x368] sm:$0xff]
  %v147 = vld [vmem:[%s1 + $0x370] sm:$0xff]
  %v148 = vld [vmem:[%s1 + $0x378] sm:$0xff]
  %v149 = vld [vmem:[%s1 + $0x380] sm:$0xff]
  %v150 = vld [vmem:[%s1 + $0x388] sm:$0xff]
  %v151 = vld [vmem:[%s1 + $0x390] sm:$0xff]
  %v152 = vld [vmem:[%s1 + $0x398] sm:$0xff]
  %v153 = vld [vmem:[%s1 + $0x3a0] sm:$0xff]
  %v154 = vld [vmem:[%s1 + $0x3a8] sm:$0xff]
  %v155 = vld [vmem:[%s1 + $0x3b0] sm:$0xff]
  %v156 = vld [vmem:[%s1 + $0x3b8] sm:$0xff]
  %v157 = vld [vmem:[%s1 + $0x3c0] sm:$0xff]
  %v158 = vld [vmem:[%s1 + $0x3c8] sm:$0xff]
  %v159 = vld [vmem:[%s1 + $0x3d0] sm:$0xff]
  %v160 = vld [vmem:[%s1 + $0x3d8] sm:$0xff]
  %v161 = vld [vmem:[%s1 + $0x3e0] sm:$0xff]
  %v162 = vld [vmem:[%s1 + $0x3e8] sm:$0xff]
  %v163 = vld [vmem:[%s1 + $0x3f0] sm:$0xff]
  %v164 = vld [vmem:[%s1 + $0x3f8] sm:$0xff]
  %v165 = vld [vmem:[%s2] sm:$0x3]
  %v167 = vlaneseq
  %v168 = vshrl.u32 %v167, 7
  %v169 = vsub.s32 0, %v168
  %v170 = vrot.slane %v165, %v169
  %v171 = vlaneseq
  %v172 = vshrl.u32 %v171, 7
  %v173 = vsub.s32 1, %v172
  %v174 = vrot.slane %v165, %v173
  %v197 = vunpack.c.l.b16 %v17
  %v198 = vunpack.c.h.b16 %v17
  %v199 = vunpack.c.l.b16 %v18
  %v200 = vunpack.c.h.b16 %v18
  %v201 = vunpack.c.l.b16 %v19
  %v202 = vunpack.c.h.b16 %v19
  %v203 = vunpack.c.l.b16 %v20
  %v204 = vunpack.c.h.b16 %v20
  %v205 = vunpack.c.l.b16 %v21
  %v206 = vunpack.c.h.b16 %v21
  %v207 = vunpack.c.l.b16 %v22
  %v208 = vunpack.c.h.b16 %v22
  %v209 = vunpack.c.l.b16 %v23
  %v210 = vunpack.c.h.b16 %v23
  %v211 = vunpack.c.l.b16 %v24
  %v212 = vunpack.c.h.b16 %v24
  %v213 = vunpack.c.l.b16 %v25
  %v214 = vunpack.c.h.b16 %v25
  %v215 = vunpack.c.l.b16 %v26
  %v216 = vunpack.c.h.b16 %v26
  %v217 = vunpack.c.l.b16 %v27
  %v218 = vunpack.c.h.b16 %v27
  %v219 = vunpack.c.l.b16 %v28
  %v220 = vunpack.c.h.b16 %v28
  %v221 = vunpack.c.l.b16 %v29
  %v222 = vunpack.c.h.b16 %v29
  %v223 = vunpack.c.l.b16 %v30
  %v224 = vunpack.c.h.b16 %v30
  %v225 = vunpack.c.l.b16 %v31
  %v226 = vunpack.c.h.b16 %v31
  %v227 = vunpack.c.l.b16 %v32
  %v228 = vunpack.c.h.b16 %v32
  %v229 = vunpack.c.l.b16 %v33
  %v230 = vunpack.c.h.b16 %v33
  %v231 = vunpack.c.l.b16 %v34
  %v232 = vunpack.c.h.b16 %v34
  %v233 = vunpack.c.l.b16 %v35
  %v234 = vunpack.c.h.b16 %v35
  %v235 = vunpack.c.l.b16 %v36
  %v236 = vunpack.c.h.b16 %v36
  %v237 = vpack.c.b16 %v205, %v197
  %v238 = vpack.c.b16 %v206, %v198
  %v239 = vpack.c.b16 %v207, %v199
  %v240 = vpack.c.b16 %v208, %v200
  %v241 = vpack.c.b16 %v209, %v201
  %v242 = vpack.c.b16 %v210, %v202
  %v243 = vpack.c.b16 %v211, %v203
  %v244 = vpack.c.b16 %v212, %v204
  %v245 = vpack.c.b16 %v221, %v213
  %v246 = vpack.c.b16 %v222, %v214
  %v247 = vpack.c.b16 %v223, %v215
  %v248 = vpack.c.b16 %v224, %v216
  %v249 = vpack.c.b16 %v225, %v217
  %v250 = vpack.c.b16 %v226, %v218
  %v251 = vpack.c.b16 %v227, %v219
  %v252 = vpack.c.b16 %v228, %v220
  %v253 = vpack.c.b16 %v229, %v229
  %v254 = vpack.c.b16 %v230, %v230
  %v255 = vpack.c.b16 %v231, %v231
  %v256 = vpack.c.b16 %v232, %v232
  %v257 = vpack.c.b16 %v233, %v233
  %v258 = vpack.c.b16 %v234, %v234
  %v259 = vpack.c.b16 %v235, %v235
  %v260 = vpack.c.b16 %v236, %v236
  %v413 = vunpack.c.l.b16 %v37
  %v414 = vunpack.c.h.b16 %v37
  %v415 = vunpack.c.l.b16 %v38
  %v416 = vunpack.c.h.b16 %v38
  %v417 = vunpack.c.l.b16 %v39
  %v418 = vunpack.c.h.b16 %v39
  %v419 = vunpack.c.l.b16 %v40
  %v420 = vunpack.c.h.b16 %v40
  %v421 = vunpack.c.l.b16 %v41
  %v422 = vunpack.c.h.b16 %v41
  %v423 = vunpack.c.l.b16 %v42
  %v424 = vunpack.c.h.b16 %v42
  %v425 = vunpack.c.l.b16 %v43
  %v426 = vunpack.c.h.b16 %v43
  %v427 = vunpack.c.l.b16 %v44
  %v428 = vunpack.c.h.b16 %v44
  %v429 = vunpack.c.l.b16 %v45
  %v430 = vunpack.c.h.b16 %v45
  %v431 = vunpack.c.l.b16 %v46
  %v432 = vunpack.c.h.b16 %v46
  %v433 = vunpack.c.l.b16 %v47
  %v434 = vunpack.c.h.b16 %v47
  %v435 = vunpack.c.l.b16 %v48
  %v436 = vunpack.c.h.b16 %v48
  %v437 = vunpack.c.l.b16 %v49
  %v438 = vunpack.c.h.b16 %v49
  %v439 = vunpack.c.l.b16 %v50
  %v440 = vunpack.c.h.b16 %v50
  %v441 = vunpack.c.l.b16 %v51
  %v442 = vunpack.c.h.b16 %v51
  %v443 = vunpack.c.l.b16 %v52
  %v444 = vunpack.c.h.b16 %v52
  %v445 = vunpack.c.l.b16 %v53
  %v446 = vunpack.c.h.b16 %v53
  %v447 = vunpack.c.l.b16 %v54
  %v448 = vunpack.c.h.b16 %v54
  %v449 = vunpack.c.l.b16 %v55
  %v450 = vunpack.c.h.b16 %v55
  %v451 = vunpack.c.l.b16 %v56
  %v452 = vunpack.c.h.b16 %v56
  %v453 = vunpack.c.l.b16 %v57
  %v454 = vunpack.c.h.b16 %v57
  %v455 = vunpack.c.l.b16 %v58
  %v456 = vunpack.c.h.b16 %v58
  %v457 = vunpack.c.l.b16 %v59
  %v458 = vunpack.c.h.b16 %v59
  %v459 = vunpack.c.l.b16 %v60
  %v460 = vunpack.c.h.b16 %v60
  %v461 = vunpack.c.l.b16 %v61
  %v462 = vunpack.c.h.b16 %v61
  %v463 = vunpack.c.l.b16 %v62
  %v464 = vunpack.c.h.b16 %v62
  %v465 = vunpack.c.l.b16 %v63
  %v466 = vunpack.c.h.b16 %v63
  %v467 = vunpack.c.l.b16 %v64
  %v468 = vunpack.c.h.b16 %v64
  %v469 = vunpack.c.l.b16 %v65
  %v470 = vunpack.c.h.b16 %v65
  %v471 = vunpack.c.l.b16 %v66
  %v472 = vunpack.c.h.b16 %v66
  %v473 = vunpack.c.l.b16 %v67
  %v474 = vunpack.c.h.b16 %v67
  %v475 = vunpack.c.l.b16 %v68
  %v476 = vunpack.c.h.b16 %v68
  %v477 = vunpack.c.l.b16 %v69
  %v478 = vunpack.c.h.b16 %v69
  %v479 = vunpack.c.l.b16 %v70
  %v480 = vunpack.c.h.b16 %v70
  %v481 = vunpack.c.l.b16 %v71
  %v482 = vunpack.c.h.b16 %v71
  %v483 = vunpack.c.l.b16 %v72
  %v484 = vunpack.c.h.b16 %v72
  %v485 = vunpack.c.l.b16 %v73
  %v486 = vunpack.c.h.b16 %v73
  %v487 = vunpack.c.l.b16 %v74
  %v488 = vunpack.c.h.b16 %v74
  %v489 = vunpack.c.l.b16 %v75
  %v490 = vunpack.c.h.b16 %v75
  %v491 = vunpack.c.l.b16 %v76
  %v492 = vunpack.c.h.b16 %v76
  %v493 = vunpack.c.l.b16 %v77
  %v494 = vunpack.c.h.b16 %v77
  %v495 = vunpack.c.l.b16 %v78
  %v496 = vunpack.c.h.b16 %v78
  %v497 = vunpack.c.l.b16 %v79
  %v498 = vunpack.c.h.b16 %v79
  %v499 = vunpack.c.l.b16 %v80
  %v500 = vunpack.c.h.b16 %v80
  %v501 = vunpack.c.l.b16 %v81
  %v502 = vunpack.c.h.b16 %v81
  %v503 = vunpack.c.l.b16 %v82
  %v504 = vunpack.c.h.b16 %v82
  %v505 = vunpack.c.l.b16 %v83
  %v506 = vunpack.c.h.b16 %v83
  %v507 = vunpack.c.l.b16 %v84
  %v508 = vunpack.c.h.b16 %v84
  %v509 = vunpack.c.l.b16 %v85
  %v510 = vunpack.c.h.b16 %v85
  %v511 = vunpack.c.l.b16 %v86
  %v512 = vunpack.c.h.b16 %v86
  %v513 = vunpack.c.l.b16 %v87
  %v514 = vunpack.c.h.b16 %v87
  %v515 = vunpack.c.l.b16 %v88
  %v516 = vunpack.c.h.b16 %v88
  %v517 = vunpack.c.l.b16 %v89
  %v518 = vunpack.c.h.b16 %v89
  %v519 = vunpack.c.l.b16 %v90
  %v520 = vunpack.c.h.b16 %v90
  %v521 = vunpack.c.l.b16 %v91
  %v522 = vunpack.c.h.b16 %v91
  %v523 = vunpack.c.l.b16 %v92
  %v524 = vunpack.c.h.b16 %v92
  %v525 = vunpack.c.l.b16 %v93
  %v526 = vunpack.c.h.b16 %v93
  %v527 = vunpack.c.l.b16 %v94
  %v528 = vunpack.c.h.b16 %v94
  %v529 = vunpack.c.l.b16 %v95
  %v530 = vunpack.c.h.b16 %v95
  %v531 = vunpack.c.l.b16 %v96
  %v532 = vunpack.c.h.b16 %v96
  %v533 = vunpack.c.l.b16 %v97
  %v534 = vunpack.c.h.b16 %v97
  %v535 = vunpack.c.l.b16 %v98
  %v536 = vunpack.c.h.b16 %v98
  %v537 = vunpack.c.l.b16 %v99
  %v538 = vunpack.c.h.b16 %v99
  %v539 = vunpack.c.l.b16 %v100
  %v540 = vunpack.c.h.b16 %v100
  %v541 = vunpack.c.l.b16 %v101
  %v542 = vunpack.c.h.b16 %v101
  %v543 = vunpack.c.l.b16 %v102
  %v544 = vunpack.c.h.b16 %v102
  %v545 = vunpack.c.l.b16 %v103
  %v546 = vunpack.c.h.b16 %v103
  %v547 = vunpack.c.l.b16 %v104
  %v548 = vunpack.c.h.b16 %v104
  %v549 = vunpack.c.l.b16 %v105
  %v550 = vunpack.c.h.b16 %v105
  %v551 = vunpack.c.l.b16 %v106
  %v552 = vunpack.c.h.b16 %v106
  %v553 = vunpack.c.l.b16 %v107
  %v554 = vunpack.c.h.b16 %v107
  %v555 = vunpack.c.l.b16 %v108
  %v556 = vunpack.c.h.b16 %v108
  %v557 = vunpack.c.l.b16 %v109
  %v558 = vunpack.c.h.b16 %v109
  %v559 = vunpack.c.l.b16 %v110
  %v560 = vunpack.c.h.b16 %v110
  %v561 = vunpack.c.l.b16 %v111
  %v562 = vunpack.c.h.b16 %v111
  %v563 = vunpack.c.l.b16 %v112
  %v564 = vunpack.c.h.b16 %v112
  %v565 = vunpack.c.l.b16 %v113
  %v566 = vunpack.c.h.b16 %v113
  %v567 = vunpack.c.l.b16 %v114
  %v568 = vunpack.c.h.b16 %v114
  %v569 = vunpack.c.l.b16 %v115
  %v570 = vunpack.c.h.b16 %v115
  %v571 = vunpack.c.l.b16 %v116
  %v572 = vunpack.c.h.b16 %v116
  %v573 = vunpack.c.l.b16 %v117
  %v574 = vunpack.c.h.b16 %v117
  %v575 = vunpack.c.l.b16 %v118
  %v576 = vunpack.c.h.b16 %v118
  %v577 = vunpack.c.l.b16 %v119
  %v578 = vunpack.c.h.b16 %v119
  %v579 = vunpack.c.l.b16 %v120
  %v580 = vunpack.c.h.b16 %v120
  %v581 = vunpack.c.l.b16 %v121
  %v582 = vunpack.c.h.b16 %v121
  %v583 = vunpack.c.l.b16 %v122
  %v584 = vunpack.c.h.b16 %v122
  %v585 = vunpack.c.l.b16 %v123
  %v586 = vunpack.c.h.b16 %v123
  %v587 = vunpack.c.l.b16 %v124
  %v588 = vunpack.c.h.b16 %v124
  %v589 = vunpack.c.l.b16 %v125
  %v590 = vunpack.c.h.b16 %v125
  %v591 = vunpack.c.l.b16 %v126
  %v592 = vunpack.c.h.b16 %v126
  %v593 = vunpack.c.l.b16 %v127
  %v594 = vunpack.c.h.b16 %v127
  %v595 = vunpack.c.l.b16 %v128
  %v596 = vunpack.c.h.b16 %v128
  %v597 = vunpack.c.l.b16 %v129
  %v598 = vunpack.c.h.b16 %v129
  %v599 = vunpack.c.l.b16 %v130
  %v600 = vunpack.c.h.b16 %v130
  %v601 = vunpack.c.l.b16 %v131
  %v602 = vunpack.c.h.b16 %v131
  %v603 = vunpack.c.l.b16 %v132
  %v604 = vunpack.c.h.b16 %v132
  %v605 = vunpack.c.l.b16 %v133
  %v606 = vunpack.c.h.b16 %v133
  %v607 = vunpack.c.l.b16 %v134
  %v608 = vunpack.c.h.b16 %v134
  %v609 = vunpack.c.l.b16 %v135
  %v610 = vunpack.c.h.b16 %v135
  %v611 = vunpack.c.l.b16 %v136
  %v612 = vunpack.c.h.b16 %v136
  %v613 = vunpack.c.l.b16 %v137
  %v614 = vunpack.c.h.b16 %v137
  %v615 = vunpack.c.l.b16 %v138
  %v616 = vunpack.c.h.b16 %v138
  %v617 = vunpack.c.l.b16 %v139
  %v618 = vunpack.c.h.b16 %v139
  %v619 = vunpack.c.l.b16 %v140
  %v620 = vunpack.c.h.b16 %v140
  %v621 = vunpack.c.l.b16 %v141
  %v622 = vunpack.c.h.b16 %v141
  %v623 = vunpack.c.l.b16 %v142
  %v624 = vunpack.c.h.b16 %v142
  %v625 = vunpack.c.l.b16 %v143
  %v626 = vunpack.c.h.b16 %v143
  %v627 = vunpack.c.l.b16 %v144
  %v628 = vunpack.c.h.b16 %v144
  %v629 = vunpack.c.l.b16 %v145
  %v630 = vunpack.c.h.b16 %v145
  %v631 = vunpack.c.l.b16 %v146
  %v632 = vunpack.c.h.b16 %v146
  %v633 = vunpack.c.l.b16 %v147
  %v634 = vunpack.c.h.b16 %v147
  %v635 = vunpack.c.l.b16 %v148
  %v636 = vunpack.c.h.b16 %v148
  %v637 = vunpack.c.l.b16 %v149
  %v638 = vunpack.c.h.b16 %v149
  %v639 = vunpack.c.l.b16 %v150
  %v640 = vunpack.c.h.b16 %v150
  %v641 = vunpack.c.l.b16 %v151
  %v642 = vunpack.c.h.b16 %v151
  %v643 = vunpack.c.l.b16 %v152
  %v644 = vunpack.c.h.b16 %v152
  %v645 = vunpack.c.l.b16 %v153
  %v646 = vunpack.c.h.b16 %v153
  %v647 = vunpack.c.l.b16 %v154
  %v648 = vunpack.c.h.b16 %v154
  %v649 = vunpack.c.l.b16 %v155
  %v650 = vunpack.c.h.b16 %v155
  %v651 = vunpack.c.l.b16 %v156
  %v652 = vunpack.c.h.b16 %v156
  %v653 = vunpack.c.l.b16 %v157
  %v654 = vunpack.c.h.b16 %v157
  %v655 = vunpack.c.l.b16 %v158
  %v656 = vunpack.c.h.b16 %v158
  %v657 = vunpack.c.l.b16 %v159
  %v658 = vunpack.c.h.b16 %v159
  %v659 = vunpack.c.l.b16 %v160
  %v660 = vunpack.c.h.b16 %v160
  %v661 = vunpack.c.l.b16 %v161
  %v662 = vunpack.c.h.b16 %v161
  %v663 = vunpack.c.l.b16 %v162
  %v664 = vunpack.c.h.b16 %v162
  %v665 = vunpack.c.l.b16 %v163
  %v666 = vunpack.c.h.b16 %v163
  %v667 = vunpack.c.l.b16 %v164
  %v668 = vunpack.c.h.b16 %v164
  %v669 = vpack.c.b16 %v415, %v413
  %v670 = vpack.c.b16 %v416, %v414
  %v671 = vpack.c.b16 %v419, %v417
  %v672 = vpack.c.b16 %v420, %v418
  %v673 = vpack.c.b16 %v423, %v421
  %v674 = vpack.c.b16 %v424, %v422
  %v675 = vpack.c.b16 %v427, %v425
  %v676 = vpack.c.b16 %v428, %v426
  %v677 = vpack.c.b16 %v431, %v429
  %v678 = vpack.c.b16 %v432, %v430
  %v679 = vpack.c.b16 %v435, %v433
  %v680 = vpack.c.b16 %v436, %v434
  %v681 = vpack.c.b16 %v439, %v437
  %v682 = vpack.c.b16 %v440, %v438
  %v683 = vpack.c.b16 %v443, %v441
  %v684 = vpack.c.b16 %v444, %v442
  %v685 = vpack.c.b16 %v447, %v445
  %v686 = vpack.c.b16 %v448, %v446
  %v687 = vpack.c.b16 %v451, %v449
  %v688 = vpack.c.b16 %v452, %v450
  %v689 = vpack.c.b16 %v455, %v453
  %v690 = vpack.c.b16 %v456, %v454
  %v691 = vpack.c.b16 %v459, %v457
  %v692 = vpack.c.b16 %v460, %v458
  %v693 = vpack.c.b16 %v463, %v461
  %v694 = vpack.c.b16 %v464, %v462
  %v695 = vpack.c.b16 %v467, %v465
  %v696 = vpack.c.b16 %v468, %v466
  %v697 = vpack.c.b16 %v471, %v469
  %v698 = vpack.c.b16 %v472, %v470
  %v699 = vpack.c.b16 %v475, %v473
  %v700 = vpack.c.b16 %v476, %v474
  %v701 = vpack.c.b16 %v479, %v477
  %v702 = vpack.c.b16 %v480, %v478
  %v703 = vpack.c.b16 %v483, %v481
  %v704 = vpack.c.b16 %v484, %v482
  %v705 = vpack.c.b16 %v487, %v485
  %v706 = vpack.c.b16 %v488, %v486
  %v707 = vpack.c.b16 %v491, %v489
  %v708 = vpack.c.b16 %v492, %v490
  %v709 = vpack.c.b16 %v495, %v493
  %v710 = vpack.c.b16 %v496, %v494
  %v711 = vpack.c.b16 %v499, %v497
  %v712 = vpack.c.b16 %v500, %v498
  %v713 = vpack.c.b16 %v503, %v501
  %v714 = vpack.c.b16 %v504, %v502
  %v715 = vpack.c.b16 %v507, %v505
  %v716 = vpack.c.b16 %v508, %v506
  %v717 = vpack.c.b16 %v511, %v509
  %v718 = vpack.c.b16 %v512, %v510
  %v719 = vpack.c.b16 %v515, %v513
  %v720 = vpack.c.b16 %v516, %v514
  %v721 = vpack.c.b16 %v519, %v517
  %v722 = vpack.c.b16 %v520, %v518
  %v723 = vpack.c.b16 %v523, %v521
  %v724 = vpack.c.b16 %v524, %v522
  %v725 = vpack.c.b16 %v527, %v525
  %v726 = vpack.c.b16 %v528, %v526
  %v727 = vpack.c.b16 %v531, %v529
  %v728 = vpack.c.b16 %v532, %v530
  %v729 = vpack.c.b16 %v535, %v533
  %v730 = vpack.c.b16 %v536, %v534
  %v731 = vpack.c.b16 %v539, %v537
  %v732 = vpack.c.b16 %v540, %v538
  %v733 = vpack.c.b16 %v543, %v541
  %v734 = vpack.c.b16 %v544, %v542
  %v735 = vpack.c.b16 %v547, %v545
  %v736 = vpack.c.b16 %v548, %v546
  %v737 = vpack.c.b16 %v551, %v549
  %v738 = vpack.c.b16 %v552, %v550
  %v739 = vpack.c.b16 %v555, %v553
  %v740 = vpack.c.b16 %v556, %v554
  %v741 = vpack.c.b16 %v559, %v557
  %v742 = vpack.c.b16 %v560, %v558
  %v743 = vpack.c.b16 %v563, %v561
  %v744 = vpack.c.b16 %v564, %v562
  %v745 = vpack.c.b16 %v567, %v565
  %v746 = vpack.c.b16 %v568, %v566
  %v747 = vpack.c.b16 %v571, %v569
  %v748 = vpack.c.b16 %v572, %v570
  %v749 = vpack.c.b16 %v575, %v573
  %v750 = vpack.c.b16 %v576, %v574
  %v751 = vpack.c.b16 %v579, %v577
  %v752 = vpack.c.b16 %v580, %v578
  %v753 = vpack.c.b16 %v583, %v581
  %v754 = vpack.c.b16 %v584, %v582
  %v755 = vpack.c.b16 %v587, %v585
  %v756 = vpack.c.b16 %v588, %v586
  %v757 = vpack.c.b16 %v591, %v589
  %v758 = vpack.c.b16 %v592, %v590
  %v759 = vpack.c.b16 %v595, %v593
  %v760 = vpack.c.b16 %v596, %v594
  %v761 = vpack.c.b16 %v599, %v597
  %v762 = vpack.c.b16 %v600, %v598
  %v763 = vpack.c.b16 %v603, %v601
  %v764 = vpack.c.b16 %v604, %v602
  %v765 = vpack.c.b16 %v607, %v605
  %v766 = vpack.c.b16 %v608, %v606
  %v767 = vpack.c.b16 %v611, %v609
  %v768 = vpack.c.b16 %v612, %v610
  %v769 = vpack.c.b16 %v615, %v613
  %v770 = vpack.c.b16 %v616, %v614
  %v771 = vpack.c.b16 %v619, %v617
  %v772 = vpack.c.b16 %v620, %v618
  %v773 = vpack.c.b16 %v623, %v621
  %v774 = vpack.c.b16 %v624, %v622
  %v775 = vpack.c.b16 %v627, %v625
  %v776 = vpack.c.b16 %v628, %v626
  %v777 = vpack.c.b16 %v631, %v629
  %v778 = vpack.c.b16 %v632, %v630
  %v779 = vpack.c.b16 %v635, %v633
  %v780 = vpack.c.b16 %v636, %v634
  %v781 = vpack.c.b16 %v639, %v637
  %v782 = vpack.c.b16 %v640, %v638
  %v783 = vpack.c.b16 %v643, %v641
  %v784 = vpack.c.b16 %v644, %v642
  %v785 = vpack.c.b16 %v647, %v645
  %v786 = vpack.c.b16 %v648, %v646
  %v787 = vpack.c.b16 %v651, %v649
  %v788 = vpack.c.b16 %v652, %v650
  %v789 = vpack.c.b16 %v655, %v653
  %v790 = vpack.c.b16 %v656, %v654
  %v791 = vpack.c.b16 %v659, %v657
  %v792 = vpack.c.b16 %v660, %v658
  %v793 = vpack.c.b16 %v663, %v661
  %v794 = vpack.c.b16 %v664, %v662
  %v795 = vpack.c.b16 %v667, %v665
  %v796 = vpack.c.b16 %v668, %v666
  %925 = vmatprep.subr.bf16.mxu0 %v670
  %926 = vmatpush1.bf16.msra.mxu0 %v669
  %927 = vmatprep.subr.bf16.mxu0 %v672
  %928 = vmatpush1.bf16.msra.mxu0 %v671
  %929 = vmatprep.subr.bf16.mxu0 %v674
  %930 = vmatpush1.bf16.msra.mxu0 %v673
  %931 = vmatprep.subr.bf16.mxu0 %v676
  %932 = vmatpush1.bf16.msra.mxu0 %v675
  %933 = vmatprep.subr.bf16.mxu0 %v678
  %934 = vmatpush1.bf16.msra.mxu0 %v677
  %935 = vmatprep.subr.bf16.mxu0 %v680
  %936 = vmatpush1.bf16.msra.mxu0 %v679
  %937 = vmatprep.subr.bf16.mxu0 %v682
  %938 = vmatpush1.bf16.msra.mxu0 %v681
  %939 = vmatprep.subr.bf16.mxu0 %v684
  %940 = vmatpush1.bf16.msra.mxu0 %v683
  %941 = vmatprep.subr.bf16.mxu0 %v686
  %942 = vmatpush1.bf16.msra.mxu0 %v685
  %943 = vmatprep.subr.bf16.mxu0 %v688
  %944 = vmatpush1.bf16.msra.mxu0 %v687
  %945 = vmatprep.subr.bf16.mxu0 %v690
  %946 = vmatpush1.bf16.msra.mxu0 %v689
  %947 = vmatprep.subr.bf16.mxu0 %v692
  %948 = vmatpush1.bf16.msra.mxu0 %v691
  %949 = vmatprep.subr.bf16.mxu0 %v694
  %950 = vmatpush1.bf16.msra.mxu0 %v693
  %951 = vmatprep.subr.bf16.mxu0 %v696
  %952 = vmatpush1.bf16.msra.mxu0 %v695
  %953 = vmatprep.subr.bf16.mxu0 %v698
  %954 = vmatpush1.bf16.msra.mxu0 %v697
  %955 = vmatprep.subr.bf16.mxu0 %v700
  %956 = vmatpush1.bf16.msra.mxu0 %v699
  %957 = vmatprep.mubr.bf16.mxu0 %v238
  %958 = vmatmul.mubr.bf16.gmra.mrb[0].mxu0 %v237
  %v959 = vpop.f32.mrb[0].mxu0
  %v960 = vadd.f32 %v170, %v959
  %v961 = vpop.f32.mrb[0].mxu0
  %v962 = vadd.f32 %v174, %v961
  %v963 = vpop.f32.mrb[0].mxu0
  %v964 = vadd.f32 %v170, %v963
  %v965 = vpop.f32.mrb[0].mxu0
  %v966 = vadd.f32 %v174, %v965
  %967 = vmatprep.mubr.bf16.mxu0 %v246
  %968 = vmatmul.mubr.bf16.gmra.mrb[0].mxu0 %v245
  %v969 = vpop.f32.mrb[0].mxu0
  %v970 = vadd.f32 %v170, %v969
  %v971 = vpop.f32.mrb[0].mxu0
  %v972 = vadd.f32 %v174, %v971
  %v973 = vpop.f32.mrb[0].mxu0
  %v974 = vadd.f32 %v170, %v973
  %v975 = vpop.f32.mrb[0].mxu0
  %v976 = vadd.f32 %v174, %v975
  %977 = vmatprep.mubr.bf16.mxu0 %v254
  %978 = vmatmul.mubr.bf16.gmra.mrb[0].mxu0 %v253
  %v979 = vpop.f32.mrb[0].mxu0
  %v980 = vadd.f32 %v170, %v979
  %v981 = vpop.f32.mrb[0].mxu0
  %v982 = vadd.f32 %v174, %v981
  %v983 = vpop.f32.mrb[0].mxu0
  %v984 = vpop.f32.mrb[0].mxu0
  %985 = vdwg.mxu0
  %986 = vmatprep.subr.bf16.mxu0 %v702
  %987 = vmatpush1.bf16.msra.mxu0 %v701
  %988 = vmatprep.subr.bf16.mxu0 %v704
  %989 = vmatpush1.bf16.msra.mxu0 %v703
  %990 = vmatprep.subr.bf16.mxu0 %v706
  %991 = vmatpush1.bf16.msra.mxu0 %v705
  %992 = vmatprep.subr.bf16.mxu0 %v708
  %993 = vmatpush1.bf16.msra.mxu0 %v707
  %994 = vmatprep.subr.bf16.mxu0 %v710
  %995 = vmatpush1.bf16.msra.mxu0 %v709
  %996 = vmatprep.subr.bf16.mxu0 %v712
  %997 = vmatpush1.bf16.msra.mxu0 %v711
  %998 = vmatprep.subr.bf16.mxu0 %v714
  %999 = vmatpush1.bf16.msra.mxu0 %v713
  %1000 = vmatprep.subr.bf16.mxu0 %v716
  %1001 = vmatpush1.bf16.msra.mxu0 %v715
  %1002 = vmatprep.subr.bf16.mxu0 %v718
  %1003 = vmatpush1.bf16.msra.mxu0 %v717
  %1004 = vmatprep.subr.bf16.mxu0 %v720
  %1005 = vmatpush1.bf16.msra.mxu0 %v719
  %1006 = vmatprep.subr.bf16.mxu0 %v722
  %1007 = vmatpush1.bf16.msra.mxu0 %v721
  %1008 = vmatprep.subr.bf16.mxu0 %v724
  %1009 = vmatpush1.bf16.msra.mxu0 %v723
  %1010 = vmatprep.subr.bf16.mxu0 %v726
  %1011 = vmatpush1.bf16.msra.mxu0 %v725
  %1012 = vmatprep.subr.bf16.mxu0 %v728
  %1013 = vmatpush1.bf16.msra.mxu0 %v727
  %1014 = vmatprep.subr.bf16.mxu0 %v730
  %1015 = vmatpush1.bf16.msra.mxu0 %v729
  %1016 = vmatprep.subr.bf16.mxu0 %v732
  %1017 = vmatpush1.bf16.msra.mxu0 %v731
  %1018 = vmatprep.mubr.bf16.mxu0 %v240
  %1019 = vmatmul.mubr.bf16.gmra.mrb[0].mxu0 %v239
  %v1020 = vpop.f32.mrb[0].mxu0
  %v1021 = vadd.f32 %v960, %v1020
  %v1022 = vpop.f32.mrb[0].mxu0
  %v1023 = vadd.f32 %v962, %v1022
  %v1024 = vpop.f32.mrb[0].mxu0
  %v1025 = vadd.f32 %v964, %v1024
  %v1026 = vpop.f32.mrb[0].mxu0
  %v1027 = vadd.f32 %v966, %v1026
  %1028 = vmatprep.mubr.bf16.mxu0 %v248
  %1029 = vmatmul.mubr.bf16.gmra.mrb[0].mxu0 %v247
  %v1030 = vpop.f32.mrb[0].mxu0
  %v1031 = vadd.f32 %v970, %v1030
  %v1032 = vpop.f32.mrb[0].mxu0
  %v1033 = vadd.f32 %v972, %v1032
  %v1034 = vpop.f32.mrb[0].mxu0
  %v1035 = vadd.f32 %v974, %v1034
  %v1036 = vpop.f32.mrb[0].mxu0
  %v1037 = vadd.f32 %v976, %v1036
  %1038 = vmatprep.mubr.bf16.mxu0 %v256
  %1039 = vmatmul.mubr.bf16.gmra.mrb[0].mxu0 %v255
  %v1040 = vpop.f32.mrb[0].mxu0
  %v1041 = vadd.f32 %v980, %v1040
  %v1042 = vpop.f32.mrb[0].mxu0
  %v1043 = vadd.f32 %v982, %v1042
  %v1044 = vpop.f32.mrb[0].mxu0
  %v1045 = vpop.f32.mrb[0].mxu0
  %1046 = vdwg.mxu0
  %1047 = vmatprep.subr.bf16.mxu0 %v734
  %1048 = vmatpush1.bf16.msra.mxu0 %v733
  %1049 = vmatprep.subr.bf16.mxu0 %v736
  %1050 = vmatpush1.bf16.msra.mxu0 %v735
  %1051 = vmatprep.subr.bf16.mxu0 %v738
  %1052 = vmatpush1.bf16.msra.mxu0 %v737
  %1053 = vmatprep.subr.bf16.mxu0 %v740
  %1054 = vmatpush1.bf16.msra.mxu0 %v739
  %1055 = vmatprep.subr.bf16.mxu0 %v742
  %1056 = vmatpush1.bf16.msra.mxu0 %v741
  %1057 = vmatprep.subr.bf16.mxu0 %v744
  %1058 = vmatpush1.bf16.msra.mxu0 %v743
  %1059 = vmatprep.subr.bf16.mxu0 %v746
  %1060 = vmatpush1.bf16.msra.mxu0 %v745
  %1061 = vmatprep.subr.bf16.mxu0 %v748
  %1062 = vmatpush1.bf16.msra.mxu0 %v747
  %1063 = vmatprep.subr.bf16.mxu0 %v750
  %1064 = vmatpush1.bf16.msra.mxu0 %v749
  %1065 = vmatprep.subr.bf16.mxu0 %v752
  %1066 = vmatpush1.bf16.msra.mxu0 %v751
  %1067 = vmatprep.subr.bf16.mxu0 %v754
  %1068 = vmatpush1.bf16.msra.mxu0 %v753
  %1069 = vmatprep.subr.bf16.mxu0 %v756
  %1070 = vmatpush1.bf16.msra.mxu0 %v755
  %1071 = vmatprep.subr.bf16.mxu0 %v758
  %1072 = vmatpush1.bf16.msra.mxu0 %v757
  %1073 = vmatprep.subr.bf16.mxu0 %v760
  %1074 = vmatpush1.bf16.msra.mxu0 %v759
  %1075 = vmatprep.subr.bf16.mxu0 %v762
  %1076 = vmatpush1.bf16.msra.mxu0 %v761
  %1077 = vmatprep.subr.bf16.mxu0 %v764
  %1078 = vmatpush1.bf16.msra.mxu0 %v763
  %1079 = vmatprep.mubr.bf16.mxu0 %v242
  %1080 = vmatmul.mubr.bf16.gmra.mrb[0].mxu0 %v241
  %v1081 = vpop.f32.mrb[0].mxu0
  %v1082 = vadd.f32 %v1021, %v1081
  %v1083 = vpop.f32.mrb[0].mxu0
  %v1084 = vadd.f32 %v1023, %v1083
  %v1085 = vpop.f32.mrb[0].mxu0
  %v1086 = vadd.f32 %v1025, %v1085
  %v1087 = vpop.f32.mrb[0].mxu0
  %v1088 = vadd.f32 %v1027, %v1087
  %1089 = vmatprep.mubr.bf16.mxu0 %v250
  %1090 = vmatmul.mubr.bf16.gmra.mrb[0].mxu0 %v249
  %v1091 = vpop.f32.mrb[0].mxu0
  %v1092 = vadd.f32 %v1031, %v1091
  %v1093 = vpop.f32.mrb[0].mxu0
  %v1094 = vadd.f32 %v1033, %v1093
  %v1095 = vpop.f32.mrb[0].mxu0
  %v1096 = vadd.f32 %v1035, %v1095
  %v1097 = vpop.f32.mrb[0].mxu0
  %v1098 = vadd.f32 %v1037, %v1097
  %1099 = vmatprep.mubr.bf16.mxu0 %v258
  %1100 = vmatmul.mubr.bf16.gmra.mrb[0].mxu0 %v257
  %v1101 = vpop.f32.mrb[0].mxu0
  %v1102 = vadd.f32 %v1041, %v1101
  %v1103 = vpop.f32.mrb[0].mxu0
  %v1104 = vadd.f32 %v1043, %v1103
  %v1105 = vpop.f32.mrb[0].mxu0
  %v1106 = vpop.f32.mrb[0].mxu0
  %1107 = vdwg.mxu0
  %1108 = vmatprep.subr.bf16.mxu0 %v766
  %1109 = vmatpush1.bf16.msra.mxu0 %v765
  %1110 = vmatprep.subr.bf16.mxu0 %v768
  %1111 = vmatpush1.bf16.msra.mxu0 %v767
  %1112 = vmatprep.subr.bf16.mxu0 %v770
  %1113 = vmatpush1.bf16.msra.mxu0 %v769
  %1114 = vmatprep.subr.bf16.mxu0 %v772
  %1115 = vmatpush1.bf16.msra.mxu0 %v771
  %1116 = vmatprep.subr.bf16.mxu0 %v774
  %1117 = vmatpush1.bf16.msra.mxu0 %v773
  %1118 = vmatprep.subr.bf16.mxu0 %v776
  %1119 = vmatpush1.bf16.msra.mxu0 %v775
  %1120 = vmatprep.subr.bf16.mxu0 %v778
  %1121 = vmatpush1.bf16.msra.mxu0 %v777
  %1122 = vmatprep.subr.bf16.mxu0 %v780
  %1123 = vmatpush1.bf16.msra.mxu0 %v779
  %1124 = vmatprep.subr.bf16.mxu0 %v782
  %1125 = vmatpush1.bf16.msra.mxu0 %v781
  %1126 = vmatprep.subr.bf16.mxu0 %v784
  %1127 = vmatpush1.bf16.msra.mxu0 %v783
  %1128 = vmatprep.subr.bf16.mxu0 %v786
  %1129 = vmatpush1.bf16.msra.mxu0 %v785
  %1130 = vmatprep.subr.bf16.mxu0 %v788
  %1131 = vmatpush1.bf16.msra.mxu0 %v787
  %1132 = vmatprep.subr.bf16.mxu0 %v790
  %1133 = vmatpush1.bf16.msra.mxu0 %v789
  %1134 = vmatprep.subr.bf16.mxu0 %v792
  %1135 = vmatpush1.bf16.msra.mxu0 %v791
  %1136 = vmatprep.subr.bf16.mxu0 %v794
  %1137 = vmatpush1.bf16.msra.mxu0 %v793
  %1138 = vmatprep.subr.bf16.mxu0 %v796
  %1139 = vmatpush1.bf16.msra.mxu0 %v795
  %1140 = vmatprep.mubr.bf16.mxu0 %v244
  %1141 = vmatmul.mubr.bf16.gmra.mrb[0].mxu0 %v243
  %v1142 = vpop.f32.mrb[0].mxu0
  %v1143 = vadd.f32 %v1082, %v1142
  %v1144 = vpop.f32.mrb[0].mxu0
  %v1145 = vadd.f32 %v1084, %v1144
  %v1146 = vpop.f32.mrb[0].mxu0
  %v1147 = vadd.f32 %v1086, %v1146
  %v1148 = vpop.f32.mrb[0].mxu0
  %v1149 = vadd.f32 %v1088, %v1148
  %1150 = vmatprep.mubr.bf16.mxu0 %v252
  %1151 = vmatmul.mubr.bf16.gmra.mrb[0].mxu0 %v251
  %v1152 = vpop.f32.mrb[0].mxu0
  %v1153 = vadd.f32 %v1092, %v1152
  %v1154 = vpop.f32.mrb[0].mxu0
  %v1155 = vadd.f32 %v1094, %v1154
  %v1156 = vpop.f32.mrb[0].mxu0
  %v1157 = vadd.f32 %v1096, %v1156
  %v1158 = vpop.f32.mrb[0].mxu0
  %v1159 = vadd.f32 %v1098, %v1158
  %1160 = vmatprep.mubr.bf16.mxu0 %v260
  %1161 = vmatmul.mubr.bf16.gmra.mrb[0].mxu0 %v259
  %v1162 = vpop.f32.mrb[0].mxu0
  %v1163 = vadd.f32 %v1102, %v1162
  %v1164 = vpop.f32.mrb[0].mxu0
  %v1165 = vadd.f32 %v1104, %v1164
  %v1166 = vpop.f32.mrb[0].mxu0
  %v1167 = vpop.f32.mrb[0].mxu0
  %1168 = vdwg.mxu0
  %v1169 = vld [vmem:[%s3] sm:$0xff]
  %v1170 = vld [vmem:[%s3 + $0x8] sm:$0xff]
  %v1171 = vld [vmem:[%s3 + $0x10] sm:$0xff]
  %v1172 = vld [vmem:[%s3 + $0x18] sm:$0xff]
  %v1173 = vld [vmem:[%s3 + $0x20] sm:$0xff]
  %v1174 = vld [vmem:[%s3 + $0x28] sm:$0xff]
  %v1175 = vld [vmem:[%s3 + $0x30] sm:$0xff]
  %v1176 = vld [vmem:[%s3 + $0x38] sm:$0xff]
  %v1177 = vld [vmem:[%s3 + $0x40] sm:$0x3]
  %v1178 = vld [vmem:[%s3 + $0x48] sm:$0x3]
  %v1179 = vadd.f32 %v1143, %v1169
  %v1180 = vadd.f32 %v1145, %v1170
  %v1181 = vadd.f32 %v1147, %v1171
  %v1182 = vadd.f32 %v1149, %v1172
  %v1183 = vadd.f32 %v1153, %v1173
  %v1184 = vadd.f32 %v1155, %v1174
  %v1185 = vadd.f32 %v1157, %v1175
  %v1186 = vadd.f32 %v1159, %v1176
  %v1187 = vadd.f32 %v1163, %v1177
  %v1188 = vadd.f32 %v1165, %v1178
  %1189 = vst [vmem:[%s4] sm:$0xff] %v1179
  %1190 = vst [vmem:[%s4 + $0x8] sm:$0xff] %v1180
  %1191 = vst [vmem:[%s4 + $0x10] sm:$0xff] %v1181
  %1192 = vst [vmem:[%s4 + $0x18] sm:$0xff] %v1182
  %1193 = vst [vmem:[%s4 + $0x20] sm:$0xff] %v1183
  %1194 = vst [vmem:[%s4 + $0x28] sm:$0xff] %v1184
  %1195 = vst [vmem:[%s4 + $0x30] sm:$0xff] %v1185
  %1196 = vst [vmem:[%s4 + $0x38] sm:$0xff] %v1186
  %1197 = vst [vmem:[%s4 + $0x40] sm:$0x3] %v1187
  %1198 = vst [vmem:[%s4 + $0x48] sm:$0x3] %v1188
  // Predicated region
  $region18: #{clip_visual_forward.19} parent=0 // pred_check
    _
  $region19: #{clip_visual_forward.19} parent=0 // pred_check_branch
    %1200 = sbr.rel (0) target = $region21
  $region20: #{clip_visual_forward.19} parent=0 // pred_region
    _
  $region21: #{clip_visual_forward.19} parent=0 // pred_fallthru
    _
  // Predicated region
  $region22: #{clip_visual_forward.19} parent=0 // pred_check
    _
  $region23: #{clip_visual_forward.19} parent=0 // pred_check_branch
    %1202 = sbr.rel (0) target = $region25
  $region24: #{clip_visual_forward.19} parent=0 // pred_region
    _
  $region25: #{clip_visual_forward.19} parent=0 // pred_fallthru
    _

</llo_original>
